<compile_context>
chip_gen: v6e
topology: v6e:2x2x1
jax: 0.10.0
libtpu: 0.0.40
codegen_flags: <defaults>
</compile_context>

<pallas_src>
import functools
import numpy as np
import jax
import jax.numpy as jnp
from jax.experimental import pallas as pl
from jax.experimental.pallas import tpu as pltpu

F32 = jnp.float32
BF16 = jnp.bfloat16
LN_EPS = 1e-5
VMEM_LIMIT = 32 * 1024 * 1024


def _round_up(x, m):
    return (x + m - 1) // m * m


def _pick_row_tile(M, max_tile, step=16):
    """Row tile <= max_tile, multiple of `step`, preferring a divisor of M (no padding)."""
    cap = max(step, min(max_tile, _round_up(M, step)))
    cap -= cap % step
    for cand in range(cap, step - 1, -step):
        if M % cand == 0:
            return cand, M
    tm = min(cap, _round_up(M, step))
    return tm, _round_up(M, tm)


def _largest_divisor_leq(n, cap):
    cap = max(1, min(cap, n))
    for d in range(cap, 0, -1):
        if n % d == 0:
            return d
    return 1


# --------------------------------------------------------------------------
# Pallas kernel 1: tiled matmul (bf16 operands, f32 accum) + fused bias/activation
#   - nk == 1 path: no accumulator scratch, direct epilogue store
# --------------------------------------------------------------------------
def _matmul_kernel_single(a_ref, b_ref, bias_ref, o_ref, *, activation):
    out = jnp.dot(a_ref[...], b_ref[...], preferred_element_type=jnp.float32) + bias_ref[...]
    if activation == "relu":
        out = jnp.maximum(out, 0.0)
    elif activation == "gelu":
        out = jax.nn.gelu(out, approximate=False)      # exact (erf) GELU == nn.GELU
    o_ref[...] = out.astype(o_ref.dtype)


def _matmul_kernel_acc(a_ref, b_ref, bias_ref, o_ref, acc_ref, *, activation, nk):
    k = pl.program_id(2)

    @pl.when(k == 0)
    def _():
        acc_ref[...] = jnp.zeros_like(acc_ref)

    acc_ref[...] += jnp.dot(a_ref[...], b_ref[...], preferred_element_type=jnp.float32)

    @pl.when(k == nk - 1)
    def _():
        out = acc_ref[...] + bias_ref[...]
        if activation == "relu":
            out = jnp.maximum(out, 0.0)
        elif activation == "gelu":
            out = jax.nn.gelu(out, approximate=False)
        o_ref[...] = out.astype(o_ref.dtype)


@functools.partial(jax.jit, static_argnames=("activation", "out_dtype"))
def pallas_matmul(a, b, bias, activation=None, out_dtype=F32):
    """out = act(a @ b + bias);  a: (M,K)  b: (K,N)  bias: (N,)."""
    M, K = a.shape
    _, N = b.shape
    out_bytes = jnp.dtype(out_dtype).itemsize

    # K tiling: single full-K pass for moderate K, else 512/256-wide K loop.
    if K <= 2048:
        Kp = _round_up(K, 128) if K >= 128 else _round_up(K, 8)
        tk = Kp
    elif K % 512 == 0:
        Kp, tk = K, 512
    elif K % 256 == 0:
        Kp, tk = K, 256
    else:
        Kp, tk = _round_up(K, 128), 128
    nk = Kp // tk

    if N >= 256 and N % 256 == 0:
        tn, Np = 256, N
    elif N >= 128 and N % 128 == 0:
        tn, Np = 128, N
    else:
        tn, Np = 128, _round_up(N, 128)

    # Row-tile cap from an explicit per-kernel VMEM budget (double-buffered tiles).
    budget = 12 * 1024 * 1024
    fixed = 2 * tk * tn * 2                                     # B tile, bf16, 2 buffers
    per_row = 2 * tk * 2 + 2 * tn * out_bytes + (tn * 4 if nk > 1 else 0)
    cap = max(64, min(2048, (budget - fixed) // per_row))
    tm, Mp = _pick_row_tile(M, cap)

    a_bf = a.astype(BF16)
    b_bf = b.astype(BF16)
    if (Mp, Kp) != (M, K):
        a_bf = jnp.pad(a_bf, ((0, Mp - M), (0, Kp - K)))
    if (Kp, Np) != (K, N):
        b_bf = jnp.pad(b_bf, ((0, Kp - K), (0, Np - N)))
    bias_p = bias.astype(F32).reshape(1, N)
    if Np != N:
        bias_p = jnp.pad(bias_p, ((0, 0), (0, Np - N)))

    if nk == 1:
        out = pl.pallas_call(
            functools.partial(_matmul_kernel_single, activation=activation),
            out_shape=jax.ShapeDtypeStruct((Mp, Np), out_dtype),
            grid_spec=pltpu.PrefetchScalarGridSpec(
                num_scalar_prefetch=0,
                grid=(Mp // tm, Np // tn),
                in_specs=[
                    pl.BlockSpec((tm, Kp), lambda i, j: (i, 0)),
                    pl.BlockSpec((Kp, tn), lambda i, j: (0, j)),
                    pl.BlockSpec((1, tn), lambda i, j: (0, j)),
                ],
                out_specs=pl.BlockSpec((tm, tn), lambda i, j: (i, j)),
            ),
            compiler_params=pltpu.CompilerParams(
                dimension_semantics=("parallel", "parallel"),
                vmem_limit_bytes=VMEM_LIMIT),
        )(a_bf, b_bf, bias_p)
    else:
        out = pl.pallas_call(
            functools.partial(_matmul_kernel_acc, activation=activation, nk=nk),
            out_shape=jax.ShapeDtypeStruct((Mp, Np), out_dtype),
            grid_spec=pltpu.PrefetchScalarGridSpec(
                num_scalar_prefetch=0,
                grid=(Mp // tm, Np // tn, nk),
                in_specs=[
                    pl.BlockSpec((tm, tk), lambda i, j, k: (i, k)),
                    pl.BlockSpec((tk, tn), lambda i, j, k: (k, j)),
                    pl.BlockSpec((1, tn), lambda i, j, k: (0, j)),
                ],
                out_specs=pl.BlockSpec((tm, tn), lambda i, j, k: (i, j)),
                scratch_shapes=[pltpu.VMEM((tm, tn), jnp.float32)],
            ),
            compiler_params=pltpu.CompilerParams(
                dimension_semantics=("parallel", "parallel", "arbitrary"),
                vmem_limit_bytes=VMEM_LIMIT),
        )(a_bf, b_bf, bias_p)

    if (Mp, Np) != (M, N):
        out = out[:M, :N]
    return out


# --------------------------------------------------------------------------
# Pallas kernel 2: fused stride-1 conv (manual-DMA haloed row tiles, in-VMEM im2col)
# --------------------------------------------------------------------------
def _conv_fused_kernel(xp_ref, w_ref, b_ref, o_ref, xbuf, sem, *,
                       kh, kw, tr, Hp, Wo, Cin, Cout, activation):
    b = pl.program_id(0)
    i = pl.program_id(1)
    rows_in = tr + kh - 1
    row0 = b * Hp + i * tr
    cp = pltpu.make_async_copy(xp_ref.at[pl.ds(row0, rows_in)], xbuf, sem)
    cp.start()
    cp.wait()
    taps = []
    for di in range(kh):
        for dj in range(kw):
            taps.append(xbuf[di:di + tr, dj:dj + Wo, :])
    patches = taps[0] if len(taps) == 1 else jnp.concatenate(taps, axis=-1)
    a = patches.reshape(tr * Wo, kh * kw * Cin)
    out = jnp.dot(a, w_ref[...], preferred_element_type=jnp.float32) + b_ref[...]
    if activation == "relu":
        out = jnp.maximum(out, 0.0)
    o_ref[...] = out.reshape(1, tr, Wo, Cout).astype(o_ref.dtype)


def _pick_conv_tr(Ho, Wo, K):
    budget = 4 * 1024 * 1024                       # in-VMEM patch matrix budget (bf16)
    cap = max(1, budget // (Wo * K * 2))
    cap = min(cap, max(1, Ho // 2))                # keep >= 2 row tiles (v7x megacore)
    return _largest_divisor_leq(Ho, cap)


def conv2d_fused(x, w, b, *, padding, activation=None, out_dtype=BF16):
    """stride-1 conv, x NHWC, w (kh,kw,Cin,Cout); patches built in VMEM, not HBM."""
    B, H, W, Cin = x.shape
    kh, kw, _, Cout = w.shape
    ph, pw = padding
    Ho = H + 2 * ph - kh + 1
    Wo = W + 2 * pw - kw + 1
    Hp = H + 2 * ph
    Wp = W + 2 * pw
    xp = x.astype(BF16)
    if ph or pw:
        xp = jnp.pad(xp, ((0, 0), (ph, ph), (pw, pw), (0, 0)))
    xp = xp.reshape(B * Hp, Wp, Cin)               # free; row0 = b*Hp + i*tr never crosses b
    K = kh * kw * Cin
    tr = _pick_conv_tr(Ho, Wo, K)
    wm = w.reshape(K, Cout).astype(BF16)
    bias = b.astype(F32).reshape(1, Cout)

    kernel = functools.partial(
        _conv_fused_kernel, kh=kh, kw=kw, tr=tr, Hp=Hp, Wo=Wo,
        Cin=Cin, Cout=Cout, activation=activation)
    return pl.pallas_call(
        kernel,
        out_shape=jax.ShapeDtypeStruct((B, Ho, Wo, Cout), out_dtype),
        grid_spec=pltpu.PrefetchScalarGridSpec(
            num_scalar_prefetch=0,
            grid=(B, Ho // tr),
            in_specs=[
                pl.BlockSpec(memory_space=pl.ANY),                 # raw HBM, manual DMA
                pl.BlockSpec((K, Cout), lambda b_, i_: (0, 0)),
                pl.BlockSpec((1, Cout), lambda b_, i_: (0, 0)),
            ],
            out_specs=pl.BlockSpec((1, tr, Wo, Cout), lambda b_, i_: (b_, i_, 0, 0)),
            scratch_shapes=[
                pltpu.VMEM((tr + kh - 1, Wp, Cin), BF16),
                pltpu.SemaphoreType.DMA(()),
            ],
        ),
        compiler_params=pltpu.CompilerParams(
            dimension_semantics=("parallel", "parallel"),
            vmem_limit_bytes=VMEM_LIMIT),
    )(xp, wm, bias)


def conv2d_im2col(x, w, b, *, stride=1, padding=(0, 0), activation=None, out_dtype=BF16):
    """Fallback (conv1 with Cin=3): small XLA im2col + Pallas matmul."""
    B, H, W, Cin = x.shape
    kh, kw, _, Cout = w.shape
    ph, pw = padding
    xb = x.astype(BF16)
    if ph or pw:
        xb = jnp.pad(xb, ((0, 0), (ph, ph), (pw, pw), (0, 0)))
    Ho = (H + 2 * ph - kh) // stride + 1
    Wo = (W + 2 * pw - kw) // stride + 1
    patches = []
    for i in range(kh):
        for j in range(kw):
            patches.append(jax.lax.slice(
                xb, (0, i, j, 0),
                (B, i + (Ho - 1) * stride + 1, j + (Wo - 1) * stride + 1, Cin),
                (1, stride, stride, 1)))
    if len(patches) == 1:
        a = patches[0].reshape(B * Ho * Wo, Cin)
    else:
        a = jnp.concatenate(patches, axis=-1).reshape(B * Ho * Wo, kh * kw * Cin)
    y = pallas_matmul(a, w.reshape(kh * kw * Cin, Cout), b,
                      activation=activation, out_dtype=out_dtype)
    return y.reshape(B, Ho, Wo, Cout)


def conv2d(x, w, b, *, stride=1, padding=(0, 0), activation=None, out_dtype=BF16):
    Cin = x.shape[-1]
    kh, kw = w.shape[0], w.shape[1]
    if stride == 1 and Cin % 8 == 0 and (kh > 1 or kw > 1):
        return conv2d_fused(x, w, b, padding=padding, activation=activation,
                            out_dtype=out_dtype)
    return conv2d_im2col(x, w, b, stride=stride, padding=padding,
                         activation=activation, out_dtype=out_dtype)


# --------------------------------------------------------------------------
# Pallas kernel 3: LayerNorm over the last dim
# --------------------------------------------------------------------------
def _layernorm_kernel(x_ref, g_ref, b_ref, o_ref, *, eps):
    x = x_ref[...].astype(jnp.float32)
    mean = jnp.mean(x, axis=-1, keepdims=True)
    var = jnp.mean(jnp.square(x - mean), axis=-1, keepdims=True)
    y = (x - mean) * jax.lax.rsqrt(var + eps)
    o_ref[...] = (y * g_ref[...] + b_ref[...]).astype(o_ref.dtype)


@functools.partial(jax.jit, static_argnames=("out_dtype",))
def pallas_layernorm(x, gamma, beta, out_dtype=F32):
    M, C = x.shape
    cap = max(16, min(1024, (2 * 1024 * 1024) // (4 * C)))
    tm, Mp = _pick_row_tile(M, cap)
    x_p = x if Mp == M else jnp.pad(x, ((0, Mp - M), (0, 0)))
    out = pl.pallas_call(
        functools.partial(_layernorm_kernel, eps=LN_EPS),
        out_shape=jax.ShapeDtypeStruct((Mp, C), out_dtype),
        grid_spec=pltpu.PrefetchScalarGridSpec(
            num_scalar_prefetch=0,
            grid=(Mp // tm,),
            in_specs=[
                pl.BlockSpec((tm, C), lambda i: (i, 0)),
                pl.BlockSpec((1, C), lambda i: (0, 0)),
                pl.BlockSpec((1, C), lambda i: (0, 0)),
            ],
            out_specs=pl.BlockSpec((tm, C), lambda i: (i, 0)),
        ),
        compiler_params=pltpu.CompilerParams(dimension_semantics=("parallel",)),
    )(x_p, gamma.astype(F32).reshape(1, C), beta.astype(F32).reshape(1, C))
    return out if Mp == M else out[:M]


# --------------------------------------------------------------------------
# Pallas kernel 4: window multi-head attention (fused qkv, lane-dense store)
# --------------------------------------------------------------------------
def _window_attn_kernel(qkv_ref, bias_ref, o_ref, *, num_heads, dim, head_dim, scale):
    outs = []
    for h in range(num_heads):
        lo = h * head_dim
        q = qkv_ref[:, :, lo:lo + head_dim]                      # (WG, N, hd) bf16
        k = qkv_ref[:, :, dim + lo:dim + lo + head_dim]
        v = qkv_ref[:, :, 2 * dim + lo:2 * dim + lo + head_dim]
        s = jnp.einsum("wnd,wmd->wnm", q, k, preferred_element_type=jnp.float32)
        s = s * scale + bias_ref[h][None, :, :]
        s = s - jnp.max(s, axis=-1, keepdims=True)
        p = jnp.exp(s)
        p = p / jnp.sum(p, axis=-1, keepdims=True)               # exact divide
        o = jnp.einsum("wnm,wmd->wnd", p.astype(q.dtype), v,
                       preferred_element_type=jnp.float32)
        outs.append(o.astype(o_ref.dtype))
    o_ref[...] = jnp.concatenate(outs, axis=-1)                  # one full-width store


@functools.partial(jax.jit, static_argnames=("num_heads",))
def pallas_window_attention(qkv, rel_bias, *, num_heads):
    """qkv: (nW, N, 3C) -> (nW, N, C)."""
    nW, N, C3 = qkv.shape
    dim = C3 // 3
    head_dim = dim // num_heads
    scale = head_dim ** -0.5
    WG = 8 if nW % 8 == 0 else 1
    return pl.pallas_call(
        functools.partial(_window_attn_kernel, num_heads=num_heads, dim=dim,
                          head_dim=head_dim, scale=scale),
        out_shape=jax.ShapeDtypeStruct((nW, N, dim), qkv.dtype),
        grid_spec=pltpu.PrefetchScalarGridSpec(
            num_scalar_prefetch=0,
            grid=(nW // WG,),
            in_specs=[pl.BlockSpec((WG, N, C3), lambda w: (w, 0, 0)),
                      pl.BlockSpec((num_heads, N, N), lambda w: (0, 0, 0))],
            out_specs=pl.BlockSpec((WG, N, dim), lambda w: (w, 0, 0)),
        ),
        compiler_params=pltpu.CompilerParams(dimension_semantics=("parallel",)),
    )(qkv, rel_bias.astype(F32))


# --------------------------------------------------------------------------
# Pallas kernel 5: max-pool 2x2 stride 2 (single kernel over a free reshape view)
# --------------------------------------------------------------------------
def _maxpool2x2_kernel(x_ref, o_ref, *, C):
    a = jnp.maximum(x_ref[:, 0, :, :], x_ref[:, 1, :, :])        # max over the h-pair
    o_ref[...] = jnp.maximum(a[:, :, :C], a[:, :, C:])           # max over the w-pair


@jax.jit
def maxpool_2x2(x):
    B, H, W, C = x.shape
    Ho, Wo = H // 2, W // 2
    R = B * Ho
    xr = x.reshape(R, 2, Wo, 2 * C)                              # free, row-major compatible
    tr = _largest_divisor_leq(R, max(8, R // 2))
    out = pl.pallas_call(
        functools.partial(_maxpool2x2_kernel, C=C),
        out_shape=jax.ShapeDtypeStruct((R, Wo, C), x.dtype),
        grid_spec=pltpu.PrefetchScalarGridSpec(
            num_scalar_prefetch=0,
            grid=(R // tr,),
            in_specs=[pl.BlockSpec((tr, 2, Wo, 2 * C), lambda i: (i, 0, 0, 0))],
            out_specs=pl.BlockSpec((tr, Wo, C), lambda i: (i, 0, 0)),
        ),
        compiler_params=pltpu.CompilerParams(dimension_semantics=("parallel",)),
    )(xr)
    return out.reshape(B, Ho, Wo, C)


# --------------------------------------------------------------------------
# Pallas kernel 6: max-pool 3x3 stride 1 pad 1 (inception branch1)
# --------------------------------------------------------------------------
def _maxpool3x3_kernel(x_ref, o_ref, *, H, W):
    x = x_ref[0]                                                  # (H+2, W+2, C)
    xw = jnp.maximum(jnp.maximum(x[:, 0:W, :], x[:, 1:W + 1, :]), x[:, 2:W + 2, :])
    o_ref[0] = jnp.maximum(jnp.maximum(xw[0:H, :, :], xw[1:H + 1, :, :]),
                           xw[2:H + 2, :, :])


@jax.jit
def maxpool_3x3_s1_p1(x):
    B, H, W, C = x.shape
    neg = float(jnp.finfo(x.dtype).min)
    xp = jnp.pad(x, ((0, 0), (1, 1), (1, 1), (0, 0)), constant_values=neg)
    return pl.pallas_call(
        functools.partial(_maxpool3x3_kernel, H=H, W=W),
        out_shape=jax.ShapeDtypeStruct((B, H, W, C), x.dtype),
        grid_spec=pltpu.PrefetchScalarGridSpec(
            num_scalar_prefetch=0,
            grid=(B,),
            in_specs=[pl.BlockSpec((1, H + 2, W + 2, C), lambda b: (b, 0, 0, 0))],
            out_specs=pl.BlockSpec((1, H, W, C), lambda b: (b, 0, 0, 0)),
        ),
        compiler_params=pltpu.CompilerParams(dimension_semantics=("parallel",)),
    )(xp)


# --------------------------------------------------------------------------
# Pallas kernel 7: classifier head (global avg pool + LayerNorm + FC + softmax)
# --------------------------------------------------------------------------
def _classifier_kernel(x_ref, g_ref, b_ref, w_ref, fb_ref, o_ref, *, eps):
    x = x_ref[...].astype(jnp.float32)                 # (B, L, C) tokens
    pooled = jnp.mean(x, axis=1)                       # AdaptiveAvgPool1d(1) over L
    mean = jnp.mean(pooled, axis=-1, keepdims=True)
    var = jnp.mean(jnp.square(pooled - mean), axis=-1, keepdims=True)
    y = (pooled - mean) * jax.lax.rsqrt(var + eps)
    y = y * g_ref[...] + b_ref[...]
    logits = jnp.dot(y, w_ref[...], preferred_element_type=jnp.float32) + fb_ref[...]
    logits = logits - jnp.max(logits, axis=-1, keepdims=True)
    e = jnp.exp(logits)
    o_ref[...] = (e / jnp.sum(e, axis=-1, keepdims=True)).astype(o_ref.dtype)


@jax.jit
def pallas_classifier(tokens, gamma, beta, fc_w, fc_b):
    B, L, C = tokens.shape
    nc = fc_w.shape[1]
    return pl.pallas_call(
        functools.partial(_classifier_kernel, eps=LN_EPS),
        out_shape=jax.ShapeDtypeStruct((B, nc), F32),
        grid_spec=pltpu.PrefetchScalarGridSpec(
            num_scalar_prefetch=0,
            grid=(1,),
            in_specs=[
                pl.BlockSpec((B, L, C), lambda i: (0, 0, 0)),
                pl.BlockSpec((1, C), lambda i: (0, 0)),
                pl.BlockSpec((1, C), lambda i: (0, 0)),
                pl.BlockSpec((C, nc), lambda i: (0, 0)),
                pl.BlockSpec((1, nc), lambda i: (0, 0)),
            ],
            out_specs=pl.BlockSpec((B, nc), lambda i: (0, 0)),
        ),
    )(tokens.astype(F32), gamma.astype(F32).reshape(1, C),
      beta.astype(F32).reshape(1, C), fc_w.astype(F32),
      fc_b.astype(F32).reshape(1, nc))


# --------------------------------------------------------------------------
# Model pieces
# --------------------------------------------------------------------------
def vgg_forward(x, p):
    x = conv2d(x, p["c1_w"], p["c1_b"], padding=(1, 1), activation="relu")   # im2col (Cin=3)
    x = conv2d(x, p["c2_w"], p["c2_b"], padding=(1, 1), activation="relu")   # fused
    x = maxpool_2x2(x)
    x = conv2d(x, p["c3_w"], p["c3_b"], padding=(1, 1), activation="relu")   # fused
    x = conv2d(x, p["c4_w"], p["c4_b"], padding=(1, 1), activation="relu")   # fused
    x = maxpool_2x2(x)
    return x                                          # (B, H/4, W/4, 128) bf16


def inception_forward(x, p):
    B, H, W, Cin = x.shape
    b1 = maxpool_3x3_s1_p1(x)
    # Fused branch-entry 1x1 convs (64 + 64 + 128 = 256 output channels, lane dense).
    w1 = jnp.concatenate([p["b2_0_w"].reshape(Cin, 64),
                          p["b3_0_w"].reshape(Cin, 64),
                          p["b4_0_w"].reshape(Cin, 128)], axis=1)
    bias1 = jnp.concatenate([p["b2_0_b"], p["b3_0_b"], p["b4_0_b"]])
    y = pallas_matmul(x.reshape(-1, Cin), w1, bias1, activation="relu",
                      out_dtype=BF16).reshape(B, H, W, 256)
    b2 = y[..., 0:64]
    b3 = y[..., 64:128]
    b4 = y[..., 128:256]
    b2 = conv2d(b2, p["b2_1_w"], p["b2_1_b"], padding=(1, 0), activation="relu")
    b2 = conv2d(b2, p["b2_2_w"], p["b2_2_b"], padding=(0, 1), activation="relu")
    b2 = conv2d(b2, p["b2_3_w"], p["b2_3_b"], padding=(1, 0), activation="relu")
    b2 = conv2d(b2, p["b2_4_w"], p["b2_4_b"], padding=(0, 1), activation="relu")
    b3 = conv2d(b3, p["b3_1_w"], p["b3_1_b"], padding=(1, 0), activation="relu")
    b3 = conv2d(b3, p["b3_2_w"], p["b3_2_b"], padding=(0, 1), activation="relu")
    return jnp.concatenate([b1, b2, b3, b4], axis=-1)  # 128+128+128+128=512 channels, bf16


def swin_block_forward(tok, p, H, W, window_size, num_heads):
    """Non-shifted Swin block (shift_size=0, drop_path=0): tok (B, L, C) f32."""
    B, L, C = tok.shape
    ws = window_size
    shortcut = tok
    xn = pallas_layernorm(tok.reshape(-1, C), p["norm1_g"], p["norm1_b"],
                          out_dtype=BF16).reshape(B, H, W, C)
    nh, nw = H // ws, W // ws
    xw = xn.reshape(B, nh, ws, nw, ws, C).transpose(0, 1, 3, 2, 4, 5).reshape(-1, ws * ws, C)
    nwin, N, _ = xw.shape
    qkv = pallas_matmul(xw.reshape(-1, C), p["qkv_w"], p["qkv_b"],
                        out_dtype=BF16).reshape(nwin, N, 3 * C)
    attn = pallas_window_attention(qkv, p["rel_bias"], num_heads=num_heads)   # bf16
    proj = pallas_matmul(attn.reshape(-1, C), p["proj_w"], p["proj_b"],
                         out_dtype=BF16).reshape(nwin, N, C)
    x = proj.reshape(B, nh, nw, ws, ws, C).transpose(0, 1, 3, 2, 4, 5).reshape(B, H * W, C)
    x = shortcut + x                                   # f32 residual accumulation
    y = pallas_layernorm(x.reshape(-1, C), p["norm2_g"], p["norm2_b"], out_dtype=BF16)
    y = pallas_matmul(y, p["fc1_w"], p["fc1_b"], activation="gelu", out_dtype=BF16)
    y = pallas_matmul(y, p["fc2_w"], p["fc2_b"], out_dtype=BF16)
    return x + y.reshape(B, L, C)


def patch_merging_forward(tok, p, H, W):
    B, L, C = tok.shape
    x = tok.reshape(B, H, W, C)
    x0 = x[:, 0::2, 0::2, :]
    x1 = x[:, 1::2, 0::2, :]
    x2 = x[:, 0::2, 1::2, :]
    x3 = x[:, 1::2, 1::2, :]
    x = jnp.concatenate([x0, x1, x2, x3], axis=-1).reshape(B, (H // 2) * (W // 2), 4 * C)
    y = pallas_layernorm(x.reshape(-1, 4 * C), p["norm_g"], p["norm_b"], out_dtype=BF16)
    y = pallas_matmul(y, p["red_w"], jnp.zeros((2 * C,), F32),   # Linear(4C->2C, bias=False)
                      out_dtype=BF16)
    return y.reshape(B, (H // 2) * (W // 2), 2 * C)


def stage1_downsample(x, w, b):
    """4x4 stride-4 conv via space-to-depth reshape (non-overlapping taps) + matmul."""
    B, H, W, C = x.shape
    Cout = w.shape[-1]
    xb = (x.astype(BF16)
          .reshape(B, H // 4, 4, W // 4, 4, C)
          .transpose(0, 1, 3, 2, 4, 5)
          .reshape(B * (H // 4) * (W // 4), 16 * C))
    y = pallas_matmul(xb, w.reshape(16 * C, Cout), b, out_dtype=F32)
    return y.reshape(B, H // 4, W // 4, Cout)


def stage1_forward(x, p):                              # x: (B, 56, 56, 512) bf16
    B, H, W, C = x.shape
    tok = x.reshape(B, H * W, C)
    tok = pallas_matmul(tok.reshape(-1, C), p["embed_w"], p["embed_b"]).reshape(B, H * W, C)
    tok = swin_block_forward(tok, p["block1"], H, W, 7, 8)
    tok = swin_block_forward(tok, p["block2"], H, W, 7, 8)
    x = tok.reshape(B, H, W, C)
    return stage1_downsample(x, p["down_w"], p["down_b"])          # (B, 14, 14, 512) f32


def stage2_forward(x, p):                              # x: (B, 14, 14, 512) f32
    B, H, W, C = x.shape
    tok = x.reshape(B, H * W, C)
    tok = patch_merging_forward(tok, p["pm"], H, W)                        # (B, 49, 1024)
    tok = pallas_matmul(tok.reshape(-1, 2 * C), p["cr_w"], p["cr_b"]).reshape(B, 49, C)
    tok = swin_block_forward(tok, p["block1"], 7, 7, 7, 8)
    tok = swin_block_forward(tok, p["block2"], 7, 7, 7, 8)
    return tok                                          # (B, 49, 512) == torch (B,512,7,7)


def _soyatrans_forward(x_nchw, params):
    x = jnp.transpose(x_nchw, (0, 2, 3, 1)).astype(F32)          # NCHW -> NHWC
    x = vgg_forward(x, params["vgg"])
    x = inception_forward(x, params["inception"])
    x = stage1_forward(x, params["stage1"])
    tok = stage2_forward(x, params["stage2"])
    c = params["cls"]
    return pallas_classifier(tok, c["norm_g"], c["norm_b"], c["fc_w"], c["fc_b"])


soyatrans_forward = jax.jit(_soyatrans_forward)


# --------------------------------------------------------------------------
# Deterministic parameter construction
# --------------------------------------------------------------------------
class ParamGen:
    def __init__(self, seed=0):
        self.key = jax.random.PRNGKey(seed)

    def take(self, shape, scale=0.02):
        self.key, sub = jax.random.split(self.key)
        return scale * jax.random.normal(sub, shape, dtype=F32)


def make_rel_bias(table_np, ws, num_heads):
    coords = np.stack(np.meshgrid(np.arange(ws), np.arange(ws), indexing="ij"))
    cf = coords.reshape(2, -1)
    rel = (cf[:, :, None] - cf[:, None, :]).transpose(1, 2, 0).astype(np.int64)
    rel[:, :, 0] += ws - 1
    rel[:, :, 1] += ws - 1
    rel[:, :, 0] *= 2 * ws - 1
    idx = rel.sum(-1)                                   # (N, N)
    bias = table_np[idx.reshape(-1)].reshape(ws * ws, ws * ws, num_heads)
    return jnp.asarray(bias.transpose(2, 0, 1), dtype=F32)


def make_swin_params(pg, dim, num_heads, window_size):
    table = np.asarray(pg.take(((2 * window_size - 1) ** 2, num_heads)))
    return dict(
        norm1_g=jnp.ones((dim,), F32), norm1_b=jnp.zeros((dim,), F32),
        qkv_w=pg.take((dim, 3 * dim)), qkv_b=jnp.zeros((3 * dim,), F32),
        rel_bias=make_rel_bias(table, window_size, num_heads),
        proj_w=pg.take((dim, dim)), proj_b=jnp.zeros((dim,), F32),
        norm2_g=jnp.ones((dim,), F32), norm2_b=jnp.zeros((dim,), F32),
        fc1_w=pg.take((dim, 4 * dim)), fc1_b=jnp.zeros((4 * dim,), F32),
        fc2_w=pg.take((4 * dim, dim)), fc2_b=jnp.zeros((dim,), F32),
    )


def build_params(seed=0, num_classes=6):
    pg = ParamGen(seed)
    vgg = dict(
        c1_w=pg.take((3, 3, 3, 64)), c1_b=jnp.zeros((64,), F32),
        c2_w=pg.take((3, 3, 64, 64)), c2_b=jnp.zeros((64,), F32),
        c3_w=pg.take((3, 3, 64, 128)), c3_b=jnp.zeros((128,), F32),
        c4_w=pg.take((3, 3, 128, 128)), c4_b=jnp.zeros((128,), F32))
    inc = dict(
        b2_0_w=pg.take((1, 1, 128, 64)), b2_0_b=jnp.zeros((64,), F32),
        b2_1_w=pg.take((3, 1, 64, 96)), b2_1_b=jnp.zeros((96,), F32),
        b2_2_w=pg.take((1, 3, 96, 128)), b2_2_b=jnp.zeros((128,), F32),
        b2_3_w=pg.take((3, 1, 128, 96)), b2_3_b=jnp.zeros((96,), F32),
        b2_4_w=pg.take((1, 3, 96, 128)), b2_4_b=jnp.zeros((128,), F32),
        b3_0_w=pg.take((1, 1, 128, 64)), b3_0_b=jnp.zeros((64,), F32),
        b3_1_w=pg.take((3, 1, 64, 96)), b3_1_b=jnp.zeros((96,), F32),
        b3_2_w=pg.take((1, 3, 96, 128)), b3_2_b=jnp.zeros((128,), F32),
        b4_0_w=pg.take((1, 1, 128, 128)), b4_0_b=jnp.zeros((128,), F32))
    stage1 = dict(
        embed_w=pg.take((512, 512)), embed_b=jnp.zeros((512,), F32),
        block1=make_swin_params(pg, 512, 8, 7),
        block2=make_swin_params(pg, 512, 8, 7),
        down_w=pg.take((4, 4, 512, 512)), down_b=jnp.zeros((512,), F32))
    stage2 = dict(
        pm=dict(norm_g=jnp.ones((2048,), F32), norm_b=jnp.zeros((2048,), F32),
                red_w=pg.take((2048, 1024))),
        cr_w=pg.take((1024, 512)), cr_b=jnp.zeros((512,), F32),
        block1=make_swin_params(pg, 512, 8, 7),
        block2=make_swin_params(pg, 512, 8, 7))
    cls = dict(norm_g=jnp.ones((512,), F32), norm_b=jnp.zeros((512,), F32),
               fc_w=pg.take((512, num_classes)), fc_b=jnp.zeros((num_classes,), F32))
    return dict(vgg=vgg, inception=inc, stage1=stage1, stage2=stage2, cls=cls)


# --------------------------------------------------------------------------
if __name__ == "__main__":
    # The module's hard-coded dims (Stage1 input_res=(56,56), Stage2 7x7, dim=512)
    # imply a 224x224 RGB input through the /4 VGG front; batch=1 keeps it small.
    params = build_params(seed=0, num_classes=6)
    x = jax.random.normal(jax.random.PRNGKey(0), (1, 3, 224, 224), dtype=F32)
    out = soyatrans_forward(x, params)
    out = jax.block_until_ready(out)
    assert out.shape == (1, 6), out.shape
    assert bool(jnp.all(jnp.isfinite(out)))
    assert abs(float(jnp.sum(out)) - 1.0) < 1e-3        # softmax rows sum to 1
    print("KERNEL_OK")
</pallas_src>

<mosaic_0001>
module attributes {stable_mosaic.version = 11 : i64} {
  func.func @_matmul_kernel_single(%arg0: i32, %arg1: i32, %arg2: memref<1792x32xbf16, #tpu.memory_space<vmem>>, %arg3: memref<32x128xbf16, #tpu.memory_space<vmem>>, %arg4: memref<1x128xf32, #tpu.memory_space<vmem>>, %arg5: memref<1792x128xbf16, #tpu.memory_space<vmem>>) attributes {dimension_semantics = [#tpu.dimension_semantics<parallel>, #tpu.dimension_semantics<parallel>], iteration_bounds = array<i64: 28, 1>, scalar_prefetch = 0 : i64, scratch_operands = 0 : i64, tpu.core_type = #tpu.core_type<tc>, window_params = [{transform_indices = @transform_0, window_bounds = array<i64: 1792, 32>}, {transform_indices = @transform_1, window_bounds = array<i64: 32, 128>}, {transform_indices = @transform_2, window_bounds = array<i64: 1, 128>}, {transform_indices = @transform_3, window_bounds = array<i64: 1792, 128>}]} {
    %c0 = arith.constant 0 : index
    %c0_0 = arith.constant 0 : index
    %0 = vector.load %arg2[%c0, %c0_0] : memref<1792x32xbf16, #tpu.memory_space<vmem>>, vector<1792x32xbf16>
    %c0_1 = arith.constant 0 : index
    %c0_2 = arith.constant 0 : index
    %1 = vector.load %arg3[%c0_1, %c0_2] : memref<32x128xbf16, #tpu.memory_space<vmem>>, vector<32x128xbf16>
    %cst = arith.constant dense<0.000000e+00> : vector<1792x128xf32>
    %2 = tpu.matmul %0, %1, %cst {dimension_numbers = #tpu.dot_dimension_numbers<[1], [0], [0], [1], [0, 0, 1, 1], [], []>} : vector<1792x32xbf16>, vector<32x128xbf16>, vector<1792x128xf32> -> vector<1792x128xf32>
    %c0_3 = arith.constant 0 : index
    %c0_4 = arith.constant 0 : index
    %3 = vector.load %arg4[%c0_3, %c0_4] : memref<1x128xf32, #tpu.memory_space<vmem>>, vector<1x128xf32>
    %4 = vector.broadcast %3 : vector<1x128xf32> to vector<1792x128xf32>
    %5 = arith.addf %2, %4 : vector<1792x128xf32>
    %cst_5 = arith.constant 0.000000e+00 : f32
    %6 = vector.broadcast %cst_5 : f32 to vector<1792x128xf32>
    %7 = arith.maximumf %5, %6 : vector<1792x128xf32>
    %8 = arith.truncf %7 : vector<1792x128xf32> to vector<1792x128xbf16>
    %c0_6 = arith.constant 0 : index
    %c0_7 = arith.constant 0 : index
    %9 = vector.load %arg5[%c0_6, %c0_7] : memref<1792x128xbf16, #tpu.memory_space<vmem>>, vector<1792x128xbf16>
    tpu.vector_store %arg5[%c0_6, %c0_7], %8 {strides = array<i32>} : memref<1792x128xbf16, #tpu.memory_space<vmem>>, vector<1792x128xbf16>,
    return
  }
  func.func @transform_0(%arg0: i32, %arg1: i32) -> (i32, i32) {
    %c0_i32 = arith.constant 0 : i32
    %c0_i32_0 = arith.constant 0 : i32
    return %arg0, %c0_i32 : i32, i32
  }
  func.func @transform_1(%arg0: i32, %arg1: i32) -> (i32, i32) {
    %c0_i32 = arith.constant 0 : i32
    %c0_i32_0 = arith.constant 0 : i32
    return %c0_i32, %arg1 : i32, i32
  }
  func.func @transform_2(%arg0: i32, %arg1: i32) -> (i32, i32) {
    %c0_i32 = arith.constant 0 : i32
    %c0_i32_0 = arith.constant 0 : i32
    return %c0_i32, %arg1 : i32, i32
  }
  func.func @transform_3(%arg0: i32, %arg1: i32) -> (i32, i32) {
    %c0_i32 = arith.constant 0 : i32
    return %arg0, %arg1 : i32, i32
  }
}

</mosaic_0001>

<llo_original>
// kernel: pallas_matmul.1
$region0: #{pallas_matmul.1}
  #allocation0 [shape = 'u32[]', space=smem, size = 0x4, offset = 0x4, fixed_abs, tag = 'smem constant byte address 0x4 - core index']
  #allocation1 [shape = 'u32[144,128]{1,0:T(1,128)}', space=vmem, size = 0x12000, scoped, tag = 'internal scratch']
  %s0 = inlined_call_operand.vmem [shape: bf16[50176,32], index: 0, kind: input, shape index: {}]
  %s1 = inlined_call_operand.vmem [shape: bf16[32,128], index: 1, kind: input, shape index: {}]
  %s2 = inlined_call_operand.vmem [shape: f32[1,128], index: 2, kind: input, shape index: {}]
  %s3 = inlined_call_operand.vmem [shape: bf16[50176,128], index: 3, kind: output, shape index: {}]
  %s4 = sld [smem:[#allocation0]]
  $region45: #{pallas_matmul.1} parent=0
    _
  %s6 = ssub.s32 1, %s4
  %s7 = scalar_select 0, %s6, %s4
  loop: start=0, step=1, limit=30
  $region2: #{pallas_matmul.1} parent=0 // loop_pre_header
    _
  $region3: #{pallas_matmul.1} parent=0 // loop_header
    %s9 = sphi 0, %s13
    %p10 = scmp.ge.s32.totalorder %s9, 30
    %s16 = sphi 0, %s28
    %s17 = sphi 0, %s24
    %s18 = sphi 0, %s16
    %s19 = sphi 0, %s17
    %s20 = sphi 0, %s18
    %s21 = sphi 0, %s19
    %s31 = sphi 0, %s33
    %s34 = sphi 0, %s31
    %s35 = sphi 0, %s34
    %s51 = sphi 0, %s35
    %s57 = sphi 0, %s59
    %s60 = sphi 0, %s57
    %s61 = sphi 0, %s60
    %s77 = sphi 0, %s61
    %s83 = sphi 0, %s85
    %s86 = sphi 0, %s83
    %s87 = sphi 0, %s86
    %s103 = sphi 0, %s87
    %s111 = sphi 0, %s113
    %s114 = sphi 0, %s111
    %s115 = sphi 0, %s114
    %s131 = sphi 0, %s115
  $region4: #{pallas_matmul.1} parent=0 // loop_header_branch
    %12 = sbr.rel (%p10) target = $region8
  $region5: #{pallas_matmul.1} parent=0 // loop_body
    %s14 = ssub.s32 %s9, 1
    %s15 = ssub.s32 %s9, 2
    %s22 = sadd.s32 1, %s17
    %p23 = scmp.ge.s32.totalorder %s22, 1
    %s24 = scalar_select %p23, 0, %s22
    %s25 = sadd.s32 1, %s16
    %s26 = scalar_select %p23, %s25, %s16
    %p27 = scmp.ge.s32.totalorder %s26, 28
    %s28 = scalar_select %p27, 0, %s26
    %s29 = ssub.s32 %s16, %s28
    %p30 = scmp.eq.s32.totalorder %s29, 0
    %s32 = sadd.s32 %s31, 1
    %s33 = scalar_select %p30, %s31, %s32
    %p36 = pneg %p30
    %p37 = scmp.eq.s32.totalorder %s9, 27
    %p38 = por %p36, %p37
    %p39 = scmp.ne.s32.totalorder %s31, %s34
    %p40 = scmp.eq.s32.totalorder %s9, 0
    %p41 = por %p39, %p40
    %p42 = scmp.ne.s32.totalorder %s31, %s34
    %p43 = scmp.eq.s32.totalorder %s14, 27
    %p44 = por %p42, %p43
    %p45 = scmp.ne.s32.totalorder %s34, %s35
    %p46 = scmp.eq.s32.totalorder %s14, 0
    %p47 = por %p45, %p46
    %p48 = scmp.ne.s32.totalorder %s34, %s35
    %p49 = scmp.eq.s32.totalorder %s15, 27
    %p50 = por %p48, %p49
    %p52 = scmp.ne.s32.totalorder %s35, %s51
    %p53 = scmp.eq.s32.totalorder %s15, 0
    %p54 = por %p52, %p53
    %s55 = ssub.s32 %s17, %s24
    %p56 = scmp.eq.s32.totalorder %s55, 0
    %s58 = sadd.s32 %s57, 1
    %s59 = scalar_select %p56, %s57, %s58
    %p62 = pneg %p56
    %p63 = scmp.eq.s32.totalorder %s9, 27
    %p64 = por %p62, %p63
    %p65 = scmp.ne.s32.totalorder %s57, %s60
    %p66 = scmp.eq.s32.totalorder %s9, 0
    %p67 = por %p65, %p66
    %p68 = scmp.ne.s32.totalorder %s57, %s60
    %p69 = scmp.eq.s32.totalorder %s14, 27
    %p70 = por %p68, %p69
    %p71 = scmp.ne.s32.totalorder %s60, %s61
    %p72 = scmp.eq.s32.totalorder %s14, 0
    %p73 = por %p71, %p72
    %p74 = scmp.ne.s32.totalorder %s60, %s61
    %p75 = scmp.eq.s32.totalorder %s15, 27
    %p76 = por %p74, %p75
    %p78 = scmp.ne.s32.totalorder %s61, %s77
    %p79 = scmp.eq.s32.totalorder %s15, 0
    %p80 = por %p78, %p79
    %s81 = ssub.s32 %s17, %s24
    %p82 = scmp.eq.s32.totalorder %s81, 0
    %s84 = sadd.s32 %s83, 1
    %s85 = scalar_select %p82, %s83, %s84
    %p88 = pneg %p82
    %p89 = scmp.eq.s32.totalorder %s9, 27
    %p90 = por %p88, %p89
    %p91 = scmp.ne.s32.totalorder %s83, %s86
    %p92 = scmp.eq.s32.totalorder %s9, 0
    %p93 = por %p91, %p92
    %p94 = scmp.ne.s32.totalorder %s83, %s86
    %p95 = scmp.eq.s32.totalorder %s14, 27
    %p96 = por %p94, %p95
    %p97 = scmp.ne.s32.totalorder %s86, %s87
    %p98 = scmp.eq.s32.totalorder %s14, 0
    %p99 = por %p97, %p98
    %p100 = scmp.ne.s32.totalorder %s86, %s87
    %p101 = scmp.eq.s32.totalorder %s15, 27
    %p102 = por %p100, %p101
    %p104 = scmp.ne.s32.totalorder %s87, %s103
    %p105 = scmp.eq.s32.totalorder %s15, 0
    %p106 = por %p104, %p105
    %s107 = ssub.s32 %s16, %s28
    %s108 = ssub.s32 %s17, %s24
    %s109 = sor.u32 %s107, %s108
    %p110 = scmp.eq.s32.totalorder %s109, 0
    %s112 = sadd.s32 %s111, 1
    %s113 = scalar_select %p110, %s111, %s112
    %p116 = pneg %p110
    %p117 = scmp.eq.s32.totalorder %s9, 27
    %p118 = por %p116, %p117
    %p119 = scmp.ne.s32.totalorder %s111, %s114
    %p120 = scmp.eq.s32.totalorder %s9, 0
    %p121 = por %p119, %p120
    %p122 = scmp.ne.s32.totalorder %s111, %s114
    %p123 = scmp.eq.s32.totalorder %s14, 27
    %p124 = por %p122, %p123
    %p125 = scmp.ne.s32.totalorder %s114, %s115
    %p126 = scmp.eq.s32.totalorder %s14, 0
    %p127 = por %p125, %p126
    %p128 = scmp.ne.s32.totalorder %s114, %s115
    %p129 = scmp.eq.s32.totalorder %s15, 27
    %p130 = por %p128, %p129
    %p132 = scmp.ne.s32.totalorder %s115, %s131
    %p133 = scmp.eq.s32.totalorder %s15, 0
    %p134 = por %p132, %p133
    %p135 = scmp.le.s32.totalorder 1, %s9
    %p136 = scmp.lt.s32.totalorder %s9, 29
    %p137 = pnand %p135, %p136
    %p138 = pneg %p137
    // Predicated region
    $region9: #{pallas_matmul.1} parent=5 // pred_check
      _
    $region10: #{pallas_matmul.1} parent=5 // pred_check_branch
      %140 = sbr.rel (%p137) target = $region12
    $region11: #{pallas_matmul.1} parent=5 // pred_region
      %s141 = ssub.s32 %s9, 1
      // Predicated region
      $region13: #{pallas_matmul.1} parent=11 // pred_check
        %p142 = pneg %p73
      $region14: #{pallas_matmul.1} parent=11 // pred_check_branch
        %144 = sbr.rel (%p142) target = $region16
      $region15: #{pallas_matmul.1} parent=11 // pred_region
        %p145 = scmp.lt.s32.totalorder %s19, 0
        %s146 = scalar_select %p145, %s19, 0
        %s147 = smul.addr %s146, 4
        %s148 = scalar_lea.vmem %s1, %s147
      $region16: #{pallas_matmul.1} parent=11 // pred_fallthru
        _
      // Predicated region
      $region17: #{pallas_matmul.1} parent=11 // pred_check
        %p149 = pneg %p99
      $region18: #{pallas_matmul.1} parent=11 // pred_check_branch
        %151 = sbr.rel (%p149) target = $region20
      $region19: #{pallas_matmul.1} parent=11 // pred_region
        %p152 = scmp.lt.s32.totalorder %s19, 0
        %s153 = scalar_select %p152, %s19, 0
        %s154 = scalar_lea.vmem %s2, %s153
      $region20: #{pallas_matmul.1} parent=11 // pred_fallthru
        _
    $region12: #{pallas_matmul.1} parent=5 // pred_fallthru
      _
    %p155 = scmp.lt.s32.totalorder %s9, 28
    // Predicated region
    $region21: #{pallas_matmul.1} parent=5 // pred_check
      %p156 = pneg %p155
    $region22: #{pallas_matmul.1} parent=5 // pred_check_branch
      %158 = sbr.rel (%p156) target = $region24
    $region23: #{pallas_matmul.1} parent=5 // pred_region
      // Predicated region
      $region25: #{pallas_matmul.1} parent=23 // pred_check
        %p159 = pneg %p41
      $region26: #{pallas_matmul.1} parent=23 // pred_check_branch
        %161 = sbr.rel (%p159) target = $region28
      $region27: #{pallas_matmul.1} parent=23 // pred_region
        %s162 = smul.u32 224, %s16
        %p163 = scmp.lt.s32.totalorder %s162, 6271
        %s164 = scalar_select %p163, %s162, 6271
        %s165 = smul.addr %s164, 4
        %s166 = scalar_lea.vmem %s0, %s165
        %s167 = smul.u32 224, %s16
      $region28: #{pallas_matmul.1} parent=23 // pred_fallthru
        _
    $region24: #{pallas_matmul.1} parent=5 // pred_fallthru
      _
    %p168 = scmp.le.s32.totalorder 1, %s9
    %p169 = scmp.lt.s32.totalorder %s9, 29
    %p170 = pnand %p168, %p169
    %p171 = pneg %p170
    // Predicated region
    $region29: #{pallas_matmul.1} parent=5 // pred_check
      _
    $region30: #{pallas_matmul.1} parent=5 // pred_check_branch
      %173 = sbr.rel (%p170) target = $region32
    $region31: #{pallas_matmul.1} parent=5 // pred_region
      %s174 = ssub.s32 %s9, 1
      %s175 = smul.u32 224, %s18
      %p176 = scmp.lt.s32.totalorder %s175, 6271
      %s177 = scalar_select %p176, %s175, 6271
      %s178 = smul.addr %s177, 4
      %s179 = scalar_lea.vmem %s0, %s178
      %p180 = pneg %p47
      %p181 = pneg %p44
      %p182 = scmp.lt.s32.totalorder %s19, 0
      %s183 = scalar_select %p182, %s19, 0
      %s184 = smul.addr %s183, 4
      %s185 = scalar_lea.vmem %s1, %s184
      %p186 = pneg %p73
      %p187 = pneg %p70
      %p188 = scmp.lt.s32.totalorder %s19, 0
      %s189 = scalar_select %p188, %s19, 0
      %s190 = scalar_lea.vmem %s2, %s189
      %p191 = pneg %p99
      %p192 = pneg %p96
      %p193 = pneg %p127
      %p194 = pneg %p124
      %s195 = smul.u32 224, %s18
      %p196 = scmp.lt.s32.totalorder %s195, 6271
      %s197 = scalar_select %p196, %s195, 6271
      %p198 = scmp.lt.s32.totalorder %s19, 0
      %s199 = scalar_select %p198, %s19, 0
      %s200 = sadd.s32 %s199, %s197
      %s201 = smul.addr %s200, 4
      %s202 = scalar_lea.vmem %s3, %s201
      %s203 = smul.u32 224, %s18
      %p204 = scmp.lt.s32.totalorder %s203, 6271
      %s205 = scalar_select %p204, %s203, 6271
      %s206 = smul.addr %s205, 4
      %s207 = scalar_lea.vmem %s0, %s206
      %s208 = smul.u32 224, %s18
      %p209 = scmp.lt.s32.totalorder %s19, 0
      %s210 = scalar_select %p209, %s19, 0
      %s211 = smul.addr %s210, 4
      %s212 = scalar_lea.vmem %s1, %s211
      %p213 = scmp.lt.s32.totalorder %s19, 0
      %s214 = scalar_select %p213, %s19, 0
      %s215 = scalar_lea.vmem %s2, %s214
      %s216 = smul.u32 224, %s18
      %p217 = scmp.lt.s32.totalorder %s216, 6271
      %s218 = scalar_select %p217, %s216, 6271
      %p219 = scmp.lt.s32.totalorder %s19, 0
      %s220 = scalar_select %p219, %s19, 0
      %s221 = sadd.s32 %s220, %s218
      %s222 = smul.addr %s221, 4
      %s223 = scalar_lea.vmem %s3, %s222
      %s224 = smul.u32 224, %s18
      %v226 = vld [vmem:[%s207] sm:$0xf]
      %v227 = vld [vmem:[%s207 + $0x4] sm:$0xf]
      %v228 = vld [vmem:[%s207 + $0x8] sm:$0xf]
      %v229 = vld [vmem:[%s207 + $0xc] sm:$0xf]
      %v230 = vld [vmem:[%s207 + $0x10] sm:$0xf]
      %v231 = vld [vmem:[%s207 + $0x14] sm:$0xf]
      %v232 = vld [vmem:[%s207 + $0x18] sm:$0xf]
      %v233 = vld [vmem:[%s207 + $0x1c] sm:$0xf]
      %v234 = vld [vmem:[%s207 + $0x20] sm:$0xf]
      %v235 = vld [vmem:[%s207 + $0x24] sm:$0xf]
      %v236 = vld [vmem:[%s207 + $0x28] sm:$0xf]
      %v237 = vld [vmem:[%s207 + $0x2c] sm:$0xf]
      %v238 = vld [vmem:[%s207 + $0x30] sm:$0xf]
      %v239 = vld [vmem:[%s207 + $0x34] sm:$0xf]
      %v240 = vld [vmem:[%s207 + $0x38] sm:$0xf]
      %v241 = vld [vmem:[%s207 + $0x3c] sm:$0xf]
      %v242 = vld [vmem:[%s207 + $0x40] sm:$0xf]
      %v243 = vld [vmem:[%s207 + $0x44] sm:$0xf]
      %v244 = vld [vmem:[%s207 + $0x48] sm:$0xf]
      %v245 = vld [vmem:[%s207 + $0x4c] sm:$0xf]
      %v246 = vld [vmem:[%s207 + $0x50] sm:$0xf]
      %v247 = vld [vmem:[%s207 + $0x54] sm:$0xf]
      %v248 = vld [vmem:[%s207 + $0x58] sm:$0xf]
      %v249 = vld [vmem:[%s207 + $0x5c] sm:$0xf]
      %v250 = vld [vmem:[%s207 + $0x60] sm:$0xf]
      %v251 = vld [vmem:[%s207 + $0x64] sm:$0xf]
      %v252 = vld [vmem:[%s207 + $0x68] sm:$0xf]
      %v253 = vld [vmem:[%s207 + $0x6c] sm:$0xf]
      %v254 = vld [vmem:[%s207 + $0x70] sm:$0xf]
      %v255 = vld [vmem:[%s207 + $0x74] sm:$0xf]
      %v256 = vld [vmem:[%s207 + $0x78] sm:$0xf]
      %v257 = vld [vmem:[%s207 + $0x7c] sm:$0xf]
      %v258 = vld [vmem:[%s207 + $0x80] sm:$0xf]
      %v259 = vld [vmem:[%s207 + $0x84] sm:$0xf]
      %v260 = vld [vmem:[%s207 + $0x88] sm:$0xf]
      %v261 = vld [vmem:[%s207 + $0x8c] sm:$0xf]
      %v262 = vld [vmem:[%s207 + $0x90] sm:$0xf]
      %v263 = vld [vmem:[%s207 + $0x94] sm:$0xf]
      %v264 = vld [vmem:[%s207 + $0x98] sm:$0xf]
      %v265 = vld [vmem:[%s207 + $0x9c] sm:$0xf]
      %v266 = vld [vmem:[%s207 + $0xa0] sm:$0xf]
      %v267 = vld [vmem:[%s207 + $0xa4] sm:$0xf]
      %v268 = vld [vmem:[%s207 + $0xa8] sm:$0xf]
      %v269 = vld [vmem:[%s207 + $0xac] sm:$0xf]
      %v270 = vld [vmem:[%s207 + $0xb0] sm:$0xf]
      %v271 = vld [vmem:[%s207 + $0xb4] sm:$0xf]
      %v272 = vld [vmem:[%s207 + $0xb8] sm:$0xf]
      %v273 = vld [vmem:[%s207 + $0xbc] sm:$0xf]
      %v274 = vld [vmem:[%s207 + $0xc0] sm:$0xf]
      %v275 = vld [vmem:[%s207 + $0xc4] sm:$0xf]
      %v276 = vld [vmem:[%s207 + $0xc8] sm:$0xf]
      %v277 = vld [vmem:[%s207 + $0xcc] sm:$0xf]
      %v278 = vld [vmem:[%s207 + $0xd0] sm:$0xf]
      %v279 = vld [vmem:[%s207 + $0xd4] sm:$0xf]
      %v280 = vld [vmem:[%s207 + $0xd8] sm:$0xf]
      %v281 = vld [vmem:[%s207 + $0xdc] sm:$0xf]
      %v282 = vld [vmem:[%s207 + $0xe0] sm:$0xf]
      %v283 = vld [vmem:[%s207 + $0xe4] sm:$0xf]
      %v284 = vld [vmem:[%s207 + $0xe8] sm:$0xf]
      %v285 = vld [vmem:[%s207 + $0xec] sm:$0xf]
      %v286 = vld [vmem:[%s207 + $0xf0] sm:$0xf]
      %v287 = vld [vmem:[%s207 + $0xf4] sm:$0xf]
      %v288 = vld [vmem:[%s207 + $0xf8] sm:$0xf]
      %v289 = vld [vmem:[%s207 + $0xfc] sm:$0xf]
      %v290 = vld [vmem:[%s207 + $0x100] sm:$0xf]
      %v291 = vld [vmem:[%s207 + $0x104] sm:$0xf]
      %v292 = vld [vmem:[%s207 + $0x108] sm:$0xf]
      %v293 = vld [vmem:[%s207 + $0x10c] sm:$0xf]
      %v294 = vld [vmem:[%s207 + $0x110] sm:$0xf]
      %v295 = vld [vmem:[%s207 + $0x114] sm:$0xf]
      %v296 = vld [vmem:[%s207 + $0x118] sm:$0xf]
      %v297 = vld [vmem:[%s207 + $0x11c] sm:$0xf]
      %v298 = vld [vmem:[%s207 + $0x120] sm:$0xf]
      %v299 = vld [vmem:[%s207 + $0x124] sm:$0xf]
      %v300 = vld [vmem:[%s207 + $0x128] sm:$0xf]
      %v301 = vld [vmem:[%s207 + $0x12c] sm:$0xf]
      %v302 = vld [vmem:[%s207 + $0x130] sm:$0xf]
      %v303 = vld [vmem:[%s207 + $0x134] sm:$0xf]
      %v304 = vld [vmem:[%s207 + $0x138] sm:$0xf]
      %v305 = vld [vmem:[%s207 + $0x13c] sm:$0xf]
      %v306 = vld [vmem:[%s207 + $0x140] sm:$0xf]
      %v307 = vld [vmem:[%s207 + $0x144] sm:$0xf]
      %v308 = vld [vmem:[%s207 + $0x148] sm:$0xf]
      %v309 = vld [vmem:[%s207 + $0x14c] sm:$0xf]
      %v310 = vld [vmem:[%s207 + $0x150] sm:$0xf]
      %v311 = vld [vmem:[%s207 + $0x154] sm:$0xf]
      %v312 = vld [vmem:[%s207 + $0x158] sm:$0xf]
      %v313 = vld [vmem:[%s207 + $0x15c] sm:$0xf]
      %v314 = vld [vmem:[%s207 + $0x160] sm:$0xf]
      %v315 = vld [vmem:[%s207 + $0x164] sm:$0xf]
      %v316 = vld [vmem:[%s207 + $0x168] sm:$0xf]
      %v317 = vld [vmem:[%s207 + $0x16c] sm:$0xf]
      %v318 = vld [vmem:[%s207 + $0x170] sm:$0xf]
      %v319 = vld [vmem:[%s207 + $0x174] sm:$0xf]
      %v320 = vld [vmem:[%s207 + $0x178] sm:$0xf]
      %v321 = vld [vmem:[%s207 + $0x17c] sm:$0xf]
      %v322 = vld [vmem:[%s207 + $0x180] sm:$0xf]
      %v323 = vld [vmem:[%s207 + $0x184] sm:$0xf]
      %v324 = vld [vmem:[%s207 + $0x188] sm:$0xf]
      %v325 = vld [vmem:[%s207 + $0x18c] sm:$0xf]
      %v326 = vld [vmem:[%s207 + $0x190] sm:$0xf]
      %v327 = vld [vmem:[%s207 + $0x194] sm:$0xf]
      %v328 = vld [vmem:[%s207 + $0x198] sm:$0xf]
      %v329 = vld [vmem:[%s207 + $0x19c] sm:$0xf]
      %v330 = vld [vmem:[%s207 + $0x1a0] sm:$0xf]
      %v331 = vld [vmem:[%s207 + $0x1a4] sm:$0xf]
      %v332 = vld [vmem:[%s207 + $0x1a8] sm:$0xf]
      %v333 = vld [vmem:[%s207 + $0x1ac] sm:$0xf]
      %v334 = vld [vmem:[%s207 + $0x1b0] sm:$0xf]
      %v335 = vld [vmem:[%s207 + $0x1b4] sm:$0xf]
      %v336 = vld [vmem:[%s207 + $0x1b8] sm:$0xf]
      %v337 = vld [vmem:[%s207 + $0x1bc] sm:$0xf]
      %v338 = vld [vmem:[%s207 + $0x1c0] sm:$0xf]
      %v339 = vld [vmem:[%s207 + $0x1c4] sm:$0xf]
      %v340 = vld [vmem:[%s207 + $0x1c8] sm:$0xf]
      %v341 = vld [vmem:[%s207 + $0x1cc] sm:$0xf]
      %v342 = vld [vmem:[%s207 + $0x1d0] sm:$0xf]
      %v343 = vld [vmem:[%s207 + $0x1d4] sm:$0xf]
      %v344 = vld [vmem:[%s207 + $0x1d8] sm:$0xf]
      %v345 = vld [vmem:[%s207 + $0x1dc] sm:$0xf]
      %v346 = vld [vmem:[%s207 + $0x1e0] sm:$0xf]
      %v347 = vld [vmem:[%s207 + $0x1e4] sm:$0xf]
      %v348 = vld [vmem:[%s207 + $0x1e8] sm:$0xf]
      %v349 = vld [vmem:[%s207 + $0x1ec] sm:$0xf]
      %v350 = vld [vmem:[%s207 + $0x1f0] sm:$0xf]
      %v351 = vld [vmem:[%s207 + $0x1f4] sm:$0xf]
      %v352 = vld [vmem:[%s207 + $0x1f8] sm:$0xf]
      %v353 = vld [vmem:[%s207 + $0x1fc] sm:$0xf]
      %v354 = vld [vmem:[%s207 + $0x200] sm:$0xf]
      %v355 = vld [vmem:[%s207 + $0x204] sm:$0xf]
      %v356 = vld [vmem:[%s207 + $0x208] sm:$0xf]
      %v357 = vld [vmem:[%s207 + $0x20c] sm:$0xf]
      %v358 = vld [vmem:[%s207 + $0x210] sm:$0xf]
      %v359 = vld [vmem:[%s207 + $0x214] sm:$0xf]
      %v360 = vld [vmem:[%s207 + $0x218] sm:$0xf]
      %v361 = vld [vmem:[%s207 + $0x21c] sm:$0xf]
      %v362 = vld [vmem:[%s207 + $0x220] sm:$0xf]
      %v363 = vld [vmem:[%s207 + $0x224] sm:$0xf]
      %v364 = vld [vmem:[%s207 + $0x228] sm:$0xf]
      %v365 = vld [vmem:[%s207 + $0x22c] sm:$0xf]
      %v366 = vld [vmem:[%s207 + $0x230] sm:$0xf]
      %v367 = vld [vmem:[%s207 + $0x234] sm:$0xf]
      %v368 = vld [vmem:[%s207 + $0x238] sm:$0xf]
      %v369 = vld [vmem:[%s207 + $0x23c] sm:$0xf]
      %v370 = vld [vmem:[%s207 + $0x240] sm:$0xf]
      %v371 = vld [vmem:[%s207 + $0x244] sm:$0xf]
      %v372 = vld [vmem:[%s207 + $0x248] sm:$0xf]
      %v373 = vld [vmem:[%s207 + $0x24c] sm:$0xf]
      %v374 = vld [vmem:[%s207 + $0x250] sm:$0xf]
      %v375 = vld [vmem:[%s207 + $0x254] sm:$0xf]
      %v376 = vld [vmem:[%s207 + $0x258] sm:$0xf]
      %v377 = vld [vmem:[%s207 + $0x25c] sm:$0xf]
      %v378 = vld [vmem:[%s207 + $0x260] sm:$0xf]
      %v379 = vld [vmem:[%s207 + $0x264] sm:$0xf]
      %v380 = vld [vmem:[%s207 + $0x268] sm:$0xf]
      %v381 = vld [vmem:[%s207 + $0x26c] sm:$0xf]
      %v382 = vld [vmem:[%s207 + $0x270] sm:$0xf]
      %v383 = vld [vmem:[%s207 + $0x274] sm:$0xf]
      %v384 = vld [vmem:[%s207 + $0x278] sm:$0xf]
      %v385 = vld [vmem:[%s207 + $0x27c] sm:$0xf]
      %v386 = vld [vmem:[%s207 + $0x280] sm:$0xf]
      %v387 = vld [vmem:[%s207 + $0x284] sm:$0xf]
      %v388 = vld [vmem:[%s207 + $0x288] sm:$0xf]
      %v389 = vld [vmem:[%s207 + $0x28c] sm:$0xf]
      %v390 = vld [vmem:[%s207 + $0x290] sm:$0xf]
      %v391 = vld [vmem:[%s207 + $0x294] sm:$0xf]
      %v392 = vld [vmem:[%s207 + $0x298] sm:$0xf]
      %v393 = vld [vmem:[%s207 + $0x29c] sm:$0xf]
      %v394 = vld [vmem:[%s207 + $0x2a0] sm:$0xf]
      %v395 = vld [vmem:[%s207 + $0x2a4] sm:$0xf]
      %v396 = vld [vmem:[%s207 + $0x2a8] sm:$0xf]
      %v397 = vld [vmem:[%s207 + $0x2ac] sm:$0xf]
      %v398 = vld [vmem:[%s207 + $0x2b0] sm:$0xf]
      %v399 = vld [vmem:[%s207 + $0x2b4] sm:$0xf]
      %v400 = vld [vmem:[%s207 + $0x2b8] sm:$0xf]
      %v401 = vld [vmem:[%s207 + $0x2bc] sm:$0xf]
      %v402 = vld [vmem:[%s207 + $0x2c0] sm:$0xf]
      %v403 = vld [vmem:[%s207 + $0x2c4] sm:$0xf]
      %v404 = vld [vmem:[%s207 + $0x2c8] sm:$0xf]
      %v405 = vld [vmem:[%s207 + $0x2cc] sm:$0xf]
      %v406 = vld [vmem:[%s207 + $0x2d0] sm:$0xf]
      %v407 = vld [vmem:[%s207 + $0x2d4] sm:$0xf]
      %v408 = vld [vmem:[%s207 + $0x2d8] sm:$0xf]
      %v409 = vld [vmem:[%s207 + $0x2dc] sm:$0xf]
      %v410 = vld [vmem:[%s207 + $0x2e0] sm:$0xf]
      %v411 = vld [vmem:[%s207 + $0x2e4] sm:$0xf]
      %v412 = vld [vmem:[%s207 + $0x2e8] sm:$0xf]
      %v413 = vld [vmem:[%s207 + $0x2ec] sm:$0xf]
      %v414 = vld [vmem:[%s207 + $0x2f0] sm:$0xf]
      %v415 = vld [vmem:[%s207 + $0x2f4] sm:$0xf]
      %v416 = vld [vmem:[%s207 + $0x2f8] sm:$0xf]
      %v417 = vld [vmem:[%s207 + $0x2fc] sm:$0xf]
      %v418 = vld [vmem:[%s207 + $0x300] sm:$0xf]
      %v419 = vld [vmem:[%s207 + $0x304] sm:$0xf]
      %v420 = vld [vmem:[%s207 + $0x308] sm:$0xf]
      %v421 = vld [vmem:[%s207 + $0x30c] sm:$0xf]
      %v422 = vld [vmem:[%s207 + $0x310] sm:$0xf]
      %v423 = vld [vmem:[%s207 + $0x314] sm:$0xf]
      %v424 = vld [vmem:[%s207 + $0x318] sm:$0xf]
      %v425 = vld [vmem:[%s207 + $0x31c] sm:$0xf]
      %v426 = vld [vmem:[%s207 + $0x320] sm:$0xf]
      %v427 = vld [vmem:[%s207 + $0x324] sm:$0xf]
      %v428 = vld [vmem:[%s207 + $0x328] sm:$0xf]
      %v429 = vld [vmem:[%s207 + $0x32c] sm:$0xf]
      %v430 = vld [vmem:[%s207 + $0x330] sm:$0xf]
      %v431 = vld [vmem:[%s207 + $0x334] sm:$0xf]
      %v432 = vld [vmem:[%s207 + $0x338] sm:$0xf]
      %v433 = vld [vmem:[%s207 + $0x33c] sm:$0xf]
      %v434 = vld [vmem:[%s207 + $0x340] sm:$0xf]
      %v435 = vld [vmem:[%s207 + $0x344] sm:$0xf]
      %v436 = vld [vmem:[%s207 + $0x348] sm:$0xf]
      %v437 = vld [vmem:[%s207 + $0x34c] sm:$0xf]
      %v438 = vld [vmem:[%s207 + $0x350] sm:$0xf]
      %v439 = vld [vmem:[%s207 + $0x354] sm:$0xf]
      %v440 = vld [vmem:[%s207 + $0x358] sm:$0xf]
      %v441 = vld [vmem:[%s207 + $0x35c] sm:$0xf]
      %v442 = vld [vmem:[%s207 + $0x360] sm:$0xf]
      %v443 = vld [vmem:[%s207 + $0x364] sm:$0xf]
      %v444 = vld [vmem:[%s207 + $0x368] sm:$0xf]
      %v445 = vld [vmem:[%s207 + $0x36c] sm:$0xf]
      %v446 = vld [vmem:[%s207 + $0x370] sm:$0xf]
      %v447 = vld [vmem:[%s207 + $0x374] sm:$0xf]
      %v448 = vld [vmem:[%s207 + $0x378] sm:$0xf]
      %v449 = vld [vmem:[%s207 + $0x37c] sm:$0xf]
      %v450 = vld [vmem:[%s212] sm:$0xf]
      %v451 = vld [vmem:[%s212 + $0x4] sm:$0xf]
      %v452 = vld [vmem:[%s212 + $0x8] sm:$0xf]
      %v453 = vld [vmem:[%s212 + $0xc] sm:$0xf]
      %v454 = vld [vmem:[%s215] sm:$0x1]
      %v456 = vlaneseq
      %v457 = vshrl.u32 %v456, 7
      %v458 = vsub.s32 0, %v457
      %v459 = vrot.slane %v454, %v458
      %v685 = vunpack.c.l.b16 %v226
      %v686 = vunpack.c.l.b16 %v227
      %v687 = vunpack.c.l.b16 %v228
      %v688 = vunpack.c.l.b16 %v229
      %v689 = vunpack.c.l.b16 %v230
      %v690 = vunpack.c.l.b16 %v231
      %v691 = vunpack.c.l.b16 %v232
      %v692 = vunpack.c.l.b16 %v233
      %v693 = vunpack.c.l.b16 %v234
      %v694 = vunpack.c.l.b16 %v235
      %v695 = vunpack.c.l.b16 %v236
      %v696 = vunpack.c.l.b16 %v237
      %v697 = vunpack.c.l.b16 %v238
      %v698 = vunpack.c.l.b16 %v239
      %v699 = vunpack.c.l.b16 %v240
      %v700 = vunpack.c.l.b16 %v241
      %v701 = vunpack.c.l.b16 %v242
      %v702 = vunpack.c.l.b16 %v243
      %v703 = vunpack.c.l.b16 %v244
      %v704 = vunpack.c.l.b16 %v245
      %v705 = vunpack.c.l.b16 %v246
      %v706 = vunpack.c.l.b16 %v247
      %v707 = vunpack.c.l.b16 %v248
      %v708 = vunpack.c.l.b16 %v249
      %v709 = vunpack.c.l.b16 %v250
      %v710 = vunpack.c.l.b16 %v251
      %v711 = vunpack.c.l.b16 %v252
      %v712 = vunpack.c.l.b16 %v253
      %v713 = vunpack.c.l.b16 %v254
      %v714 = vunpack.c.l.b16 %v255
      %v715 = vunpack.c.l.b16 %v256
      %v716 = vunpack.c.l.b16 %v257
      %v717 = vunpack.c.l.b16 %v258
      %v718 = vunpack.c.l.b16 %v259
      %v719 = vunpack.c.l.b16 %v260
      %v720 = vunpack.c.l.b16 %v261
      %v721 = vunpack.c.l.b16 %v262
      %v722 = vunpack.c.l.b16 %v263
      %v723 = vunpack.c.l.b16 %v264
      %v724 = vunpack.c.l.b16 %v265
      %v725 = vunpack.c.l.b16 %v266
      %v726 = vunpack.c.l.b16 %v267
      %v727 = vunpack.c.l.b16 %v268
      %v728 = vunpack.c.l.b16 %v269
      %v729 = vunpack.c.l.b16 %v270
      %v730 = vunpack.c.l.b16 %v271
      %v731 = vunpack.c.l.b16 %v272
      %v732 = vunpack.c.l.b16 %v273
      %v733 = vunpack.c.l.b16 %v274
      %v734 = vunpack.c.l.b16 %v275
      %v735 = vunpack.c.l.b16 %v276
      %v736 = vunpack.c.l.b16 %v277
      %v737 = vunpack.c.l.b16 %v278
      %v738 = vunpack.c.l.b16 %v279
      %v739 = vunpack.c.l.b16 %v280
      %v740 = vunpack.c.l.b16 %v281
      %v741 = vunpack.c.l.b16 %v282
      %v742 = vunpack.c.l.b16 %v283
      %v743 = vunpack.c.l.b16 %v284
      %v744 = vunpack.c.l.b16 %v285
      %v745 = vunpack.c.l.b16 %v286
      %v746 = vunpack.c.l.b16 %v287
      %v747 = vunpack.c.l.b16 %v288
      %v748 = vunpack.c.l.b16 %v289
      %v749 = vunpack.c.l.b16 %v290
      %v750 = vunpack.c.l.b16 %v291
      %v751 = vunpack.c.l.b16 %v292
      %v752 = vunpack.c.l.b16 %v293
      %v753 = vunpack.c.l.b16 %v294
      %v754 = vunpack.c.l.b16 %v295
      %v755 = vunpack.c.l.b16 %v296
      %v756 = vunpack.c.l.b16 %v297
      %v757 = vunpack.c.l.b16 %v298
      %v758 = vunpack.c.l.b16 %v299
      %v759 = vunpack.c.l.b16 %v300
      %v760 = vunpack.c.l.b16 %v301
      %v761 = vunpack.c.l.b16 %v302
      %v762 = vunpack.c.l.b16 %v303
      %v763 = vunpack.c.l.b16 %v304
      %v764 = vunpack.c.l.b16 %v305
      %v765 = vunpack.c.l.b16 %v306
      %v766 = vunpack.c.l.b16 %v307
      %v767 = vunpack.c.l.b16 %v308
      %v768 = vunpack.c.l.b16 %v309
      %v769 = vunpack.c.l.b16 %v310
      %v770 = vunpack.c.l.b16 %v311
      %v771 = vunpack.c.l.b16 %v312
      %v772 = vunpack.c.l.b16 %v313
      %v773 = vunpack.c.l.b16 %v314
      %v774 = vunpack.c.l.b16 %v315
      %v775 = vunpack.c.l.b16 %v316
      %v776 = vunpack.c.l.b16 %v317
      %v777 = vunpack.c.l.b16 %v318
      %v778 = vunpack.c.l.b16 %v319
      %v779 = vunpack.c.l.b16 %v320
      %v780 = vunpack.c.l.b16 %v321
      %v781 = vunpack.c.l.b16 %v322
      %v782 = vunpack.c.l.b16 %v323
      %v783 = vunpack.c.l.b16 %v324
      %v784 = vunpack.c.l.b16 %v325
      %v785 = vunpack.c.l.b16 %v326
      %v786 = vunpack.c.l.b16 %v327
      %v787 = vunpack.c.l.b16 %v328
      %v788 = vunpack.c.l.b16 %v329
      %v789 = vunpack.c.l.b16 %v330
      %v790 = vunpack.c.l.b16 %v331
      %v791 = vunpack.c.l.b16 %v332
      %v792 = vunpack.c.l.b16 %v333
      %v793 = vunpack.c.l.b16 %v334
      %v794 = vunpack.c.l.b16 %v335
      %v795 = vunpack.c.l.b16 %v336
      %v796 = vunpack.c.l.b16 %v337
      %v797 = vunpack.c.l.b16 %v338
      %v798 = vunpack.c.l.b16 %v339
      %v799 = vunpack.c.l.b16 %v340
      %v800 = vunpack.c.l.b16 %v341
      %v801 = vunpack.c.l.b16 %v342
      %v802 = vunpack.c.l.b16 %v343
      %v803 = vunpack.c.l.b16 %v344
      %v804 = vunpack.c.l.b16 %v345
      %v805 = vunpack.c.l.b16 %v346
      %v806 = vunpack.c.l.b16 %v347
      %v807 = vunpack.c.l.b16 %v348
      %v808 = vunpack.c.l.b16 %v349
      %v809 = vunpack.c.l.b16 %v350
      %v810 = vunpack.c.l.b16 %v351
      %v811 = vunpack.c.l.b16 %v352
      %v812 = vunpack.c.l.b16 %v353
      %v813 = vunpack.c.l.b16 %v354
      %v814 = vunpack.c.l.b16 %v355
      %v815 = vunpack.c.l.b16 %v356
      %v816 = vunpack.c.l.b16 %v357
      %v817 = vunpack.c.l.b16 %v358
      %v818 = vunpack.c.l.b16 %v359
      %v819 = vunpack.c.l.b16 %v360
      %v820 = vunpack.c.l.b16 %v361
      %v821 = vunpack.c.l.b16 %v362
      %v822 = vunpack.c.l.b16 %v363
      %v823 = vunpack.c.l.b16 %v364
      %v824 = vunpack.c.l.b16 %v365
      %v825 = vunpack.c.l.b16 %v366
      %v826 = vunpack.c.l.b16 %v367
      %v827 = vunpack.c.l.b16 %v368
      %v828 = vunpack.c.l.b16 %v369
      %v829 = vunpack.c.l.b16 %v370
      %v830 = vunpack.c.l.b16 %v371
      %v831 = vunpack.c.l.b16 %v372
      %v832 = vunpack.c.l.b16 %v373
      %v833 = vunpack.c.l.b16 %v374
      %v834 = vunpack.c.l.b16 %v375
      %v835 = vunpack.c.l.b16 %v376
      %v836 = vunpack.c.l.b16 %v377
      %v837 = vunpack.c.l.b16 %v378
      %v838 = vunpack.c.l.b16 %v379
      %v839 = vunpack.c.l.b16 %v380
      %v840 = vunpack.c.l.b16 %v381
      %v841 = vunpack.c.l.b16 %v382
      %v842 = vunpack.c.l.b16 %v383
      %v843 = vunpack.c.l.b16 %v384
      %v844 = vunpack.c.l.b16 %v385
      %v845 = vunpack.c.l.b16 %v386
      %v846 = vunpack.c.l.b16 %v387
      %v847 = vunpack.c.l.b16 %v388
      %v848 = vunpack.c.l.b16 %v389
      %v849 = vunpack.c.l.b16 %v390
      %v850 = vunpack.c.l.b16 %v391
      %v851 = vunpack.c.l.b16 %v392
      %v852 = vunpack.c.l.b16 %v393
      %v853 = vunpack.c.l.b16 %v394
      %v854 = vunpack.c.l.b16 %v395
      %v855 = vunpack.c.l.b16 %v396
      %v856 = vunpack.c.l.b16 %v397
      %v857 = vunpack.c.l.b16 %v398
      %v858 = vunpack.c.l.b16 %v399
      %v859 = vunpack.c.l.b16 %v400
      %v860 = vunpack.c.l.b16 %v401
      %v861 = vunpack.c.l.b16 %v402
      %v862 = vunpack.c.l.b16 %v403
      %v863 = vunpack.c.l.b16 %v404
      %v864 = vunpack.c.l.b16 %v405
      %v865 = vunpack.c.l.b16 %v406
      %v866 = vunpack.c.l.b16 %v407
      %v867 = vunpack.c.l.b16 %v408
      %v868 = vunpack.c.l.b16 %v409
      %v869 = vunpack.c.l.b16 %v410
      %v870 = vunpack.c.l.b16 %v411
      %v871 = vunpack.c.l.b16 %v412
      %v872 = vunpack.c.l.b16 %v413
      %v873 = vunpack.c.l.b16 %v414
      %v874 = vunpack.c.l.b16 %v415
      %v875 = vunpack.c.l.b16 %v416
      %v876 = vunpack.c.l.b16 %v417
      %v877 = vunpack.c.l.b16 %v418
      %v878 = vunpack.c.l.b16 %v419
      %v879 = vunpack.c.l.b16 %v420
      %v880 = vunpack.c.l.b16 %v421
      %v881 = vunpack.c.l.b16 %v422
      %v882 = vunpack.c.l.b16 %v423
      %v883 = vunpack.c.l.b16 %v424
      %v884 = vunpack.c.l.b16 %v425
      %v885 = vunpack.c.l.b16 %v426
      %v886 = vunpack.c.l.b16 %v427
      %v887 = vunpack.c.l.b16 %v428
      %v888 = vunpack.c.l.b16 %v429
      %v889 = vunpack.c.l.b16 %v430
      %v890 = vunpack.c.l.b16 %v431
      %v891 = vunpack.c.l.b16 %v432
      %v892 = vunpack.c.l.b16 %v433
      %v893 = vunpack.c.l.b16 %v434
      %v894 = vunpack.c.l.b16 %v435
      %v895 = vunpack.c.l.b16 %v436
      %v896 = vunpack.c.l.b16 %v437
      %v897 = vunpack.c.l.b16 %v438
      %v898 = vunpack.c.l.b16 %v439
      %v899 = vunpack.c.l.b16 %v440
      %v900 = vunpack.c.l.b16 %v441
      %v901 = vunpack.c.l.b16 %v442
      %v902 = vunpack.c.l.b16 %v443
      %v903 = vunpack.c.l.b16 %v444
      %v904 = vunpack.c.l.b16 %v445
      %v905 = vunpack.c.l.b16 %v446
      %v906 = vunpack.c.l.b16 %v447
      %v907 = vunpack.c.l.b16 %v448
      %v908 = vunpack.c.l.b16 %v449
      %v909 = vpack.c.b16 %v686, %v685
      %v910 = vpack.c.b16 %v688, %v687
      %v911 = vpack.c.b16 %v690, %v689
      %v912 = vpack.c.b16 %v692, %v691
      %v913 = vpack.c.b16 %v694, %v693
      %v914 = vpack.c.b16 %v696, %v695
      %v915 = vpack.c.b16 %v698, %v697
      %v916 = vpack.c.b16 %v700, %v699
      %v917 = vpack.c.b16 %v702, %v701
      %v918 = vpack.c.b16 %v704, %v703
      %v919 = vpack.c.b16 %v706, %v705
      %v920 = vpack.c.b16 %v708, %v707
      %v921 = vpack.c.b16 %v710, %v709
      %v922 = vpack.c.b16 %v712, %v711
      %v923 = vpack.c.b16 %v714, %v713
      %v924 = vpack.c.b16 %v716, %v715
      %v925 = vpack.c.b16 %v718, %v717
      %v926 = vpack.c.b16 %v720, %v719
      %v927 = vpack.c.b16 %v722, %v721
      %v928 = vpack.c.b16 %v724, %v723
      %v929 = vpack.c.b16 %v726, %v725
      %v930 = vpack.c.b16 %v728, %v727
      %v931 = vpack.c.b16 %v730, %v729
      %v932 = vpack.c.b16 %v732, %v731
      %v933 = vpack.c.b16 %v734, %v733
      %v934 = vpack.c.b16 %v736, %v735
      %v935 = vpack.c.b16 %v738, %v737
      %v936 = vpack.c.b16 %v740, %v739
      %v937 = vpack.c.b16 %v742, %v741
      %v938 = vpack.c.b16 %v744, %v743
      %v939 = vpack.c.b16 %v746, %v745
      %v940 = vpack.c.b16 %v748, %v747
      %v941 = vpack.c.b16 %v750, %v749
      %v942 = vpack.c.b16 %v752, %v751
      %v943 = vpack.c.b16 %v754, %v753
      %v944 = vpack.c.b16 %v756, %v755
      %v945 = vpack.c.b16 %v758, %v757
      %v946 = vpack.c.b16 %v760, %v759
      %v947 = vpack.c.b16 %v762, %v761
      %v948 = vpack.c.b16 %v764, %v763
      %v949 = vpack.c.b16 %v766, %v765
      %v950 = vpack.c.b16 %v768, %v767
      %v951 = vpack.c.b16 %v770, %v769
      %v952 = vpack.c.b16 %v772, %v771
      %v953 = vpack.c.b16 %v774, %v773
      %v954 = vpack.c.b16 %v776, %v775
      %v955 = vpack.c.b16 %v778, %v777
      %v956 = vpack.c.b16 %v780, %v779
      %v957 = vpack.c.b16 %v782, %v781
      %v958 = vpack.c.b16 %v784, %v783
      %v959 = vpack.c.b16 %v786, %v785
      %v960 = vpack.c.b16 %v788, %v787
      %v961 = vpack.c.b16 %v790, %v789
      %v962 = vpack.c.b16 %v792, %v791
      %v963 = vpack.c.b16 %v794, %v793
      %v964 = vpack.c.b16 %v796, %v795
      %v965 = vpack.c.b16 %v798, %v797
      %v966 = vpack.c.b16 %v800, %v799
      %v967 = vpack.c.b16 %v802, %v801
      %v968 = vpack.c.b16 %v804, %v803
      %v969 = vpack.c.b16 %v806, %v805
      %v970 = vpack.c.b16 %v808, %v807
      %v971 = vpack.c.b16 %v810, %v809
      %v972 = vpack.c.b16 %v812, %v811
      %v973 = vpack.c.b16 %v814, %v813
      %v974 = vpack.c.b16 %v816, %v815
      %v975 = vpack.c.b16 %v818, %v817
      %v976 = vpack.c.b16 %v820, %v819
      %v977 = vpack.c.b16 %v822, %v821
      %v978 = vpack.c.b16 %v824, %v823
      %v979 = vpack.c.b16 %v826, %v825
      %v980 = vpack.c.b16 %v828, %v827
      %v981 = vpack.c.b16 %v830, %v829
      %v982 = vpack.c.b16 %v832, %v831
      %v983 = vpack.c.b16 %v834, %v833
      %v984 = vpack.c.b16 %v836, %v835
      %v985 = vpack.c.b16 %v838, %v837
      %v986 = vpack.c.b16 %v840, %v839
      %v987 = vpack.c.b16 %v842, %v841
      %v988 = vpack.c.b16 %v844, %v843
      %v989 = vpack.c.b16 %v846, %v845
      %v990 = vpack.c.b16 %v848, %v847
      %v991 = vpack.c.b16 %v850, %v849
      %v992 = vpack.c.b16 %v852, %v851
      %v993 = vpack.c.b16 %v854, %v853
      %v994 = vpack.c.b16 %v856, %v855
      %v995 = vpack.c.b16 %v858, %v857
      %v996 = vpack.c.b16 %v860, %v859
      %v997 = vpack.c.b16 %v862, %v861
      %v998 = vpack.c.b16 %v864, %v863
      %v999 = vpack.c.b16 %v866, %v865
      %v1000 = vpack.c.b16 %v868, %v867
      %v1001 = vpack.c.b16 %v870, %v869
      %v1002 = vpack.c.b16 %v872, %v871
      %v1003 = vpack.c.b16 %v874, %v873
      %v1004 = vpack.c.b16 %v876, %v875
      %v1005 = vpack.c.b16 %v878, %v877
      %v1006 = vpack.c.b16 %v880, %v879
      %v1007 = vpack.c.b16 %v882, %v881
      %v1008 = vpack.c.b16 %v884, %v883
      %v1009 = vpack.c.b16 %v886, %v885
      %v1010 = vpack.c.b16 %v888, %v887
      %v1011 = vpack.c.b16 %v890, %v889
      %v1012 = vpack.c.b16 %v892, %v891
      %v1013 = vpack.c.b16 %v894, %v893
      %v1014 = vpack.c.b16 %v896, %v895
      %v1015 = vpack.c.b16 %v898, %v897
      %v1016 = vpack.c.b16 %v900, %v899
      %v1017 = vpack.c.b16 %v902, %v901
      %v1018 = vpack.c.b16 %v904, %v903
      %v1019 = vpack.c.b16 %v906, %v905
      %v1020 = vpack.c.b16 %v908, %v907
      %v1025 = vunpack.c.l.b16 %v450
      %v1026 = vunpack.c.l.b16 %v451
      %v1027 = vunpack.c.l.b16 %v452
      %v1028 = vunpack.c.l.b16 %v453
      %v1029 = vpack.c.b16 %v1026, %v1025
      %v1030 = vpack.c.b16 %v1028, %v1027
      %vm1033 = vcmask 261120
      %v1035 = vsel %vm1033, %v909, 0
      %v1038 = vsel %vm1033, %v910, 0
      %v1041 = vsel %vm1033, %v911, 0
      %v1044 = vsel %vm1033, %v912, 0
      %v1047 = vsel %vm1033, %v913, 0
      %v1050 = vsel %vm1033, %v914, 0
      %v1053 = vsel %vm1033, %v915, 0
      %v1056 = vsel %vm1033, %v916, 0
      %v1059 = vsel %vm1033, %v917, 0
      %v1062 = vsel %vm1033, %v918, 0
      %v1065 = vsel %vm1033, %v919, 0
      %v1068 = vsel %vm1033, %v920, 0
      %v1071 = vsel %vm1033, %v921, 0
      %v1074 = vsel %vm1033, %v922, 0
      %v1077 = vsel %vm1033, %v923, 0
      %v1080 = vsel %vm1033, %v924, 0
      %v1083 = vsel %vm1033, %v925, 0
      %v1086 = vsel %vm1033, %v926, 0
      %v1089 = vsel %vm1033, %v927, 0
      %v1092 = vsel %vm1033, %v928, 0
      %v1095 = vsel %vm1033, %v929, 0
      %v1098 = vsel %vm1033, %v930, 0
      %v1101 = vsel %vm1033, %v931, 0
      %v1104 = vsel %vm1033, %v932, 0
      %v1107 = vsel %vm1033, %v933, 0
      %v1110 = vsel %vm1033, %v934, 0
      %v1113 = vsel %vm1033, %v935, 0
      %v1116 = vsel %vm1033, %v936, 0
      %v1119 = vsel %vm1033, %v937, 0
      %v1122 = vsel %vm1033, %v938, 0
      %v1125 = vsel %vm1033, %v939, 0
      %v1128 = vsel %vm1033, %v940, 0
      %v1131 = vsel %vm1033, %v941, 0
      %v1134 = vsel %vm1033, %v942, 0
      %v1137 = vsel %vm1033, %v943, 0
      %v1140 = vsel %vm1033, %v944, 0
      %v1143 = vsel %vm1033, %v945, 0
      %v1146 = vsel %vm1033, %v946, 0
      %v1149 = vsel %vm1033, %v947, 0
      %v1152 = vsel %vm1033, %v948, 0
      %v1155 = vsel %vm1033, %v949, 0
      %v1158 = vsel %vm1033, %v950, 0
      %v1161 = vsel %vm1033, %v951, 0
      %v1164 = vsel %vm1033, %v952, 0
      %v1167 = vsel %vm1033, %v953, 0
      %v1170 = vsel %vm1033, %v954, 0
      %v1173 = vsel %vm1033, %v955, 0
      %v1176 = vsel %vm1033, %v956, 0
      %v1179 = vsel %vm1033, %v957, 0
      %v1182 = vsel %vm1033, %v958, 0
      %v1185 = vsel %vm1033, %v959, 0
      %v1188 = vsel %vm1033, %v960, 0
      %v1191 = vsel %vm1033, %v961, 0
      %v1194 = vsel %vm1033, %v962, 0
      %v1197 = vsel %vm1033, %v963, 0
      %v1200 = vsel %vm1033, %v964, 0
      %v1203 = vsel %vm1033, %v965, 0
      %v1206 = vsel %vm1033, %v966, 0
      %v1209 = vsel %vm1033, %v967, 0
      %v1212 = vsel %vm1033, %v968, 0
      %v1215 = vsel %vm1033, %v969, 0
      %v1218 = vsel %vm1033, %v970, 0
      %v1221 = vsel %vm1033, %v971, 0
      %v1224 = vsel %vm1033, %v972, 0
      %v1227 = vsel %vm1033, %v973, 0
      %v1230 = vsel %vm1033, %v974, 0
      %v1233 = vsel %vm1033, %v975, 0
      %v1236 = vsel %vm1033, %v976, 0
      %v1239 = vsel %vm1033, %v977, 0
      %v1242 = vsel %vm1033, %v978, 0
      %v1245 = vsel %vm1033, %v979, 0
      %v1248 = vsel %vm1033, %v980, 0
      %v1251 = vsel %vm1033, %v981, 0
      %v1254 = vsel %vm1033, %v982, 0
      %v1257 = vsel %vm1033, %v983, 0
      %v1260 = vsel %vm1033, %v984, 0
      %v1263 = vsel %vm1033, %v985, 0
      %v1266 = vsel %vm1033, %v986, 0
      %v1269 = vsel %vm1033, %v987, 0
      %v1272 = vsel %vm1033, %v988, 0
      %v1275 = vsel %vm1033, %v989, 0
      %v1278 = vsel %vm1033, %v990, 0
      %v1281 = vsel %vm1033, %v991, 0
      %v1284 = vsel %vm1033, %v992, 0
      %v1287 = vsel %vm1033, %v993, 0
      %v1290 = vsel %vm1033, %v994, 0
      %v1293 = vsel %vm1033, %v995, 0
      %v1296 = vsel %vm1033, %v996, 0
      %v1299 = vsel %vm1033, %v997, 0
      %v1302 = vsel %vm1033, %v998, 0
      %v1305 = vsel %vm1033, %v999, 0
      %v1308 = vsel %vm1033, %v1000, 0
      %v1311 = vsel %vm1033, %v1001, 0
      %v1314 = vsel %vm1033, %v1002, 0
      %v1317 = vsel %vm1033, %v1003, 0
      %v1320 = vsel %vm1033, %v1004, 0
      %v1323 = vsel %vm1033, %v1005, 0
      %v1326 = vsel %vm1033, %v1006, 0
      %v1329 = vsel %vm1033, %v1007, 0
      %v1332 = vsel %vm1033, %v1008, 0
      %v1335 = vsel %vm1033, %v1009, 0
      %v1338 = vsel %vm1033, %v1010, 0
      %v1341 = vsel %vm1033, %v1011, 0
      %v1344 = vsel %vm1033, %v1012, 0
      %v1347 = vsel %vm1033, %v1013, 0
      %v1350 = vsel %vm1033, %v1014, 0
      %v1353 = vsel %vm1033, %v1015, 0
      %v1356 = vsel %vm1033, %v1016, 0
      %v1359 = vsel %vm1033, %v1017, 0
      %v1362 = vsel %vm1033, %v1018, 0
      %v1365 = vsel %vm1033, %v1019, 0
      %v1368 = vsel %vm1033, %v1020, 0
      %1370 = vmatprep.subr.bf16.mxu0 0
      %1371 = vmatpush1.bf16.msra.mxu0 0
      %1372 = vmatprep.subr.bf16.mxu0 0
      %1373 = vmatpush1.bf16.msra.mxu0 0
      %1374 = vmatprep.subr.bf16.mxu0 0
      %1375 = vmatpush1.bf16.msra.mxu0 0
      %1376 = vmatprep.subr.bf16.mxu0 0
      %1377 = vmatpush1.bf16.msra.mxu0 0
      %1378 = vmatprep.subr.bf16.mxu0 0
      %1379 = vmatpush1.bf16.msra.mxu0 0
      %1380 = vmatprep.subr.bf16.mxu0 0
      %1381 = vmatpush1.bf16.msra.mxu0 0
      %1382 = vmatprep.subr.bf16.mxu0 0
      %1383 = vmatpush1.bf16.msra.mxu0 %v1030
      %1384 = vmatprep.subr.bf16.mxu0 0
      %1385 = vmatpush1.bf16.msra.mxu0 %v1029
      %1386 = vmatprep.subr.bf16.mxu0 0
      %1387 = vmatpush2.bf16.msra.mxu0 0
      %1388 = vmatprep.subr.bf16.mxu0 0
      %1389 = vmatpush2.bf16.msra.mxu0 0
      %1390 = vmatprep.subr.bf16.mxu0 0
      %1391 = vmatpush2.bf16.msra.mxu0 0
      %1392 = vmatprep.subr.bf16.mxu0 0
      %1393 = vmatpush2.bf16.msra.mxu0 0
      %1394 = vmatprep.subr.bf16.mxu0 0
      %1395 = vmatpush2.bf16.msra.mxu0 0
      %1396 = vmatprep.subr.bf16.mxu0 0
      %1397 = vmatpush2.bf16.msra.mxu0 0
      %1398 = vmatprep.subr.bf16.mxu0 0
      %1399 = vmatpush2.bf16.msra.mxu0 0
      %1400 = vmatprep.subr.bf16.mxu0 0
      %1401 = vmatpush2.bf16.msra.mxu0 0
      %1402 = vmatprep.mubr.bf16.mxu0 0
      %1403 = vmatmul.mubr.bf16.gmra.mxu0 %v1035
      %v1404 = vpop.f32.mrf.mxu0
      %v1405 = vadd.f32 %v459, %v1404
      %v1406 = vpop.f32.mrf.mxu0
      %v1407 = vpop.f32.mrf.mxu0
      %v1408 = vadd.f32 %v459, %v1407
      %v1409 = vpop.f32.mrf.mxu0
      %1410 = vmatprep.mubr.bf16.mxu0 0
      %1411 = vmatmul.mubr.bf16.gmra.mxu0 %v1038
      %v1412 = vpop.f32.mrf.mxu0
      %v1413 = vadd.f32 %v459, %v1412
      %v1414 = vpop.f32.mrf.mxu0
      %v1415 = vpop.f32.mrf.mxu0
      %v1416 = vadd.f32 %v459, %v1415
      %v1417 = vpop.f32.mrf.mxu0
      %1418 = vmatprep.mubr.bf16.mxu0 0
      %1419 = vmatmul.mubr.bf16.gmra.mxu0 %v1041
      %v1420 = vpop.f32.mrf.mxu0
      %v1421 = vadd.f32 %v459, %v1420
      %v1422 = vpop.f32.mrf.mxu0
      %v1423 = vpop.f32.mrf.mxu0
      %v1424 = vadd.f32 %v459, %v1423
      %v1425 = vpop.f32.mrf.mxu0
      %1426 = vmatprep.mubr.bf16.mxu0 0
      %1427 = vmatmul.mubr.bf16.gmra.mxu0 %v1044
      %v1428 = vpop.f32.mrf.mxu0
      %v1429 = vadd.f32 %v459, %v1428
      %v1430 = vpop.f32.mrf.mxu0
      %v1431 = vpop.f32.mrf.mxu0
      %v1432 = vadd.f32 %v459, %v1431
      %v1433 = vpop.f32.mrf.mxu0
      %1434 = vmatprep.mubr.bf16.mxu0 0
      %1435 = vmatmul.mubr.bf16.gmra.mxu0 %v1047
      %v1436 = vpop.f32.mrf.mxu0
      %v1437 = vadd.f32 %v459, %v1436
      %v1438 = vpop.f32.mrf.mxu0
      %v1439 = vpop.f32.mrf.mxu0
      %v1440 = vadd.f32 %v459, %v1439
      %v1441 = vpop.f32.mrf.mxu0
      %1442 = vmatprep.mubr.bf16.mxu0 0
      %1443 = vmatmul.mubr.bf16.gmra.mxu0 %v1050
      %v1444 = vpop.f32.mrf.mxu0
      %v1445 = vadd.f32 %v459, %v1444
      %v1446 = vpop.f32.mrf.mxu0
      %v1447 = vpop.f32.mrf.mxu0
      %v1448 = vadd.f32 %v459, %v1447
      %v1449 = vpop.f32.mrf.mxu0
      %1450 = vmatprep.mubr.bf16.mxu0 0
      %1451 = vmatmul.mubr.bf16.gmra.mxu0 %v1053
      %v1452 = vpop.f32.mrf.mxu0
      %v1453 = vadd.f32 %v459, %v1452
      %v1454 = vpop.f32.mrf.mxu0
      %v1455 = vpop.f32.mrf.mxu0
      %v1456 = vadd.f32 %v459, %v1455
      %v1457 = vpop.f32.mrf.mxu0
      %1458 = vmatprep.mubr.bf16.mxu0 0
      %1459 = vmatmul.mubr.bf16.gmra.mxu0 %v1056
      %v1460 = vpop.f32.mrf.mxu0
      %v1461 = vadd.f32 %v459, %v1460
      %v1462 = vpop.f32.mrf.mxu0
      %v1463 = vpop.f32.mrf.mxu0
      %v1464 = vadd.f32 %v459, %v1463
      %v1465 = vpop.f32.mrf.mxu0
      %1466 = vmatprep.mubr.bf16.mxu0 0
      %1467 = vmatmul.mubr.bf16.gmra.mxu0 %v1059
      %v1468 = vpop.f32.mrf.mxu0
      %v1469 = vadd.f32 %v459, %v1468
      %v1470 = vpop.f32.mrf.mxu0
      %v1471 = vpop.f32.mrf.mxu0
      %v1472 = vadd.f32 %v459, %v1471
      %v1473 = vpop.f32.mrf.mxu0
      %1474 = vmatprep.mubr.bf16.mxu0 0
      %1475 = vmatmul.mubr.bf16.gmra.mxu0 %v1062
      %v1476 = vpop.f32.mrf.mxu0
      %v1477 = vadd.f32 %v459, %v1476
      %v1478 = vpop.f32.mrf.mxu0
      %v1479 = vpop.f32.mrf.mxu0
      %v1480 = vadd.f32 %v459, %v1479
      %v1481 = vpop.f32.mrf.mxu0
      %1482 = vmatprep.mubr.bf16.mxu0 0
      %1483 = vmatmul.mubr.bf16.gmra.mxu0 %v1065
      %v1484 = vpop.f32.mrf.mxu0
      %v1485 = vadd.f32 %v459, %v1484
      %v1486 = vpop.f32.mrf.mxu0
      %v1487 = vpop.f32.mrf.mxu0
      %v1488 = vadd.f32 %v459, %v1487
      %v1489 = vpop.f32.mrf.mxu0
      %1490 = vmatprep.mubr.bf16.mxu0 0
      %1491 = vmatmul.mubr.bf16.gmra.mxu0 %v1068
      %v1492 = vpop.f32.mrf.mxu0
      %v1493 = vadd.f32 %v459, %v1492
      %v1494 = vpop.f32.mrf.mxu0
      %v1495 = vpop.f32.mrf.mxu0
      %v1496 = vadd.f32 %v459, %v1495
      %v1497 = vpop.f32.mrf.mxu0
      %1498 = vmatprep.mubr.bf16.mxu0 0
      %1499 = vmatmul.mubr.bf16.gmra.mxu0 %v1071
      %v1500 = vpop.f32.mrf.mxu0
      %v1501 = vadd.f32 %v459, %v1500
      %v1502 = vpop.f32.mrf.mxu0
      %v1503 = vpop.f32.mrf.mxu0
      %v1504 = vadd.f32 %v459, %v1503
      %v1505 = vpop.f32.mrf.mxu0
      %1506 = vmatprep.mubr.bf16.mxu0 0
      %1507 = vmatmul.mubr.bf16.gmra.mxu0 %v1074
      %v1508 = vpop.f32.mrf.mxu0
      %v1509 = vadd.f32 %v459, %v1508
      %v1510 = vpop.f32.mrf.mxu0
      %v1511 = vpop.f32.mrf.mxu0
      %v1512 = vadd.f32 %v459, %v1511
      %v1513 = vpop.f32.mrf.mxu0
      %1514 = vmatprep.mubr.bf16.mxu0 0
      %1515 = vmatmul.mubr.bf16.gmra.mxu0 %v1077
      %v1516 = vpop.f32.mrf.mxu0
      %v1517 = vadd.f32 %v459, %v1516
      %v1518 = vpop.f32.mrf.mxu0
      %v1519 = vpop.f32.mrf.mxu0
      %v1520 = vadd.f32 %v459, %v1519
      %v1521 = vpop.f32.mrf.mxu0
      %1522 = vmatprep.mubr.bf16.mxu0 0
      %1523 = vmatmul.mubr.bf16.gmra.mxu0 %v1080
      %v1524 = vpop.f32.mrf.mxu0
      %v1525 = vadd.f32 %v459, %v1524
      %v1526 = vpop.f32.mrf.mxu0
      %v1527 = vpop.f32.mrf.mxu0
      %v1528 = vadd.f32 %v459, %v1527
      %v1529 = vpop.f32.mrf.mxu0
      %1530 = vmatprep.mubr.bf16.mxu0 0
      %1531 = vmatmul.mubr.bf16.gmra.mxu0 %v1083
      %v1532 = vpop.f32.mrf.mxu0
      %v1533 = vadd.f32 %v459, %v1532
      %v1534 = vpop.f32.mrf.mxu0
      %v1535 = vpop.f32.mrf.mxu0
      %v1536 = vadd.f32 %v459, %v1535
      %v1537 = vpop.f32.mrf.mxu0
      %1538 = vmatprep.mubr.bf16.mxu0 0
      %1539 = vmatmul.mubr.bf16.gmra.mxu0 %v1086
      %v1540 = vpop.f32.mrf.mxu0
      %v1541 = vadd.f32 %v459, %v1540
      %v1542 = vpop.f32.mrf.mxu0
      %v1543 = vpop.f32.mrf.mxu0
      %v1544 = vadd.f32 %v459, %v1543
      %v1545 = vpop.f32.mrf.mxu0
      %1546 = vmatprep.mubr.bf16.mxu0 0
      %1547 = vmatmul.mubr.bf16.gmra.mxu0 %v1089
      %v1548 = vpop.f32.mrf.mxu0
      %v1549 = vadd.f32 %v459, %v1548
      %v1550 = vpop.f32.mrf.mxu0
      %v1551 = vpop.f32.mrf.mxu0
      %v1552 = vadd.f32 %v459, %v1551
      %v1553 = vpop.f32.mrf.mxu0
      %1554 = vmatprep.mubr.bf16.mxu0 0
      %1555 = vmatmul.mubr.bf16.gmra.mxu0 %v1092
      %v1556 = vpop.f32.mrf.mxu0
      %v1557 = vadd.f32 %v459, %v1556
      %v1558 = vpop.f32.mrf.mxu0
      %v1559 = vpop.f32.mrf.mxu0
      %v1560 = vadd.f32 %v459, %v1559
      %v1561 = vpop.f32.mrf.mxu0
      %1562 = vmatprep.mubr.bf16.mxu0 0
      %1563 = vmatmul.mubr.bf16.gmra.mxu0 %v1095
      %v1564 = vpop.f32.mrf.mxu0
      %v1565 = vadd.f32 %v459, %v1564
      %v1566 = vpop.f32.mrf.mxu0
      %v1567 = vpop.f32.mrf.mxu0
      %v1568 = vadd.f32 %v459, %v1567
      %v1569 = vpop.f32.mrf.mxu0
      %1570 = vmatprep.mubr.bf16.mxu0 0
      %1571 = vmatmul.mubr.bf16.gmra.mxu0 %v1098
      %v1572 = vpop.f32.mrf.mxu0
      %v1573 = vadd.f32 %v459, %v1572
      %v1574 = vpop.f32.mrf.mxu0
      %v1575 = vpop.f32.mrf.mxu0
      %v1576 = vadd.f32 %v459, %v1575
      %v1577 = vpop.f32.mrf.mxu0
      %1578 = vmatprep.mubr.bf16.mxu0 0
      %1579 = vmatmul.mubr.bf16.gmra.mxu0 %v1101
      %v1580 = vpop.f32.mrf.mxu0
      %v1581 = vadd.f32 %v459, %v1580
      %v1582 = vpop.f32.mrf.mxu0
      %v1583 = vpop.f32.mrf.mxu0
      %v1584 = vadd.f32 %v459, %v1583
      %v1585 = vpop.f32.mrf.mxu0
      %1586 = vmatprep.mubr.bf16.mxu0 0
      %1587 = vmatmul.mubr.bf16.gmra.mxu0 %v1104
      %v1588 = vpop.f32.mrf.mxu0
      %v1589 = vadd.f32 %v459, %v1588
      %v1590 = vpop.f32.mrf.mxu0
      %v1591 = vpop.f32.mrf.mxu0
      %v1592 = vadd.f32 %v459, %v1591
      %v1593 = vpop.f32.mrf.mxu0
      %1594 = vmatprep.mubr.bf16.mxu0 0
      %1595 = vmatmul.mubr.bf16.gmra.mxu0 %v1107
      %v1596 = vpop.f32.mrf.mxu0
      %v1597 = vadd.f32 %v459, %v1596
      %v1598 = vpop.f32.mrf.mxu0
      %v1599 = vpop.f32.mrf.mxu0
      %v1600 = vadd.f32 %v459, %v1599
      %v1601 = vpop.f32.mrf.mxu0
      %1602 = vmatprep.mubr.bf16.mxu0 0
      %1603 = vmatmul.mubr.bf16.gmra.mxu0 %v1110
      %v1604 = vpop.f32.mrf.mxu0
      %v1605 = vadd.f32 %v459, %v1604
      %v1606 = vpop.f32.mrf.mxu0
      %v1607 = vpop.f32.mrf.mxu0
      %v1608 = vadd.f32 %v459, %v1607
      %v1609 = vpop.f32.mrf.mxu0
      %1610 = vmatprep.mubr.bf16.mxu0 0
      %1611 = vmatmul.mubr.bf16.gmra.mxu0 %v1113
      %v1612 = vpop.f32.mrf.mxu0
      %v1613 = vadd.f32 %v459, %v1612
      %v1614 = vpop.f32.mrf.mxu0
      %v1615 = vpop.f32.mrf.mxu0
      %v1616 = vadd.f32 %v459, %v1615
      %v1617 = vpop.f32.mrf.mxu0
      %1618 = vmatprep.mubr.bf16.mxu0 0
      %1619 = vmatmul.mubr.bf16.gmra.mxu0 %v1116
      %v1620 = vpop.f32.mrf.mxu0
      %v1621 = vadd.f32 %v459, %v1620
      %v1622 = vpop.f32.mrf.mxu0
      %v1623 = vpop.f32.mrf.mxu0
      %v1624 = vadd.f32 %v459, %v1623
      %v1625 = vpop.f32.mrf.mxu0
      %1626 = vmatprep.mubr.bf16.mxu0 0
      %1627 = vmatmul.mubr.bf16.gmra.mxu0 %v1119
      %v1628 = vpop.f32.mrf.mxu0
      %v1629 = vadd.f32 %v459, %v1628
      %v1630 = vpop.f32.mrf.mxu0
      %v1631 = vpop.f32.mrf.mxu0
      %v1632 = vadd.f32 %v459, %v1631
      %v1633 = vpop.f32.mrf.mxu0
      %1634 = vmatprep.mubr.bf16.mxu0 0
      %1635 = vmatmul.mubr.bf16.gmra.mxu0 %v1122
      %v1636 = vpop.f32.mrf.mxu0
      %v1637 = vadd.f32 %v459, %v1636
      %v1638 = vpop.f32.mrf.mxu0
      %v1639 = vpop.f32.mrf.mxu0
      %v1640 = vadd.f32 %v459, %v1639
      %v1641 = vpop.f32.mrf.mxu0
      %1642 = vmatprep.mubr.bf16.mxu0 0
      %1643 = vmatmul.mubr.bf16.gmra.mxu0 %v1125
      %v1644 = vpop.f32.mrf.mxu0
      %v1645 = vadd.f32 %v459, %v1644
      %v1646 = vpop.f32.mrf.mxu0
      %v1647 = vpop.f32.mrf.mxu0
      %v1648 = vadd.f32 %v459, %v1647
      %v1649 = vpop.f32.mrf.mxu0
      %1650 = vmatprep.mubr.bf16.mxu0 0
      %1651 = vmatmul.mubr.bf16.gmra.mxu0 %v1128
      %v1652 = vpop.f32.mrf.mxu0
      %v1653 = vadd.f32 %v459, %v1652
      %v1654 = vpop.f32.mrf.mxu0
      %v1655 = vpop.f32.mrf.mxu0
      %v1656 = vadd.f32 %v459, %v1655
      %v1657 = vpop.f32.mrf.mxu0
      %1658 = vmatprep.mubr.bf16.mxu0 0
      %1659 = vmatmul.mubr.bf16.gmra.mxu0 %v1131
      %v1660 = vpop.f32.mrf.mxu0
      %v1661 = vadd.f32 %v459, %v1660
      %v1662 = vpop.f32.mrf.mxu0
      %v1663 = vpop.f32.mrf.mxu0
      %v1664 = vadd.f32 %v459, %v1663
      %v1665 = vpop.f32.mrf.mxu0
      %1666 = vmatprep.mubr.bf16.mxu0 0
      %1667 = vmatmul.mubr.bf16.gmra.mxu0 %v1134
      %v1668 = vpop.f32.mrf.mxu0
      %v1669 = vadd.f32 %v459, %v1668
      %v1670 = vpop.f32.mrf.mxu0
      %v1671 = vpop.f32.mrf.mxu0
      %v1672 = vadd.f32 %v459, %v1671
      %v1673 = vpop.f32.mrf.mxu0
      %1674 = vmatprep.mubr.bf16.mxu0 0
      %1675 = vmatmul.mubr.bf16.gmra.mxu0 %v1137
      %v1676 = vpop.f32.mrf.mxu0
      %v1677 = vadd.f32 %v459, %v1676
      %v1678 = vpop.f32.mrf.mxu0
      %v1679 = vpop.f32.mrf.mxu0
      %v1680 = vadd.f32 %v459, %v1679
      %v1681 = vpop.f32.mrf.mxu0
      %1682 = vmatprep.mubr.bf16.mxu0 0
      %1683 = vmatmul.mubr.bf16.gmra.mxu0 %v1140
      %v1684 = vpop.f32.mrf.mxu0
      %v1685 = vadd.f32 %v459, %v1684
      %v1686 = vpop.f32.mrf.mxu0
      %v1687 = vpop.f32.mrf.mxu0
      %v1688 = vadd.f32 %v459, %v1687
      %v1689 = vpop.f32.mrf.mxu0
      %1690 = vmatprep.mubr.bf16.mxu0 0
      %1691 = vmatmul.mubr.bf16.gmra.mxu0 %v1143
      %v1692 = vpop.f32.mrf.mxu0
      %v1693 = vadd.f32 %v459, %v1692
      %v1694 = vpop.f32.mrf.mxu0
      %v1695 = vpop.f32.mrf.mxu0
      %v1696 = vadd.f32 %v459, %v1695
      %v1697 = vpop.f32.mrf.mxu0
      %1698 = vmatprep.mubr.bf16.mxu0 0
      %1699 = vmatmul.mubr.bf16.gmra.mxu0 %v1146
      %v1700 = vpop.f32.mrf.mxu0
      %v1701 = vadd.f32 %v459, %v1700
      %v1702 = vpop.f32.mrf.mxu0
      %v1703 = vpop.f32.mrf.mxu0
      %v1704 = vadd.f32 %v459, %v1703
      %v1705 = vpop.f32.mrf.mxu0
      %1706 = vmatprep.mubr.bf16.mxu0 0
      %1707 = vmatmul.mubr.bf16.gmra.mxu0 %v1149
      %v1708 = vpop.f32.mrf.mxu0
      %v1709 = vadd.f32 %v459, %v1708
      %v1710 = vpop.f32.mrf.mxu0
      %v1711 = vpop.f32.mrf.mxu0
      %v1712 = vadd.f32 %v459, %v1711
      %v1713 = vpop.f32.mrf.mxu0
      %1714 = vmatprep.mubr.bf16.mxu0 0
      %1715 = vmatmul.mubr.bf16.gmra.mxu0 %v1152
      %v1716 = vpop.f32.mrf.mxu0
      %v1717 = vadd.f32 %v459, %v1716
      %v1718 = vpop.f32.mrf.mxu0
      %v1719 = vpop.f32.mrf.mxu0
      %v1720 = vadd.f32 %v459, %v1719
      %v1721 = vpop.f32.mrf.mxu0
      %1722 = vmatprep.mubr.bf16.mxu0 0
      %1723 = vmatmul.mubr.bf16.gmra.mxu0 %v1155
      %v1724 = vpop.f32.mrf.mxu0
      %v1725 = vadd.f32 %v459, %v1724
      %v1726 = vpop.f32.mrf.mxu0
      %v1727 = vpop.f32.mrf.mxu0
      %v1728 = vadd.f32 %v459, %v1727
      %v1729 = vpop.f32.mrf.mxu0
      %1730 = vmatprep.mubr.bf16.mxu0 0
      %1731 = vmatmul.mubr.bf16.gmra.mxu0 %v1158
      %v1732 = vpop.f32.mrf.mxu0
      %v1733 = vadd.f32 %v459, %v1732
      %v1734 = vpop.f32.mrf.mxu0
      %v1735 = vpop.f32.mrf.mxu0
      %v1736 = vadd.f32 %v459, %v1735
      %v1737 = vpop.f32.mrf.mxu0
      %1738 = vmatprep.mubr.bf16.mxu0 0
      %1739 = vmatmul.mubr.bf16.gmra.mxu0 %v1161
      %v1740 = vpop.f32.mrf.mxu0
      %v1741 = vadd.f32 %v459, %v1740
      %v1742 = vpop.f32.mrf.mxu0
      %v1743 = vpop.f32.mrf.mxu0
      %v1744 = vadd.f32 %v459, %v1743
      %v1745 = vpop.f32.mrf.mxu0
      %1746 = vmatprep.mubr.bf16.mxu0 0
      %1747 = vmatmul.mubr.bf16.gmra.mxu0 %v1164
      %v1748 = vpop.f32.mrf.mxu0
      %v1749 = vadd.f32 %v459, %v1748
      %v1750 = vpop.f32.mrf.mxu0
      %v1751 = vpop.f32.mrf.mxu0
      %v1752 = vadd.f32 %v459, %v1751
      %v1753 = vpop.f32.mrf.mxu0
      %1754 = vmatprep.mubr.bf16.mxu0 0
      %1755 = vmatmul.mubr.bf16.gmra.mxu0 %v1167
      %v1756 = vpop.f32.mrf.mxu0
      %v1757 = vadd.f32 %v459, %v1756
      %v1758 = vpop.f32.mrf.mxu0
      %v1759 = vpop.f32.mrf.mxu0
      %v1760 = vadd.f32 %v459, %v1759
      %v1761 = vpop.f32.mrf.mxu0
      %1762 = vmatprep.mubr.bf16.mxu0 0
      %1763 = vmatmul.mubr.bf16.gmra.mxu0 %v1170
      %v1764 = vpop.f32.mrf.mxu0
      %v1765 = vadd.f32 %v459, %v1764
      %v1766 = vpop.f32.mrf.mxu0
      %v1767 = vpop.f32.mrf.mxu0
      %v1768 = vadd.f32 %v459, %v1767
      %v1769 = vpop.f32.mrf.mxu0
      %1770 = vmatprep.mubr.bf16.mxu0 0
      %1771 = vmatmul.mubr.bf16.gmra.mxu0 %v1173
      %v1772 = vpop.f32.mrf.mxu0
      %v1773 = vadd.f32 %v459, %v1772
      %v1774 = vpop.f32.mrf.mxu0
      %v1775 = vpop.f32.mrf.mxu0
      %v1776 = vadd.f32 %v459, %v1775
      %v1777 = vpop.f32.mrf.mxu0
      %1778 = vmatprep.mubr.bf16.mxu0 0
      %1779 = vmatmul.mubr.bf16.gmra.mxu0 %v1176
      %v1780 = vpop.f32.mrf.mxu0
      %v1781 = vadd.f32 %v459, %v1780
      %v1782 = vpop.f32.mrf.mxu0
      %v1783 = vpop.f32.mrf.mxu0
      %v1784 = vadd.f32 %v459, %v1783
      %v1785 = vpop.f32.mrf.mxu0
      %1786 = vmatprep.mubr.bf16.mxu0 0
      %1787 = vmatmul.mubr.bf16.gmra.mxu0 %v1179
      %v1788 = vpop.f32.mrf.mxu0
      %v1789 = vadd.f32 %v459, %v1788
      %v1790 = vpop.f32.mrf.mxu0
      %v1791 = vpop.f32.mrf.mxu0
      %v1792 = vadd.f32 %v459, %v1791
      %v1793 = vpop.f32.mrf.mxu0
      %1794 = vmatprep.mubr.bf16.mxu0 0
      %1795 = vmatmul.mubr.bf16.gmra.mxu0 %v1182
      %v1796 = vpop.f32.mrf.mxu0
      %v1797 = vadd.f32 %v459, %v1796
      %v1798 = vpop.f32.mrf.mxu0
      %v1799 = vpop.f32.mrf.mxu0
      %v1800 = vadd.f32 %v459, %v1799
      %v1801 = vpop.f32.mrf.mxu0
      %1802 = vmatprep.mubr.bf16.mxu0 0
      %1803 = vmatmul.mubr.bf16.gmra.mxu0 %v1185
      %v1804 = vpop.f32.mrf.mxu0
      %v1805 = vadd.f32 %v459, %v1804
      %v1806 = vpop.f32.mrf.mxu0
      %v1807 = vpop.f32.mrf.mxu0
      %v1808 = vadd.f32 %v459, %v1807
      %v1809 = vpop.f32.mrf.mxu0
      %1810 = vmatprep.mubr.bf16.mxu0 0
      %1811 = vmatmul.mubr.bf16.gmra.mxu0 %v1188
      %v1812 = vpop.f32.mrf.mxu0
      %v1813 = vadd.f32 %v459, %v1812
      %v1814 = vpop.f32.mrf.mxu0
      %v1815 = vpop.f32.mrf.mxu0
      %v1816 = vadd.f32 %v459, %v1815
      %v1817 = vpop.f32.mrf.mxu0
      %1818 = vmatprep.mubr.bf16.mxu0 0
      %1819 = vmatmul.mubr.bf16.gmra.mxu0 %v1191
      %v1820 = vpop.f32.mrf.mxu0
      %v1821 = vadd.f32 %v459, %v1820
      %v1822 = vpop.f32.mrf.mxu0
      %v1823 = vpop.f32.mrf.mxu0
      %v1824 = vadd.f32 %v459, %v1823
      %v1825 = vpop.f32.mrf.mxu0
      %1826 = vmatprep.mubr.bf16.mxu0 0
      %1827 = vmatmul.mubr.bf16.gmra.mxu0 %v1194
      %v1828 = vpop.f32.mrf.mxu0
      %v1829 = vadd.f32 %v459, %v1828
      %v1830 = vpop.f32.mrf.mxu0
      %v1831 = vpop.f32.mrf.mxu0
      %v1832 = vadd.f32 %v459, %v1831
      %v1833 = vpop.f32.mrf.mxu0
      %1834 = vmatprep.mubr.bf16.mxu0 0
      %1835 = vmatmul.mubr.bf16.gmra.mxu0 %v1197
      %v1836 = vpop.f32.mrf.mxu0
      %v1837 = vadd.f32 %v459, %v1836
      %v1838 = vpop.f32.mrf.mxu0
      %v1839 = vpop.f32.mrf.mxu0
      %v1840 = vadd.f32 %v459, %v1839
      %v1841 = vpop.f32.mrf.mxu0
      %1842 = vmatprep.mubr.bf16.mxu0 0
      %1843 = vmatmul.mubr.bf16.gmra.mxu0 %v1200
      %v1844 = vpop.f32.mrf.mxu0
      %v1845 = vadd.f32 %v459, %v1844
      %v1846 = vpop.f32.mrf.mxu0
      %v1847 = vpop.f32.mrf.mxu0
      %v1848 = vadd.f32 %v459, %v1847
      %v1849 = vpop.f32.mrf.mxu0
      %1850 = vmatprep.mubr.bf16.mxu0 0
      %1851 = vmatmul.mubr.bf16.gmra.mxu0 %v1203
      %v1852 = vpop.f32.mrf.mxu0
      %v1853 = vadd.f32 %v459, %v1852
      %v1854 = vpop.f32.mrf.mxu0
      %v1855 = vpop.f32.mrf.mxu0
      %v1856 = vadd.f32 %v459, %v1855
      %v1857 = vpop.f32.mrf.mxu0
      %1858 = vmatprep.mubr.bf16.mxu0 0
      %1859 = vmatmul.mubr.bf16.gmra.mxu0 %v1206
      %v1860 = vpop.f32.mrf.mxu0
      %v1861 = vadd.f32 %v459, %v1860
      %v1862 = vpop.f32.mrf.mxu0
      %v1863 = vpop.f32.mrf.mxu0
      %v1864 = vadd.f32 %v459, %v1863
      %v1865 = vpop.f32.mrf.mxu0
      %1866 = vmatprep.mubr.bf16.mxu0 0
      %1867 = vmatmul.mubr.bf16.gmra.mxu0 %v1209
      %v1868 = vpop.f32.mrf.mxu0
      %v1869 = vadd.f32 %v459, %v1868
      %v1870 = vpop.f32.mrf.mxu0
      %v1871 = vpop.f32.mrf.mxu0
      %v1872 = vadd.f32 %v459, %v1871
      %v1873 = vpop.f32.mrf.mxu0
      %1874 = vmatprep.mubr.bf16.mxu0 0
      %1875 = vmatmul.mubr.bf16.gmra.mxu0 %v1212
      %v1876 = vpop.f32.mrf.mxu0
      %v1877 = vadd.f32 %v459, %v1876
      %v1878 = vpop.f32.mrf.mxu0
      %v1879 = vpop.f32.mrf.mxu0
      %v1880 = vadd.f32 %v459, %v1879
      %v1881 = vpop.f32.mrf.mxu0
      %1882 = vmatprep.mubr.bf16.mxu0 0
      %1883 = vmatmul.mubr.bf16.gmra.mxu0 %v1215
      %v1884 = vpop.f32.mrf.mxu0
      %v1885 = vadd.f32 %v459, %v1884
      %v1886 = vpop.f32.mrf.mxu0
      %v1887 = vpop.f32.mrf.mxu0
      %v1888 = vadd.f32 %v459, %v1887
      %v1889 = vpop.f32.mrf.mxu0
      %1890 = vmatprep.mubr.bf16.mxu0 0
      %1891 = vmatmul.mubr.bf16.gmra.mxu0 %v1218
      %v1892 = vpop.f32.mrf.mxu0
      %v1893 = vadd.f32 %v459, %v1892
      %v1894 = vpop.f32.mrf.mxu0
      %v1895 = vpop.f32.mrf.mxu0
      %v1896 = vadd.f32 %v459, %v1895
      %v1897 = vpop.f32.mrf.mxu0
      %1898 = vmatprep.mubr.bf16.mxu0 0
      %1899 = vmatmul.mubr.bf16.gmra.mxu0 %v1221
      %v1900 = vpop.f32.mrf.mxu0
      %v1901 = vadd.f32 %v459, %v1900
      %v1902 = vpop.f32.mrf.mxu0
      %v1903 = vpop.f32.mrf.mxu0
      %v1904 = vadd.f32 %v459, %v1903
      %v1905 = vpop.f32.mrf.mxu0
      %1906 = vmatprep.mubr.bf16.mxu0 0
      %1907 = vmatmul.mubr.bf16.gmra.mxu0 %v1224
      %v1908 = vpop.f32.mrf.mxu0
      %v1909 = vadd.f32 %v459, %v1908
      %v1910 = vpop.f32.mrf.mxu0
      %v1911 = vpop.f32.mrf.mxu0
      %v1912 = vadd.f32 %v459, %v1911
      %v1913 = vpop.f32.mrf.mxu0
      %1914 = vmatprep.mubr.bf16.mxu0 0
      %1915 = vmatmul.mubr.bf16.gmra.mxu0 %v1227
      %v1916 = vpop.f32.mrf.mxu0
      %v1917 = vadd.f32 %v459, %v1916
      %v1918 = vpop.f32.mrf.mxu0
      %v1919 = vpop.f32.mrf.mxu0
      %v1920 = vadd.f32 %v459, %v1919
      %v1921 = vpop.f32.mrf.mxu0
      %1922 = vmatprep.mubr.bf16.mxu0 0
      %1923 = vmatmul.mubr.bf16.gmra.mxu0 %v1230
      %v1924 = vpop.f32.mrf.mxu0
      %v1925 = vadd.f32 %v459, %v1924
      %v1926 = vpop.f32.mrf.mxu0
      %v1927 = vpop.f32.mrf.mxu0
      %v1928 = vadd.f32 %v459, %v1927
      %v1929 = vpop.f32.mrf.mxu0
      %1930 = vmatprep.mubr.bf16.mxu0 0
      %1931 = vmatmul.mubr.bf16.gmra.mxu0 %v1233
      %v1932 = vpop.f32.mrf.mxu0
      %v1933 = vadd.f32 %v459, %v1932
      %v1934 = vpop.f32.mrf.mxu0
      %v1935 = vpop.f32.mrf.mxu0
      %v1936 = vadd.f32 %v459, %v1935
      %v1937 = vpop.f32.mrf.mxu0
      %1938 = vmatprep.mubr.bf16.mxu0 0
      %1939 = vmatmul.mubr.bf16.gmra.mxu0 %v1236
      %v1940 = vpop.f32.mrf.mxu0
      %v1941 = vadd.f32 %v459, %v1940
      %v1942 = vpop.f32.mrf.mxu0
      %v1943 = vpop.f32.mrf.mxu0
      %v1944 = vadd.f32 %v459, %v1943
      %v1945 = vpop.f32.mrf.mxu0
      %1946 = vmatprep.mubr.bf16.mxu0 0
      %1947 = vmatmul.mubr.bf16.gmra.mxu0 %v1239
      %v1948 = vpop.f32.mrf.mxu0
      %v1949 = vadd.f32 %v459, %v1948
      %v1950 = vpop.f32.mrf.mxu0
      %v1951 = vpop.f32.mrf.mxu0
      %v1952 = vadd.f32 %v459, %v1951
      %v1953 = vpop.f32.mrf.mxu0
      %1954 = vmatprep.mubr.bf16.mxu0 0
      %1955 = vmatmul.mubr.bf16.gmra.mxu0 %v1242
      %v1956 = vpop.f32.mrf.mxu0
      %v1957 = vadd.f32 %v459, %v1956
      %v1958 = vpop.f32.mrf.mxu0
      %v1959 = vpop.f32.mrf.mxu0
      %v1960 = vadd.f32 %v459, %v1959
      %v1961 = vpop.f32.mrf.mxu0
      %1962 = vmatprep.mubr.bf16.mxu0 0
      %1963 = vmatmul.mubr.bf16.gmra.mxu0 %v1245
      %v1964 = vpop.f32.mrf.mxu0
      %v1965 = vadd.f32 %v459, %v1964
      %v1966 = vpop.f32.mrf.mxu0
      %v1967 = vpop.f32.mrf.mxu0
      %v1968 = vadd.f32 %v459, %v1967
      %v1969 = vpop.f32.mrf.mxu0
      %1970 = vmatprep.mubr.bf16.mxu0 0
      %1971 = vmatmul.mubr.bf16.gmra.mxu0 %v1248
      %v1972 = vpop.f32.mrf.mxu0
      %v1973 = vadd.f32 %v459, %v1972
      %v1974 = vpop.f32.mrf.mxu0
      %v1975 = vpop.f32.mrf.mxu0
      %v1976 = vadd.f32 %v459, %v1975
      %v1977 = vpop.f32.mrf.mxu0
      %1978 = vmatprep.mubr.bf16.mxu0 0
      %1979 = vmatmul.mubr.bf16.gmra.mxu0 %v1251
      %v1980 = vpop.f32.mrf.mxu0
      %v1981 = vadd.f32 %v459, %v1980
      %v1982 = vpop.f32.mrf.mxu0
      %v1983 = vpop.f32.mrf.mxu0
      %v1984 = vadd.f32 %v459, %v1983
      %v1985 = vpop.f32.mrf.mxu0
      %1986 = vmatprep.mubr.bf16.mxu0 0
      %1987 = vmatmul.mubr.bf16.gmra.mxu0 %v1254
      %v1988 = vpop.f32.mrf.mxu0
      %v1989 = vadd.f32 %v459, %v1988
      %v1990 = vpop.f32.mrf.mxu0
      %v1991 = vpop.f32.mrf.mxu0
      %v1992 = vadd.f32 %v459, %v1991
      %v1993 = vpop.f32.mrf.mxu0
      %1994 = vmatprep.mubr.bf16.mxu0 0
      %1995 = vmatmul.mubr.bf16.gmra.mxu0 %v1257
      %v1996 = vpop.f32.mrf.mxu0
      %v1997 = vadd.f32 %v459, %v1996
      %v1998 = vpop.f32.mrf.mxu0
      %v1999 = vpop.f32.mrf.mxu0
      %v2000 = vadd.f32 %v459, %v1999
      %v2001 = vpop.f32.mrf.mxu0
      %2002 = vmatprep.mubr.bf16.mxu0 0
      %2003 = vmatmul.mubr.bf16.gmra.mxu0 %v1260
      %v2004 = vpop.f32.mrf.mxu0
      %v2005 = vadd.f32 %v459, %v2004
      %v2006 = vpop.f32.mrf.mxu0
      %v2007 = vpop.f32.mrf.mxu0
      %v2008 = vadd.f32 %v459, %v2007
      %v2009 = vpop.f32.mrf.mxu0
      %2010 = vmatprep.mubr.bf16.mxu0 0
      %2011 = vmatmul.mubr.bf16.gmra.mxu0 %v1263
      %v2012 = vpop.f32.mrf.mxu0
      %v2013 = vadd.f32 %v459, %v2012
      %v2014 = vpop.f32.mrf.mxu0
      %v2015 = vpop.f32.mrf.mxu0
      %v2016 = vadd.f32 %v459, %v2015
      %v2017 = vpop.f32.mrf.mxu0
      %2018 = vmatprep.mubr.bf16.mxu0 0
      %2019 = vmatmul.mubr.bf16.gmra.mxu0 %v1266
      %v2020 = vpop.f32.mrf.mxu0
      %v2021 = vadd.f32 %v459, %v2020
      %v2022 = vpop.f32.mrf.mxu0
      %v2023 = vpop.f32.mrf.mxu0
      %v2024 = vadd.f32 %v459, %v2023
      %v2025 = vpop.f32.mrf.mxu0
      %2026 = vmatprep.mubr.bf16.mxu0 0
      %2027 = vmatmul.mubr.bf16.gmra.mxu0 %v1269
      %v2028 = vpop.f32.mrf.mxu0
      %v2029 = vadd.f32 %v459, %v2028
      %v2030 = vpop.f32.mrf.mxu0
      %v2031 = vpop.f32.mrf.mxu0
      %v2032 = vadd.f32 %v459, %v2031
      %v2033 = vpop.f32.mrf.mxu0
      %2034 = vmatprep.mubr.bf16.mxu0 0
      %2035 = vmatmul.mubr.bf16.gmra.mxu0 %v1272
      %v2036 = vpop.f32.mrf.mxu0
      %v2037 = vadd.f32 %v459, %v2036
      %v2038 = vpop.f32.mrf.mxu0
      %v2039 = vpop.f32.mrf.mxu0
      %v2040 = vadd.f32 %v459, %v2039
      %v2041 = vpop.f32.mrf.mxu0
      %2042 = vmatprep.mubr.bf16.mxu0 0
      %2043 = vmatmul.mubr.bf16.gmra.mxu0 %v1275
      %v2044 = vpop.f32.mrf.mxu0
      %v2045 = vadd.f32 %v459, %v2044
      %v2046 = vpop.f32.mrf.mxu0
      %v2047 = vpop.f32.mrf.mxu0
      %v2048 = vadd.f32 %v459, %v2047
      %v2049 = vpop.f32.mrf.mxu0
      %2050 = vmatprep.mubr.bf16.mxu0 0
      %2051 = vmatmul.mubr.bf16.gmra.mxu0 %v1278
      %v2052 = vpop.f32.mrf.mxu0
      %v2053 = vadd.f32 %v459, %v2052
      %v2054 = vpop.f32.mrf.mxu0
      %v2055 = vpop.f32.mrf.mxu0
      %v2056 = vadd.f32 %v459, %v2055
      %v2057 = vpop.f32.mrf.mxu0
      %2058 = vmatprep.mubr.bf16.mxu0 0
      %2059 = vmatmul.mubr.bf16.gmra.mxu0 %v1281
      %v2060 = vpop.f32.mrf.mxu0
      %v2061 = vadd.f32 %v459, %v2060
      %v2062 = vpop.f32.mrf.mxu0
      %v2063 = vpop.f32.mrf.mxu0
      %v2064 = vadd.f32 %v459, %v2063
      %v2065 = vpop.f32.mrf.mxu0
      %2066 = vmatprep.mubr.bf16.mxu0 0
      %2067 = vmatmul.mubr.bf16.gmra.mxu0 %v1284
      %v2068 = vpop.f32.mrf.mxu0
      %v2069 = vadd.f32 %v459, %v2068
      %v2070 = vpop.f32.mrf.mxu0
      %v2071 = vpop.f32.mrf.mxu0
      %v2072 = vadd.f32 %v459, %v2071
      %v2073 = vpop.f32.mrf.mxu0
      %2074 = vmatprep.mubr.bf16.mxu0 0
      %2075 = vmatmul.mubr.bf16.gmra.mxu0 %v1287
      %v2076 = vpop.f32.mrf.mxu0
      %v2077 = vadd.f32 %v459, %v2076
      %v2078 = vpop.f32.mrf.mxu0
      %v2079 = vpop.f32.mrf.mxu0
      %v2080 = vadd.f32 %v459, %v2079
      %v2081 = vpop.f32.mrf.mxu0
      %2082 = vmatprep.mubr.bf16.mxu0 0
      %2083 = vmatmul.mubr.bf16.gmra.mxu0 %v1290
      %v2084 = vpop.f32.mrf.mxu0
      %v2085 = vadd.f32 %v459, %v2084
      %v2086 = vpop.f32.mrf.mxu0
      %v2087 = vpop.f32.mrf.mxu0
      %v2088 = vadd.f32 %v459, %v2087
      %v2089 = vpop.f32.mrf.mxu0
      %2090 = vmatprep.mubr.bf16.mxu0 0
      %2091 = vmatmul.mubr.bf16.gmra.mxu0 %v1293
      %v2092 = vpop.f32.mrf.mxu0
      %v2093 = vadd.f32 %v459, %v2092
      %v2094 = vpop.f32.mrf.mxu0
      %v2095 = vpop.f32.mrf.mxu0
      %v2096 = vadd.f32 %v459, %v2095
      %v2097 = vpop.f32.mrf.mxu0
      %2098 = vmatprep.mubr.bf16.mxu0 0
      %2099 = vmatmul.mubr.bf16.gmra.mxu0 %v1296
      %v2100 = vpop.f32.mrf.mxu0
      %v2101 = vadd.f32 %v459, %v2100
      %v2102 = vpop.f32.mrf.mxu0
      %v2103 = vpop.f32.mrf.mxu0
      %v2104 = vadd.f32 %v459, %v2103
      %v2105 = vpop.f32.mrf.mxu0
      %2106 = vmatprep.mubr.bf16.mxu0 0
      %2107 = vmatmul.mubr.bf16.gmra.mxu0 %v1299
      %v2108 = vpop.f32.mrf.mxu0
      %v2109 = vadd.f32 %v459, %v2108
      %v2110 = vpop.f32.mrf.mxu0
      %v2111 = vpop.f32.mrf.mxu0
      %v2112 = vadd.f32 %v459, %v2111
      %v2113 = vpop.f32.mrf.mxu0
      %2114 = vmatprep.mubr.bf16.mxu0 0
      %2115 = vmatmul.mubr.bf16.gmra.mxu0 %v1302
      %v2116 = vpop.f32.mrf.mxu0
      %v2117 = vadd.f32 %v459, %v2116
      %v2118 = vpop.f32.mrf.mxu0
      %v2119 = vpop.f32.mrf.mxu0
      %v2120 = vadd.f32 %v459, %v2119
      %v2121 = vpop.f32.mrf.mxu0
      %2122 = vmatprep.mubr.bf16.mxu0 0
      %2123 = vmatmul.mubr.bf16.gmra.mxu0 %v1305
      %v2124 = vpop.f32.mrf.mxu0
      %v2125 = vadd.f32 %v459, %v2124
      %v2126 = vpop.f32.mrf.mxu0
      %v2127 = vpop.f32.mrf.mxu0
      %v2128 = vadd.f32 %v459, %v2127
      %v2129 = vpop.f32.mrf.mxu0
      %2130 = vmatprep.mubr.bf16.mxu0 0
      %2131 = vmatmul.mubr.bf16.gmra.mxu0 %v1308
      %v2132 = vpop.f32.mrf.mxu0
      %v2133 = vadd.f32 %v459, %v2132
      %v2134 = vpop.f32.mrf.mxu0
      %v2135 = vpop.f32.mrf.mxu0
      %v2136 = vadd.f32 %v459, %v2135
      %v2137 = vpop.f32.mrf.mxu0
      %2138 = vmatprep.mubr.bf16.mxu0 0
      %2139 = vmatmul.mubr.bf16.gmra.mxu0 %v1311
      %v2140 = vpop.f32.mrf.mxu0
      %v2141 = vadd.f32 %v459, %v2140
      %v2142 = vpop.f32.mrf.mxu0
      %v2143 = vpop.f32.mrf.mxu0
      %v2144 = vadd.f32 %v459, %v2143
      %v2145 = vpop.f32.mrf.mxu0
      %2146 = vmatprep.mubr.bf16.mxu0 0
      %2147 = vmatmul.mubr.bf16.gmra.mxu0 %v1314
      %v2148 = vpop.f32.mrf.mxu0
      %v2149 = vadd.f32 %v459, %v2148
      %v2150 = vpop.f32.mrf.mxu0
      %v2151 = vpop.f32.mrf.mxu0
      %v2152 = vadd.f32 %v459, %v2151
      %v2153 = vpop.f32.mrf.mxu0
      %2154 = vmatprep.mubr.bf16.mxu0 0
      %2155 = vmatmul.mubr.bf16.gmra.mxu0 %v1317
      %v2156 = vpop.f32.mrf.mxu0
      %v2157 = vadd.f32 %v459, %v2156
      %v2158 = vpop.f32.mrf.mxu0
      %v2159 = vpop.f32.mrf.mxu0
      %v2160 = vadd.f32 %v459, %v2159
      %v2161 = vpop.f32.mrf.mxu0
      %2162 = vmatprep.mubr.bf16.mxu0 0
      %2163 = vmatmul.mubr.bf16.gmra.mxu0 %v1320
      %v2164 = vpop.f32.mrf.mxu0
      %v2165 = vadd.f32 %v459, %v2164
      %v2166 = vpop.f32.mrf.mxu0
      %v2167 = vpop.f32.mrf.mxu0
      %v2168 = vadd.f32 %v459, %v2167
      %v2169 = vpop.f32.mrf.mxu0
      %2170 = vmatprep.mubr.bf16.mxu0 0
      %2171 = vmatmul.mubr.bf16.gmra.mxu0 %v1323
      %v2172 = vpop.f32.mrf.mxu0
      %v2173 = vadd.f32 %v459, %v2172
      %v2174 = vpop.f32.mrf.mxu0
      %v2175 = vpop.f32.mrf.mxu0
      %v2176 = vadd.f32 %v459, %v2175
      %v2177 = vpop.f32.mrf.mxu0
      %2178 = vmatprep.mubr.bf16.mxu0 0
      %2179 = vmatmul.mubr.bf16.gmra.mxu0 %v1326
      %v2180 = vpop.f32.mrf.mxu0
      %v2181 = vadd.f32 %v459, %v2180
      %v2182 = vpop.f32.mrf.mxu0
      %v2183 = vpop.f32.mrf.mxu0
      %v2184 = vadd.f32 %v459, %v2183
      %v2185 = vpop.f32.mrf.mxu0
      %2186 = vmatprep.mubr.bf16.mxu0 0
      %2187 = vmatmul.mubr.bf16.gmra.mxu0 %v1329
      %v2188 = vpop.f32.mrf.mxu0
      %v2189 = vadd.f32 %v459, %v2188
      %v2190 = vpop.f32.mrf.mxu0
      %v2191 = vpop.f32.mrf.mxu0
      %v2192 = vadd.f32 %v459, %v2191
      %v2193 = vpop.f32.mrf.mxu0
      %2194 = vmatprep.mubr.bf16.mxu0 0
      %2195 = vmatmul.mubr.bf16.gmra.mxu0 %v1332
      %v2196 = vpop.f32.mrf.mxu0
      %v2197 = vadd.f32 %v459, %v2196
      %v2198 = vpop.f32.mrf.mxu0
      %v2199 = vpop.f32.mrf.mxu0
      %v2200 = vadd.f32 %v459, %v2199
      %v2201 = vpop.f32.mrf.mxu0
      %2202 = vmatprep.mubr.bf16.mxu0 0
      %2203 = vmatmul.mubr.bf16.gmra.mxu0 %v1335
      %v2204 = vpop.f32.mrf.mxu0
      %v2205 = vadd.f32 %v459, %v2204
      %v2206 = vpop.f32.mrf.mxu0
      %v2207 = vpop.f32.mrf.mxu0
      %v2208 = vadd.f32 %v459, %v2207
      %v2209 = vpop.f32.mrf.mxu0
      %2210 = vmatprep.mubr.bf16.mxu0 0
      %2211 = vmatmul.mubr.bf16.gmra.mxu0 %v1338
      %v2212 = vpop.f32.mrf.mxu0
      %v2213 = vadd.f32 %v459, %v2212
      %v2214 = vpop.f32.mrf.mxu0
      %v2215 = vpop.f32.mrf.mxu0
      %v2216 = vadd.f32 %v459, %v2215
      %v2217 = vpop.f32.mrf.mxu0
      %2218 = vmatprep.mubr.bf16.mxu0 0
      %2219 = vmatmul.mubr.bf16.gmra.mxu0 %v1341
      %v2220 = vpop.f32.mrf.mxu0
      %v2221 = vadd.f32 %v459, %v2220
      %v2222 = vpop.f32.mrf.mxu0
      %v2223 = vpop.f32.mrf.mxu0
      %v2224 = vadd.f32 %v459, %v2223
      %v2225 = vpop.f32.mrf.mxu0
      %2226 = vmatprep.mubr.bf16.mxu0 0
      %2227 = vmatmul.mubr.bf16.gmra.mxu0 %v1344
      %v2228 = vpop.f32.mrf.mxu0
      %v2229 = vadd.f32 %v459, %v2228
      %v2230 = vpop.f32.mrf.mxu0
      %v2231 = vpop.f32.mrf.mxu0
      %v2232 = vadd.f32 %v459, %v2231
      %v2233 = vpop.f32.mrf.mxu0
      %2234 = vmatprep.mubr.bf16.mxu0 0
      %2235 = vmatmul.mubr.bf16.gmra.mxu0 %v1347
      %v2236 = vpop.f32.mrf.mxu0
      %v2237 = vadd.f32 %v459, %v2236
      %v2238 = vpop.f32.mrf.mxu0
      %v2239 = vpop.f32.mrf.mxu0
      %v2240 = vadd.f32 %v459, %v2239
      %v2241 = vpop.f32.mrf.mxu0
      %2242 = vmatprep.mubr.bf16.mxu0 0
      %2243 = vmatmul.mubr.bf16.gmra.mxu0 %v1350
      %v2244 = vpop.f32.mrf.mxu0
      %v2245 = vadd.f32 %v459, %v2244
      %v2246 = vpop.f32.mrf.mxu0
      %v2247 = vpop.f32.mrf.mxu0
      %v2248 = vadd.f32 %v459, %v2247
      %v2249 = vpop.f32.mrf.mxu0
      %2250 = vmatprep.mubr.bf16.mxu0 0
      %2251 = vmatmul.mubr.bf16.gmra.mxu0 %v1353
      %v2252 = vpop.f32.mrf.mxu0
      %v2253 = vadd.f32 %v459, %v2252
      %v2254 = vpop.f32.mrf.mxu0
      %v2255 = vpop.f32.mrf.mxu0
      %v2256 = vadd.f32 %v459, %v2255
      %v2257 = vpop.f32.mrf.mxu0
      %2258 = vmatprep.mubr.bf16.mxu0 0
      %2259 = vmatmul.mubr.bf16.gmra.mxu0 %v1356
      %v2260 = vpop.f32.mrf.mxu0
      %v2261 = vadd.f32 %v459, %v2260
      %v2262 = vpop.f32.mrf.mxu0
      %v2263 = vpop.f32.mrf.mxu0
      %v2264 = vadd.f32 %v459, %v2263
      %v2265 = vpop.f32.mrf.mxu0
      %2266 = vmatprep.mubr.bf16.mxu0 0
      %2267 = vmatmul.mubr.bf16.gmra.mxu0 %v1359
      %v2268 = vpop.f32.mrf.mxu0
      %v2269 = vadd.f32 %v459, %v2268
      %v2270 = vpop.f32.mrf.mxu0
      %v2271 = vpop.f32.mrf.mxu0
      %v2272 = vadd.f32 %v459, %v2271
      %v2273 = vpop.f32.mrf.mxu0
      %2274 = vmatprep.mubr.bf16.mxu0 0
      %2275 = vmatmul.mubr.bf16.gmra.mxu0 %v1362
      %v2276 = vpop.f32.mrf.mxu0
      %v2277 = vadd.f32 %v459, %v2276
      %v2278 = vpop.f32.mrf.mxu0
      %v2279 = vpop.f32.mrf.mxu0
      %v2280 = vadd.f32 %v459, %v2279
      %v2281 = vpop.f32.mrf.mxu0
      %2282 = vmatprep.mubr.bf16.mxu0 0
      %2283 = vmatmul.mubr.bf16.gmra.mxu0 %v1365
      %v2284 = vpop.f32.mrf.mxu0
      %v2285 = vadd.f32 %v459, %v2284
      %v2286 = vpop.f32.mrf.mxu0
      %v2287 = vpop.f32.mrf.mxu0
      %v2288 = vadd.f32 %v459, %v2287
      %v2289 = vpop.f32.mrf.mxu0
      %2290 = vmatprep.mubr.bf16.mxu0 0
      %2291 = vmatmul.mubr.bf16.gmra.mxu0 %v1368
      %v2292 = vpop.f32.mrf.mxu0
      %v2293 = vadd.f32 %v459, %v2292
      %v2294 = vpop.f32.mrf.mxu0
      %v2295 = vpop.f32.mrf.mxu0
      %v2296 = vadd.f32 %v459, %v2295
      %v2297 = vpop.f32.mrf.mxu0
      %2298 = vdwg.mxu0
      %v2299 = vmax.f32 %v1405, 0.0
      %v2300 = vmax.f32 %v1408, 0.0
      %v2301 = vmax.f32 %v1413, 0.0
      %v2302 = vmax.f32 %v1416, 0.0
      %v2303 = vmax.f32 %v1421, 0.0
      %v2304 = vmax.f32 %v1424, 0.0
      %v2305 = vmax.f32 %v1429, 0.0
      %v2306 = vmax.f32 %v1432, 0.0
      %v2307 = vmax.f32 %v1437, 0.0
      %v2308 = vmax.f32 %v1440, 0.0
      %v2309 = vmax.f32 %v1445, 0.0
      %v2310 = vmax.f32 %v1448, 0.0
      %v2311 = vmax.f32 %v1453, 0.0
      %v2312 = vmax.f32 %v1456, 0.0
      %v2313 = vmax.f32 %v1461, 0.0
      %v2314 = vmax.f32 %v1464, 0.0
      %v2315 = vmax.f32 %v1469, 0.0
      %v2316 = vmax.f32 %v1472, 0.0
      %v2317 = vmax.f32 %v1477, 0.0
      %v2318 = vmax.f32 %v1480, 0.0
      %v2319 = vmax.f32 %v1485, 0.0
      %v2320 = vmax.f32 %v1488, 0.0
      %v2321 = vmax.f32 %v1493, 0.0
      %v2322 = vmax.f32 %v1496, 0.0
      %v2323 = vmax.f32 %v1501, 0.0
      %v2324 = vmax.f32 %v1504, 0.0
      %v2325 = vmax.f32 %v1509, 0.0
      %v2326 = vmax.f32 %v1512, 0.0
      %v2327 = vmax.f32 %v1517, 0.0
      %v2328 = vmax.f32 %v1520, 0.0
      %v2329 = vmax.f32 %v1525, 0.0
      %v2330 = vmax.f32 %v1528, 0.0
      %v2331 = vmax.f32 %v1533, 0.0
      %v2332 = vmax.f32 %v1536, 0.0
      %v2333 = vmax.f32 %v1541, 0.0
      %v2334 = vmax.f32 %v1544, 0.0
      %v2335 = vmax.f32 %v1549, 0.0
      %v2336 = vmax.f32 %v1552, 0.0
      %v2337 = vmax.f32 %v1557, 0.0
      %v2338 = vmax.f32 %v1560, 0.0
      %v2339 = vmax.f32 %v1565, 0.0
      %v2340 = vmax.f32 %v1568, 0.0
      %v2341 = vmax.f32 %v1573, 0.0
      %v2342 = vmax.f32 %v1576, 0.0
      %v2343 = vmax.f32 %v1581, 0.0
      %v2344 = vmax.f32 %v1584, 0.0
      %v2345 = vmax.f32 %v1589, 0.0
      %v2346 = vmax.f32 %v1592, 0.0
      %v2347 = vmax.f32 %v1597, 0.0
      %v2348 = vmax.f32 %v1600, 0.0
      %v2349 = vmax.f32 %v1605, 0.0
      %v2350 = vmax.f32 %v1608, 0.0
      %v2351 = vmax.f32 %v1613, 0.0
      %v2352 = vmax.f32 %v1616, 0.0
      %v2353 = vmax.f32 %v1621, 0.0
      %v2354 = vmax.f32 %v1624, 0.0
      %v2355 = vmax.f32 %v1629, 0.0
      %v2356 = vmax.f32 %v1632, 0.0
      %v2357 = vmax.f32 %v1637, 0.0
      %v2358 = vmax.f32 %v1640, 0.0
      %v2359 = vmax.f32 %v1645, 0.0
      %v2360 = vmax.f32 %v1648, 0.0
      %v2361 = vmax.f32 %v1653, 0.0
      %v2362 = vmax.f32 %v1656, 0.0
      %v2363 = vmax.f32 %v1661, 0.0
      %v2364 = vmax.f32 %v1664, 0.0
      %v2365 = vmax.f32 %v1669, 0.0
      %v2366 = vmax.f32 %v1672, 0.0
      %v2367 = vmax.f32 %v1677, 0.0
      %v2368 = vmax.f32 %v1680, 0.0
      %v2369 = vmax.f32 %v1685, 0.0
      %v2370 = vmax.f32 %v1688, 0.0
      %v2371 = vmax.f32 %v1693, 0.0
      %v2372 = vmax.f32 %v1696, 0.0
      %v2373 = vmax.f32 %v1701, 0.0
      %v2374 = vmax.f32 %v1704, 0.0
      %v2375 = vmax.f32 %v1709, 0.0
      %v2376 = vmax.f32 %v1712, 0.0
      %v2377 = vmax.f32 %v1717, 0.0
      %v2378 = vmax.f32 %v1720, 0.0
      %v2379 = vmax.f32 %v1725, 0.0
      %v2380 = vmax.f32 %v1728, 0.0
      %v2381 = vmax.f32 %v1733, 0.0
      %v2382 = vmax.f32 %v1736, 0.0
      %v2383 = vmax.f32 %v1741, 0.0
      %v2384 = vmax.f32 %v1744, 0.0
      %v2385 = vmax.f32 %v1749, 0.0
      %v2386 = vmax.f32 %v1752, 0.0
      %v2387 = vmax.f32 %v1757, 0.0
      %v2388 = vmax.f32 %v1760, 0.0
      %v2389 = vmax.f32 %v1765, 0.0
      %v2390 = vmax.f32 %v1768, 0.0
      %v2391 = vmax.f32 %v1773, 0.0
      %v2392 = vmax.f32 %v1776, 0.0
      %v2393 = vmax.f32 %v1781, 0.0
      %v2394 = vmax.f32 %v1784, 0.0
      %v2395 = vmax.f32 %v1789, 0.0
      %v2396 = vmax.f32 %v1792, 0.0
      %v2397 = vmax.f32 %v1797, 0.0
      %v2398 = vmax.f32 %v1800, 0.0
      %v2399 = vmax.f32 %v1805, 0.0
      %v2400 = vmax.f32 %v1808, 0.0
      %v2401 = vmax.f32 %v1813, 0.0
      %v2402 = vmax.f32 %v1816, 0.0
      %v2403 = vmax.f32 %v1821, 0.0
      %v2404 = vmax.f32 %v1824, 0.0
      %v2405 = vmax.f32 %v1829, 0.0
      %v2406 = vmax.f32 %v1832, 0.0
      %v2407 = vmax.f32 %v1837, 0.0
      %v2408 = vmax.f32 %v1840, 0.0
      %v2409 = vmax.f32 %v1845, 0.0
      %v2410 = vmax.f32 %v1848, 0.0
      %v2411 = vmax.f32 %v1853, 0.0
      %v2412 = vmax.f32 %v1856, 0.0
      %v2413 = vmax.f32 %v1861, 0.0
      %v2414 = vmax.f32 %v1864, 0.0
      %v2415 = vmax.f32 %v1869, 0.0
      %v2416 = vmax.f32 %v1872, 0.0
      %v2417 = vmax.f32 %v1877, 0.0
      %v2418 = vmax.f32 %v1880, 0.0
      %v2419 = vmax.f32 %v1885, 0.0
      %v2420 = vmax.f32 %v1888, 0.0
      %v2421 = vmax.f32 %v1893, 0.0
      %v2422 = vmax.f32 %v1896, 0.0
      %v2423 = vmax.f32 %v1901, 0.0
      %v2424 = vmax.f32 %v1904, 0.0
      %v2425 = vmax.f32 %v1909, 0.0
      %v2426 = vmax.f32 %v1912, 0.0
      %v2427 = vmax.f32 %v1917, 0.0
      %v2428 = vmax.f32 %v1920, 0.0
      %v2429 = vmax.f32 %v1925, 0.0
      %v2430 = vmax.f32 %v1928, 0.0
      %v2431 = vmax.f32 %v1933, 0.0
      %v2432 = vmax.f32 %v1936, 0.0
      %v2433 = vmax.f32 %v1941, 0.0
      %v2434 = vmax.f32 %v1944, 0.0
      %v2435 = vmax.f32 %v1949, 0.0
      %v2436 = vmax.f32 %v1952, 0.0
      %v2437 = vmax.f32 %v1957, 0.0
      %v2438 = vmax.f32 %v1960, 0.0
      %v2439 = vmax.f32 %v1965, 0.0
      %v2440 = vmax.f32 %v1968, 0.0
      %v2441 = vmax.f32 %v1973, 0.0
      %v2442 = vmax.f32 %v1976, 0.0
      %v2443 = vmax.f32 %v1981, 0.0
      %v2444 = vmax.f32 %v1984, 0.0
      %v2445 = vmax.f32 %v1989, 0.0
      %v2446 = vmax.f32 %v1992, 0.0
      %v2447 = vmax.f32 %v1997, 0.0
      %v2448 = vmax.f32 %v2000, 0.0
      %v2449 = vmax.f32 %v2005, 0.0
      %v2450 = vmax.f32 %v2008, 0.0
      %v2451 = vmax.f32 %v2013, 0.0
      %v2452 = vmax.f32 %v2016, 0.0
      %v2453 = vmax.f32 %v2021, 0.0
      %v2454 = vmax.f32 %v2024, 0.0
      %v2455 = vmax.f32 %v2029, 0.0
      %v2456 = vmax.f32 %v2032, 0.0
      %v2457 = vmax.f32 %v2037, 0.0
      %v2458 = vmax.f32 %v2040, 0.0
      %v2459 = vmax.f32 %v2045, 0.0
      %v2460 = vmax.f32 %v2048, 0.0
      %v2461 = vmax.f32 %v2053, 0.0
      %v2462 = vmax.f32 %v2056, 0.0
      %v2463 = vmax.f32 %v2061, 0.0
      %v2464 = vmax.f32 %v2064, 0.0
      %v2465 = vmax.f32 %v2069, 0.0
      %v2466 = vmax.f32 %v2072, 0.0
      %v2467 = vmax.f32 %v2077, 0.0
      %v2468 = vmax.f32 %v2080, 0.0
      %v2469 = vmax.f32 %v2085, 0.0
      %v2470 = vmax.f32 %v2088, 0.0
      %v2471 = vmax.f32 %v2093, 0.0
      %v2472 = vmax.f32 %v2096, 0.0
      %v2473 = vmax.f32 %v2101, 0.0
      %v2474 = vmax.f32 %v2104, 0.0
      %v2475 = vmax.f32 %v2109, 0.0
      %v2476 = vmax.f32 %v2112, 0.0
      %v2477 = vmax.f32 %v2117, 0.0
      %v2478 = vmax.f32 %v2120, 0.0
      %v2479 = vmax.f32 %v2125, 0.0
      %v2480 = vmax.f32 %v2128, 0.0
      %v2481 = vmax.f32 %v2133, 0.0
      %v2482 = vmax.f32 %v2136, 0.0
      %v2483 = vmax.f32 %v2141, 0.0
      %v2484 = vmax.f32 %v2144, 0.0
      %v2485 = vmax.f32 %v2149, 0.0
      %v2486 = vmax.f32 %v2152, 0.0
      %v2487 = vmax.f32 %v2157, 0.0
      %v2488 = vmax.f32 %v2160, 0.0
      %v2489 = vmax.f32 %v2165, 0.0
      %v2490 = vmax.f32 %v2168, 0.0
      %v2491 = vmax.f32 %v2173, 0.0
      %v2492 = vmax.f32 %v2176, 0.0
      %v2493 = vmax.f32 %v2181, 0.0
      %v2494 = vmax.f32 %v2184, 0.0
      %v2495 = vmax.f32 %v2189, 0.0
      %v2496 = vmax.f32 %v2192, 0.0
      %v2497 = vmax.f32 %v2197, 0.0
      %v2498 = vmax.f32 %v2200, 0.0
      %v2499 = vmax.f32 %v2205, 0.0
      %v2500 = vmax.f32 %v2208, 0.0
      %v2501 = vmax.f32 %v2213, 0.0
      %v2502 = vmax.f32 %v2216, 0.0
      %v2503 = vmax.f32 %v2221, 0.0
      %v2504 = vmax.f32 %v2224, 0.0
      %v2505 = vmax.f32 %v2229, 0.0
      %v2506 = vmax.f32 %v2232, 0.0
      %v2507 = vmax.f32 %v2237, 0.0
      %v2508 = vmax.f32 %v2240, 0.0
      %v2509 = vmax.f32 %v2245, 0.0
      %v2510 = vmax.f32 %v2248, 0.0
      %v2511 = vmax.f32 %v2253, 0.0
      %v2512 = vmax.f32 %v2256, 0.0
      %v2513 = vmax.f32 %v2261, 0.0
      %v2514 = vmax.f32 %v2264, 0.0
      %v2515 = vmax.f32 %v2269, 0.0
      %v2516 = vmax.f32 %v2272, 0.0
      %v2517 = vmax.f32 %v2277, 0.0
      %v2518 = vmax.f32 %v2280, 0.0
      %v2519 = vmax.f32 %v2285, 0.0
      %v2520 = vmax.f32 %v2288, 0.0
      %v2521 = vmax.f32 %v2293, 0.0
      %v2522 = vmax.f32 %v2296, 0.0
      %v2523 = vpack.c.bf16 %v2300, %v2299
      %v2524 = vpack.c.bf16 %v2302, %v2301
      %v2525 = vpack.c.bf16 %v2304, %v2303
      %v2526 = vpack.c.bf16 %v2306, %v2305
      %v2527 = vpack.c.bf16 %v2308, %v2307
      %v2528 = vpack.c.bf16 %v2310, %v2309
      %v2529 = vpack.c.bf16 %v2312, %v2311
      %v2530 = vpack.c.bf16 %v2314, %v2313
      %v2531 = vpack.c.bf16 %v2316, %v2315
      %v2532 = vpack.c.bf16 %v2318, %v2317
      %v2533 = vpack.c.bf16 %v2320, %v2319
      %v2534 = vpack.c.bf16 %v2322, %v2321
      %v2535 = vpack.c.bf16 %v2324, %v2323
      %v2536 = vpack.c.bf16 %v2326, %v2325
      %v2537 = vpack.c.bf16 %v2328, %v2327
      %v2538 = vpack.c.bf16 %v2330, %v2329
      %v2539 = vpack.c.bf16 %v2332, %v2331
      %v2540 = vpack.c.bf16 %v2334, %v2333
      %v2541 = vpack.c.bf16 %v2336, %v2335
      %v2542 = vpack.c.bf16 %v2338, %v2337
      %v2543 = vpack.c.bf16 %v2340, %v2339
      %v2544 = vpack.c.bf16 %v2342, %v2341
      %v2545 = vpack.c.bf16 %v2344, %v2343
      %v2546 = vpack.c.bf16 %v2346, %v2345
      %v2547 = vpack.c.bf16 %v2348, %v2347
      %v2548 = vpack.c.bf16 %v2350, %v2349
      %v2549 = vpack.c.bf16 %v2352, %v2351
      %v2550 = vpack.c.bf16 %v2354, %v2353
      %v2551 = vpack.c.bf16 %v2356, %v2355
      %v2552 = vpack.c.bf16 %v2358, %v2357
      %v2553 = vpack.c.bf16 %v2360, %v2359
      %v2554 = vpack.c.bf16 %v2362, %v2361
      %v2555 = vpack.c.bf16 %v2364, %v2363
      %v2556 = vpack.c.bf16 %v2366, %v2365
      %v2557 = vpack.c.bf16 %v2368, %v2367
      %v2558 = vpack.c.bf16 %v2370, %v2369
      %v2559 = vpack.c.bf16 %v2372, %v2371
      %v2560 = vpack.c.bf16 %v2374, %v2373
      %v2561 = vpack.c.bf16 %v2376, %v2375
      %v2562 = vpack.c.bf16 %v2378, %v2377
      %v2563 = vpack.c.bf16 %v2380, %v2379
      %v2564 = vpack.c.bf16 %v2382, %v2381
      %v2565 = vpack.c.bf16 %v2384, %v2383
      %v2566 = vpack.c.bf16 %v2386, %v2385
      %v2567 = vpack.c.bf16 %v2388, %v2387
      %v2568 = vpack.c.bf16 %v2390, %v2389
      %v2569 = vpack.c.bf16 %v2392, %v2391
      %v2570 = vpack.c.bf16 %v2394, %v2393
      %v2571 = vpack.c.bf16 %v2396, %v2395
      %v2572 = vpack.c.bf16 %v2398, %v2397
      %v2573 = vpack.c.bf16 %v2400, %v2399
      %v2574 = vpack.c.bf16 %v2402, %v2401
      %v2575 = vpack.c.bf16 %v2404, %v2403
      %v2576 = vpack.c.bf16 %v2406, %v2405
      %v2577 = vpack.c.bf16 %v2408, %v2407
      %v2578 = vpack.c.bf16 %v2410, %v2409
      %v2579 = vpack.c.bf16 %v2412, %v2411
      %v2580 = vpack.c.bf16 %v2414, %v2413
      %v2581 = vpack.c.bf16 %v2416, %v2415
      %v2582 = vpack.c.bf16 %v2418, %v2417
      %v2583 = vpack.c.bf16 %v2420, %v2419
      %v2584 = vpack.c.bf16 %v2422, %v2421
      %v2585 = vpack.c.bf16 %v2424, %v2423
      %v2586 = vpack.c.bf16 %v2426, %v2425
      %v2587 = vpack.c.bf16 %v2428, %v2427
      %v2588 = vpack.c.bf16 %v2430, %v2429
      %v2589 = vpack.c.bf16 %v2432, %v2431
      %v2590 = vpack.c.bf16 %v2434, %v2433
      %v2591 = vpack.c.bf16 %v2436, %v2435
      %v2592 = vpack.c.bf16 %v2438, %v2437
      %v2593 = vpack.c.bf16 %v2440, %v2439
      %v2594 = vpack.c.bf16 %v2442, %v2441
      %v2595 = vpack.c.bf16 %v2444, %v2443
      %v2596 = vpack.c.bf16 %v2446, %v2445
      %v2597 = vpack.c.bf16 %v2448, %v2447
      %v2598 = vpack.c.bf16 %v2450, %v2449
      %v2599 = vpack.c.bf16 %v2452, %v2451
      %v2600 = vpack.c.bf16 %v2454, %v2453
      %v2601 = vpack.c.bf16 %v2456, %v2455
      %v2602 = vpack.c.bf16 %v2458, %v2457
      %v2603 = vpack.c.bf16 %v2460, %v2459
      %v2604 = vpack.c.bf16 %v2462, %v2461
      %v2605 = vpack.c.bf16 %v2464, %v2463
      %v2606 = vpack.c.bf16 %v2466, %v2465
      %v2607 = vpack.c.bf16 %v2468, %v2467
      %v2608 = vpack.c.bf16 %v2470, %v2469
      %v2609 = vpack.c.bf16 %v2472, %v2471
      %v2610 = vpack.c.bf16 %v2474, %v2473
      %v2611 = vpack.c.bf16 %v2476, %v2475
      %v2612 = vpack.c.bf16 %v2478, %v2477
      %v2613 = vpack.c.bf16 %v2480, %v2479
      %v2614 = vpack.c.bf16 %v2482, %v2481
      %v2615 = vpack.c.bf16 %v2484, %v2483
      %v2616 = vpack.c.bf16 %v2486, %v2485
      %v2617 = vpack.c.bf16 %v2488, %v2487
      %v2618 = vpack.c.bf16 %v2490, %v2489
      %v2619 = vpack.c.bf16 %v2492, %v2491
      %v2620 = vpack.c.bf16 %v2494, %v2493
      %v2621 = vpack.c.bf16 %v2496, %v2495
      %v2622 = vpack.c.bf16 %v2498, %v2497
      %v2623 = vpack.c.bf16 %v2500, %v2499
      %v2624 = vpack.c.bf16 %v2502, %v2501
      %v2625 = vpack.c.bf16 %v2504, %v2503
      %v2626 = vpack.c.bf16 %v2506, %v2505
      %v2627 = vpack.c.bf16 %v2508, %v2507
      %v2628 = vpack.c.bf16 %v2510, %v2509
      %v2629 = vpack.c.bf16 %v2512, %v2511
      %v2630 = vpack.c.bf16 %v2514, %v2513
      %v2631 = vpack.c.bf16 %v2516, %v2515
      %v2632 = vpack.c.bf16 %v2518, %v2517
      %v2633 = vpack.c.bf16 %v2520, %v2519
      %v2634 = vpack.c.bf16 %v2522, %v2521
      %v2747 = vunpack.c.l.b16 %v2523
      %v2748 = vunpack.c.h.b16 %v2523
      %v2749 = vunpack.c.l.b16 %v2524
      %v2750 = vunpack.c.h.b16 %v2524
      %v2751 = vunpack.c.l.b16 %v2525
      %v2752 = vunpack.c.h.b16 %v2525
      %v2753 = vunpack.c.l.b16 %v2526
      %v2754 = vunpack.c.h.b16 %v2526
      %v2755 = vunpack.c.l.b16 %v2527
      %v2756 = vunpack.c.h.b16 %v2527
      %v2757 = vunpack.c.l.b16 %v2528
      %v2758 = vunpack.c.h.b16 %v2528
      %v2759 = vunpack.c.l.b16 %v2529
      %v2760 = vunpack.c.h.b16 %v2529
      %v2761 = vunpack.c.l.b16 %v2530
      %v2762 = vunpack.c.h.b16 %v2530
      %v2763 = vunpack.c.l.b16 %v2531
      %v2764 = vunpack.c.h.b16 %v2531
      %v2765 = vunpack.c.l.b16 %v2532
      %v2766 = vunpack.c.h.b16 %v2532
      %v2767 = vunpack.c.l.b16 %v2533
      %v2768 = vunpack.c.h.b16 %v2533
      %v2769 = vunpack.c.l.b16 %v2534
      %v2770 = vunpack.c.h.b16 %v2534
      %v2771 = vunpack.c.l.b16 %v2535
      %v2772 = vunpack.c.h.b16 %v2535
      %v2773 = vunpack.c.l.b16 %v2536
      %v2774 = vunpack.c.h.b16 %v2536
      %v2775 = vunpack.c.l.b16 %v2537
      %v2776 = vunpack.c.h.b16 %v2537
      %v2777 = vunpack.c.l.b16 %v2538
      %v2778 = vunpack.c.h.b16 %v2538
      %v2779 = vunpack.c.l.b16 %v2539
      %v2780 = vunpack.c.h.b16 %v2539
      %v2781 = vunpack.c.l.b16 %v2540
      %v2782 = vunpack.c.h.b16 %v2540
      %v2783 = vunpack.c.l.b16 %v2541
      %v2784 = vunpack.c.h.b16 %v2541
      %v2785 = vunpack.c.l.b16 %v2542
      %v2786 = vunpack.c.h.b16 %v2542
      %v2787 = vunpack.c.l.b16 %v2543
      %v2788 = vunpack.c.h.b16 %v2543
      %v2789 = vunpack.c.l.b16 %v2544
      %v2790 = vunpack.c.h.b16 %v2544
      %v2791 = vunpack.c.l.b16 %v2545
      %v2792 = vunpack.c.h.b16 %v2545
      %v2793 = vunpack.c.l.b16 %v2546
      %v2794 = vunpack.c.h.b16 %v2546
      %v2795 = vunpack.c.l.b16 %v2547
      %v2796 = vunpack.c.h.b16 %v2547
      %v2797 = vunpack.c.l.b16 %v2548
      %v2798 = vunpack.c.h.b16 %v2548
      %v2799 = vunpack.c.l.b16 %v2549
      %v2800 = vunpack.c.h.b16 %v2549
      %v2801 = vunpack.c.l.b16 %v2550
      %v2802 = vunpack.c.h.b16 %v2550
      %v2803 = vunpack.c.l.b16 %v2551
      %v2804 = vunpack.c.h.b16 %v2551
      %v2805 = vunpack.c.l.b16 %v2552
      %v2806 = vunpack.c.h.b16 %v2552
      %v2807 = vunpack.c.l.b16 %v2553
      %v2808 = vunpack.c.h.b16 %v2553
      %v2809 = vunpack.c.l.b16 %v2554
      %v2810 = vunpack.c.h.b16 %v2554
      %v2811 = vunpack.c.l.b16 %v2555
      %v2812 = vunpack.c.h.b16 %v2555
      %v2813 = vunpack.c.l.b16 %v2556
      %v2814 = vunpack.c.h.b16 %v2556
      %v2815 = vunpack.c.l.b16 %v2557
      %v2816 = vunpack.c.h.b16 %v2557
      %v2817 = vunpack.c.l.b16 %v2558
      %v2818 = vunpack.c.h.b16 %v2558
      %v2819 = vunpack.c.l.b16 %v2559
      %v2820 = vunpack.c.h.b16 %v2559
      %v2821 = vunpack.c.l.b16 %v2560
      %v2822 = vunpack.c.h.b16 %v2560
      %v2823 = vunpack.c.l.b16 %v2561
      %v2824 = vunpack.c.h.b16 %v2561
      %v2825 = vunpack.c.l.b16 %v2562
      %v2826 = vunpack.c.h.b16 %v2562
      %v2827 = vunpack.c.l.b16 %v2563
      %v2828 = vunpack.c.h.b16 %v2563
      %v2829 = vunpack.c.l.b16 %v2564
      %v2830 = vunpack.c.h.b16 %v2564
      %v2831 = vunpack.c.l.b16 %v2565
      %v2832 = vunpack.c.h.b16 %v2565
      %v2833 = vunpack.c.l.b16 %v2566
      %v2834 = vunpack.c.h.b16 %v2566
      %v2835 = vunpack.c.l.b16 %v2567
      %v2836 = vunpack.c.h.b16 %v2567
      %v2837 = vunpack.c.l.b16 %v2568
      %v2838 = vunpack.c.h.b16 %v2568
      %v2839 = vunpack.c.l.b16 %v2569
      %v2840 = vunpack.c.h.b16 %v2569
      %v2841 = vunpack.c.l.b16 %v2570
      %v2842 = vunpack.c.h.b16 %v2570
      %v2843 = vunpack.c.l.b16 %v2571
      %v2844 = vunpack.c.h.b16 %v2571
      %v2845 = vunpack.c.l.b16 %v2572
      %v2846 = vunpack.c.h.b16 %v2572
      %v2847 = vunpack.c.l.b16 %v2573
      %v2848 = vunpack.c.h.b16 %v2573
      %v2849 = vunpack.c.l.b16 %v2574
      %v2850 = vunpack.c.h.b16 %v2574
      %v2851 = vunpack.c.l.b16 %v2575
      %v2852 = vunpack.c.h.b16 %v2575
      %v2853 = vunpack.c.l.b16 %v2576
      %v2854 = vunpack.c.h.b16 %v2576
      %v2855 = vunpack.c.l.b16 %v2577
      %v2856 = vunpack.c.h.b16 %v2577
      %v2857 = vunpack.c.l.b16 %v2578
      %v2858 = vunpack.c.h.b16 %v2578
      %v2859 = vunpack.c.l.b16 %v2579
      %v2860 = vunpack.c.h.b16 %v2579
      %v2861 = vunpack.c.l.b16 %v2580
      %v2862 = vunpack.c.h.b16 %v2580
      %v2863 = vunpack.c.l.b16 %v2581
      %v2864 = vunpack.c.h.b16 %v2581
      %v2865 = vunpack.c.l.b16 %v2582
      %v2866 = vunpack.c.h.b16 %v2582
      %v2867 = vunpack.c.l.b16 %v2583
      %v2868 = vunpack.c.h.b16 %v2583
      %v2869 = vunpack.c.l.b16 %v2584
      %v2870 = vunpack.c.h.b16 %v2584
      %v2871 = vunpack.c.l.b16 %v2585
      %v2872 = vunpack.c.h.b16 %v2585
      %v2873 = vunpack.c.l.b16 %v2586
      %v2874 = vunpack.c.h.b16 %v2586
      %v2875 = vunpack.c.l.b16 %v2587
      %v2876 = vunpack.c.h.b16 %v2587
      %v2877 = vunpack.c.l.b16 %v2588
      %v2878 = vunpack.c.h.b16 %v2588
      %v2879 = vunpack.c.l.b16 %v2589
      %v2880 = vunpack.c.h.b16 %v2589
      %v2881 = vunpack.c.l.b16 %v2590
      %v2882 = vunpack.c.h.b16 %v2590
      %v2883 = vunpack.c.l.b16 %v2591
      %v2884 = vunpack.c.h.b16 %v2591
      %v2885 = vunpack.c.l.b16 %v2592
      %v2886 = vunpack.c.h.b16 %v2592
      %v2887 = vunpack.c.l.b16 %v2593
      %v2888 = vunpack.c.h.b16 %v2593
      %v2889 = vunpack.c.l.b16 %v2594
      %v2890 = vunpack.c.h.b16 %v2594
      %v2891 = vunpack.c.l.b16 %v2595
      %v2892 = vunpack.c.h.b16 %v2595
      %v2893 = vunpack.c.l.b16 %v2596
      %v2894 = vunpack.c.h.b16 %v2596
      %v2895 = vunpack.c.l.b16 %v2597
      %v2896 = vunpack.c.h.b16 %v2597
      %v2897 = vunpack.c.l.b16 %v2598
      %v2898 = vunpack.c.h.b16 %v2598
      %v2899 = vunpack.c.l.b16 %v2599
      %v2900 = vunpack.c.h.b16 %v2599
      %v2901 = vunpack.c.l.b16 %v2600
      %v2902 = vunpack.c.h.b16 %v2600
      %v2903 = vunpack.c.l.b16 %v2601
      %v2904 = vunpack.c.h.b16 %v2601
      %v2905 = vunpack.c.l.b16 %v2602
      %v2906 = vunpack.c.h.b16 %v2602
      %v2907 = vunpack.c.l.b16 %v2603
      %v2908 = vunpack.c.h.b16 %v2603
      %v2909 = vunpack.c.l.b16 %v2604
      %v2910 = vunpack.c.h.b16 %v2604
      %v2911 = vunpack.c.l.b16 %v2605
      %v2912 = vunpack.c.h.b16 %v2605
      %v2913 = vunpack.c.l.b16 %v2606
      %v2914 = vunpack.c.h.b16 %v2606
      %v2915 = vunpack.c.l.b16 %v2607
      %v2916 = vunpack.c.h.b16 %v2607
      %v2917 = vunpack.c.l.b16 %v2608
      %v2918 = vunpack.c.h.b16 %v2608
      %v2919 = vunpack.c.l.b16 %v2609
      %v2920 = vunpack.c.h.b16 %v2609
      %v2921 = vunpack.c.l.b16 %v2610
      %v2922 = vunpack.c.h.b16 %v2610
      %v2923 = vunpack.c.l.b16 %v2611
      %v2924 = vunpack.c.h.b16 %v2611
      %v2925 = vunpack.c.l.b16 %v2612
      %v2926 = vunpack.c.h.b16 %v2612
      %v2927 = vunpack.c.l.b16 %v2613
      %v2928 = vunpack.c.h.b16 %v2613
      %v2929 = vunpack.c.l.b16 %v2614
      %v2930 = vunpack.c.h.b16 %v2614
      %v2931 = vunpack.c.l.b16 %v2615
      %v2932 = vunpack.c.h.b16 %v2615
      %v2933 = vunpack.c.l.b16 %v2616
      %v2934 = vunpack.c.h.b16 %v2616
      %v2935 = vunpack.c.l.b16 %v2617
      %v2936 = vunpack.c.h.b16 %v2617
      %v2937 = vunpack.c.l.b16 %v2618
      %v2938 = vunpack.c.h.b16 %v2618
      %v2939 = vunpack.c.l.b16 %v2619
      %v2940 = vunpack.c.h.b16 %v2619
      %v2941 = vunpack.c.l.b16 %v2620
      %v2942 = vunpack.c.h.b16 %v2620
      %v2943 = vunpack.c.l.b16 %v2621
      %v2944 = vunpack.c.h.b16 %v2621
      %v2945 = vunpack.c.l.b16 %v2622
      %v2946 = vunpack.c.h.b16 %v2622
      %v2947 = vunpack.c.l.b16 %v2623
      %v2948 = vunpack.c.h.b16 %v2623
      %v2949 = vunpack.c.l.b16 %v2624
      %v2950 = vunpack.c.h.b16 %v2624
      %v2951 = vunpack.c.l.b16 %v2625
      %v2952 = vunpack.c.h.b16 %v2625
      %v2953 = vunpack.c.l.b16 %v2626
      %v2954 = vunpack.c.h.b16 %v2626
      %v2955 = vunpack.c.l.b16 %v2627
      %v2956 = vunpack.c.h.b16 %v2627
      %v2957 = vunpack.c.l.b16 %v2628
      %v2958 = vunpack.c.h.b16 %v2628
      %v2959 = vunpack.c.l.b16 %v2629
      %v2960 = vunpack.c.h.b16 %v2629
      %v2961 = vunpack.c.l.b16 %v2630
      %v2962 = vunpack.c.h.b16 %v2630
      %v2963 = vunpack.c.l.b16 %v2631
      %v2964 = vunpack.c.h.b16 %v2631
      %v2965 = vunpack.c.l.b16 %v2632
      %v2966 = vunpack.c.h.b16 %v2632
      %v2967 = vunpack.c.l.b16 %v2633
      %v2968 = vunpack.c.h.b16 %v2633
      %v2969 = vunpack.c.l.b16 %v2634
      %v2970 = vunpack.c.h.b16 %v2634
      %v2971 = vpack.c.b16 %v2747, %v2747
      %v2972 = vpack.c.b16 %v2748, %v2748
      %v2973 = vpack.c.b16 %v2749, %v2749
      %v2974 = vpack.c.b16 %v2750, %v2750
      %v2975 = vpack.c.b16 %v2751, %v2751
      %v2976 = vpack.c.b16 %v2752, %v2752
      %v2977 = vpack.c.b16 %v2753, %v2753
      %v2978 = vpack.c.b16 %v2754, %v2754
      %v2979 = vpack.c.b16 %v2755, %v2755
      %v2980 = vpack.c.b16 %v2756, %v2756
      %v2981 = vpack.c.b16 %v2757, %v2757
      %v2982 = vpack.c.b16 %v2758, %v2758
      %v2983 = vpack.c.b16 %v2759, %v2759
      %v2984 = vpack.c.b16 %v2760, %v2760
      %v2985 = vpack.c.b16 %v2761, %v2761
      %v2986 = vpack.c.b16 %v2762, %v2762
      %v2987 = vpack.c.b16 %v2763, %v2763
      %v2988 = vpack.c.b16 %v2764, %v2764
      %v2989 = vpack.c.b16 %v2765, %v2765
      %v2990 = vpack.c.b16 %v2766, %v2766
      %v2991 = vpack.c.b16 %v2767, %v2767
      %v2992 = vpack.c.b16 %v2768, %v2768
      %v2993 = vpack.c.b16 %v2769, %v2769
      %v2994 = vpack.c.b16 %v2770, %v2770
      %v2995 = vpack.c.b16 %v2771, %v2771
      %v2996 = vpack.c.b16 %v2772, %v2772
      %v2997 = vpack.c.b16 %v2773, %v2773
      %v2998 = vpack.c.b16 %v2774, %v2774
      %v2999 = vpack.c.b16 %v2775, %v2775
      %v3000 = vpack.c.b16 %v2776, %v2776
      %v3001 = vpack.c.b16 %v2777, %v2777
      %v3002 = vpack.c.b16 %v2778, %v2778
      %v3003 = vpack.c.b16 %v2779, %v2779
      %v3004 = vpack.c.b16 %v2780, %v2780
      %v3005 = vpack.c.b16 %v2781, %v2781
      %v3006 = vpack.c.b16 %v2782, %v2782
      %v3007 = vpack.c.b16 %v2783, %v2783
      %v3008 = vpack.c.b16 %v2784, %v2784
      %v3009 = vpack.c.b16 %v2785, %v2785
      %v3010 = vpack.c.b16 %v2786, %v2786
      %v3011 = vpack.c.b16 %v2787, %v2787
      %v3012 = vpack.c.b16 %v2788, %v2788
      %v3013 = vpack.c.b16 %v2789, %v2789
      %v3014 = vpack.c.b16 %v2790, %v2790
      %v3015 = vpack.c.b16 %v2791, %v2791
      %v3016 = vpack.c.b16 %v2792, %v2792
      %v3017 = vpack.c.b16 %v2793, %v2793
      %v3018 = vpack.c.b16 %v2794, %v2794
      %v3019 = vpack.c.b16 %v2795, %v2795
      %v3020 = vpack.c.b16 %v2796, %v2796
      %v3021 = vpack.c.b16 %v2797, %v2797
      %v3022 = vpack.c.b16 %v2798, %v2798
      %v3023 = vpack.c.b16 %v2799, %v2799
      %v3024 = vpack.c.b16 %v2800, %v2800
      %v3025 = vpack.c.b16 %v2801, %v2801
      %v3026 = vpack.c.b16 %v2802, %v2802
      %v3027 = vpack.c.b16 %v2803, %v2803
      %v3028 = vpack.c.b16 %v2804, %v2804
      %v3029 = vpack.c.b16 %v2805, %v2805
      %v3030 = vpack.c.b16 %v2806, %v2806
      %v3031 = vpack.c.b16 %v2807, %v2807
      %v3032 = vpack.c.b16 %v2808, %v2808
      %v3033 = vpack.c.b16 %v2809, %v2809
      %v3034 = vpack.c.b16 %v2810, %v2810
      %v3035 = vpack.c.b16 %v2811, %v2811
      %v3036 = vpack.c.b16 %v2812, %v2812
      %v3037 = vpack.c.b16 %v2813, %v2813
      %v3038 = vpack.c.b16 %v2814, %v2814
      %v3039 = vpack.c.b16 %v2815, %v2815
      %v3040 = vpack.c.b16 %v2816, %v2816
      %v3041 = vpack.c.b16 %v2817, %v2817
      %v3042 = vpack.c.b16 %v2818, %v2818
      %v3043 = vpack.c.b16 %v2819, %v2819
      %v3044 = vpack.c.b16 %v2820, %v2820
      %v3045 = vpack.c.b16 %v2821, %v2821
      %v3046 = vpack.c.b16 %v2822, %v2822
      %v3047 = vpack.c.b16 %v2823, %v2823
      %v3048 = vpack.c.b16 %v2824, %v2824
      %v3049 = vpack.c.b16 %v2825, %v2825
      %v3050 = vpack.c.b16 %v2826, %v2826
      %v3051 = vpack.c.b16 %v2827, %v2827
      %v3052 = vpack.c.b16 %v2828, %v2828
      %v3053 = vpack.c.b16 %v2829, %v2829
      %v3054 = vpack.c.b16 %v2830, %v2830
      %v3055 = vpack.c.b16 %v2831, %v2831
      %v3056 = vpack.c.b16 %v2832, %v2832
      %v3057 = vpack.c.b16 %v2833, %v2833
      %v3058 = vpack.c.b16 %v2834, %v2834
      %v3059 = vpack.c.b16 %v2835, %v2835
      %v3060 = vpack.c.b16 %v2836, %v2836
      %v3061 = vpack.c.b16 %v2837, %v2837
      %v3062 = vpack.c.b16 %v2838, %v2838
      %v3063 = vpack.c.b16 %v2839, %v2839
      %v3064 = vpack.c.b16 %v2840, %v2840
      %v3065 = vpack.c.b16 %v2841, %v2841
      %v3066 = vpack.c.b16 %v2842, %v2842
      %v3067 = vpack.c.b16 %v2843, %v2843
      %v3068 = vpack.c.b16 %v2844, %v2844
      %v3069 = vpack.c.b16 %v2845, %v2845
      %v3070 = vpack.c.b16 %v2846, %v2846
      %v3071 = vpack.c.b16 %v2847, %v2847
      %v3072 = vpack.c.b16 %v2848, %v2848
      %v3073 = vpack.c.b16 %v2849, %v2849
      %v3074 = vpack.c.b16 %v2850, %v2850
      %v3075 = vpack.c.b16 %v2851, %v2851
      %v3076 = vpack.c.b16 %v2852, %v2852
      %v3077 = vpack.c.b16 %v2853, %v2853
      %v3078 = vpack.c.b16 %v2854, %v2854
      %v3079 = vpack.c.b16 %v2855, %v2855
      %v3080 = vpack.c.b16 %v2856, %v2856
      %v3081 = vpack.c.b16 %v2857, %v2857
      %v3082 = vpack.c.b16 %v2858, %v2858
      %v3083 = vpack.c.b16 %v2859, %v2859
      %v3084 = vpack.c.b16 %v2860, %v2860
      %v3085 = vpack.c.b16 %v2861, %v2861
      %v3086 = vpack.c.b16 %v2862, %v2862
      %v3087 = vpack.c.b16 %v2863, %v2863
      %v3088 = vpack.c.b16 %v2864, %v2864
      %v3089 = vpack.c.b16 %v2865, %v2865
      %v3090 = vpack.c.b16 %v2866, %v2866
      %v3091 = vpack.c.b16 %v2867, %v2867
      %v3092 = vpack.c.b16 %v2868, %v2868
      %v3093 = vpack.c.b16 %v2869, %v2869
      %v3094 = vpack.c.b16 %v2870, %v2870
      %v3095 = vpack.c.b16 %v2871, %v2871
      %v3096 = vpack.c.b16 %v2872, %v2872
      %v3097 = vpack.c.b16 %v2873, %v2873
      %v3098 = vpack.c.b16 %v2874, %v2874
      %v3099 = vpack.c.b16 %v2875, %v2875
      %v3100 = vpack.c.b16 %v2876, %v2876
      %v3101 = vpack.c.b16 %v2877, %v2877
      %v3102 = vpack.c.b16 %v2878, %v2878
      %v3103 = vpack.c.b16 %v2879, %v2879
      %v3104 = vpack.c.b16 %v2880, %v2880
      %v3105 = vpack.c.b16 %v2881, %v2881
      %v3106 = vpack.c.b16 %v2882, %v2882
      %v3107 = vpack.c.b16 %v2883, %v2883
      %v3108 = vpack.c.b16 %v2884, %v2884
      %v3109 = vpack.c.b16 %v2885, %v2885
      %v3110 = vpack.c.b16 %v2886, %v2886
      %v3111 = vpack.c.b16 %v2887, %v2887
      %v3112 = vpack.c.b16 %v2888, %v2888
      %v3113 = vpack.c.b16 %v2889, %v2889
      %v3114 = vpack.c.b16 %v2890, %v2890
      %v3115 = vpack.c.b16 %v2891, %v2891
      %v3116 = vpack.c.b16 %v2892, %v2892
      %v3117 = vpack.c.b16 %v2893, %v2893
      %v3118 = vpack.c.b16 %v2894, %v2894
      %v3119 = vpack.c.b16 %v2895, %v2895
      %v3120 = vpack.c.b16 %v2896, %v2896
      %v3121 = vpack.c.b16 %v2897, %v2897
      %v3122 = vpack.c.b16 %v2898, %v2898
      %v3123 = vpack.c.b16 %v2899, %v2899
      %v3124 = vpack.c.b16 %v2900, %v2900
      %v3125 = vpack.c.b16 %v2901, %v2901
      %v3126 = vpack.c.b16 %v2902, %v2902
      %v3127 = vpack.c.b16 %v2903, %v2903
      %v3128 = vpack.c.b16 %v2904, %v2904
      %v3129 = vpack.c.b16 %v2905, %v2905
      %v3130 = vpack.c.b16 %v2906, %v2906
      %v3131 = vpack.c.b16 %v2907, %v2907
      %v3132 = vpack.c.b16 %v2908, %v2908
      %v3133 = vpack.c.b16 %v2909, %v2909
      %v3134 = vpack.c.b16 %v2910, %v2910
      %v3135 = vpack.c.b16 %v2911, %v2911
      %v3136 = vpack.c.b16 %v2912, %v2912
      %v3137 = vpack.c.b16 %v2913, %v2913
      %v3138 = vpack.c.b16 %v2914, %v2914
      %v3139 = vpack.c.b16 %v2915, %v2915
      %v3140 = vpack.c.b16 %v2916, %v2916
      %v3141 = vpack.c.b16 %v2917, %v2917
      %v3142 = vpack.c.b16 %v2918, %v2918
      %v3143 = vpack.c.b16 %v2919, %v2919
      %v3144 = vpack.c.b16 %v2920, %v2920
      %v3145 = vpack.c.b16 %v2921, %v2921
      %v3146 = vpack.c.b16 %v2922, %v2922
      %v3147 = vpack.c.b16 %v2923, %v2923
      %v3148 = vpack.c.b16 %v2924, %v2924
      %v3149 = vpack.c.b16 %v2925, %v2925
      %v3150 = vpack.c.b16 %v2926, %v2926
      %v3151 = vpack.c.b16 %v2927, %v2927
      %v3152 = vpack.c.b16 %v2928, %v2928
      %v3153 = vpack.c.b16 %v2929, %v2929
      %v3154 = vpack.c.b16 %v2930, %v2930
      %v3155 = vpack.c.b16 %v2931, %v2931
      %v3156 = vpack.c.b16 %v2932, %v2932
      %v3157 = vpack.c.b16 %v2933, %v2933
      %v3158 = vpack.c.b16 %v2934, %v2934
      %v3159 = vpack.c.b16 %v2935, %v2935
      %v3160 = vpack.c.b16 %v2936, %v2936
      %v3161 = vpack.c.b16 %v2937, %v2937
      %v3162 = vpack.c.b16 %v2938, %v2938
      %v3163 = vpack.c.b16 %v2939, %v2939
      %v3164 = vpack.c.b16 %v2940, %v2940
      %v3165 = vpack.c.b16 %v2941, %v2941
      %v3166 = vpack.c.b16 %v2942, %v2942
      %v3167 = vpack.c.b16 %v2943, %v2943
      %v3168 = vpack.c.b16 %v2944, %v2944
      %v3169 = vpack.c.b16 %v2945, %v2945
      %v3170 = vpack.c.b16 %v2946, %v2946
      %v3171 = vpack.c.b16 %v2947, %v2947
      %v3172 = vpack.c.b16 %v2948, %v2948
      %v3173 = vpack.c.b16 %v2949, %v2949
      %v3174 = vpack.c.b16 %v2950, %v2950
      %v3175 = vpack.c.b16 %v2951, %v2951
      %v3176 = vpack.c.b16 %v2952, %v2952
      %v3177 = vpack.c.b16 %v2953, %v2953
      %v3178 = vpack.c.b16 %v2954, %v2954
      %v3179 = vpack.c.b16 %v2955, %v2955
      %v3180 = vpack.c.b16 %v2956, %v2956
      %v3181 = vpack.c.b16 %v2957, %v2957
      %v3182 = vpack.c.b16 %v2958, %v2958
      %v3183 = vpack.c.b16 %v2959, %v2959
      %v3184 = vpack.c.b16 %v2960, %v2960
      %v3185 = vpack.c.b16 %v2961, %v2961
      %v3186 = vpack.c.b16 %v2962, %v2962
      %v3187 = vpack.c.b16 %v2963, %v2963
      %v3188 = vpack.c.b16 %v2964, %v2964
      %v3189 = vpack.c.b16 %v2965, %v2965
      %v3190 = vpack.c.b16 %v2966, %v2966
      %v3191 = vpack.c.b16 %v2967, %v2967
      %v3192 = vpack.c.b16 %v2968, %v2968
      %v3193 = vpack.c.b16 %v2969, %v2969
      %v3194 = vpack.c.b16 %v2970, %v2970
      %3419 = vst [vmem:[%s223] sm:$0xf] %v2971
      %3420 = vst [vmem:[%s223 + $0x4] sm:$0xf] %v2972
      %3421 = vst [vmem:[%s223 + $0x8] sm:$0xf] %v2973
      %3422 = vst [vmem:[%s223 + $0xc] sm:$0xf] %v2974
      %3423 = vst [vmem:[%s223 + $0x10] sm:$0xf] %v2975
      %3424 = vst [vmem:[%s223 + $0x14] sm:$0xf] %v2976
      %3425 = vst [vmem:[%s223 + $0x18] sm:$0xf] %v2977
      %3426 = vst [vmem:[%s223 + $0x1c] sm:$0xf] %v2978
      %3427 = vst [vmem:[%s223 + $0x20] sm:$0xf] %v2979
      %3428 = vst [vmem:[%s223 + $0x24] sm:$0xf] %v2980
      %3429 = vst [vmem:[%s223 + $0x28] sm:$0xf] %v2981
      %3430 = vst [vmem:[%s223 + $0x2c] sm:$0xf] %v2982
      %3431 = vst [vmem:[%s223 + $0x30] sm:$0xf] %v2983
      %3432 = vst [vmem:[%s223 + $0x34] sm:$0xf] %v2984
      %3433 = vst [vmem:[%s223 + $0x38] sm:$0xf] %v2985
      %3434 = vst [vmem:[%s223 + $0x3c] sm:$0xf] %v2986
      %3435 = vst [vmem:[%s223 + $0x40] sm:$0xf] %v2987
      %3436 = vst [vmem:[%s223 + $0x44] sm:$0xf] %v2988
      %3437 = vst [vmem:[%s223 + $0x48] sm:$0xf] %v2989
      %3438 = vst [vmem:[%s223 + $0x4c] sm:$0xf] %v2990
      %3439 = vst [vmem:[%s223 + $0x50] sm:$0xf] %v2991
      %3440 = vst [vmem:[%s223 + $0x54] sm:$0xf] %v2992
      %3441 = vst [vmem:[%s223 + $0x58] sm:$0xf] %v2993
      %3442 = vst [vmem:[%s223 + $0x5c] sm:$0xf] %v2994
      %3443 = vst [vmem:[%s223 + $0x60] sm:$0xf] %v2995
      %3444 = vst [vmem:[%s223 + $0x64] sm:$0xf] %v2996
      %3445 = vst [vmem:[%s223 + $0x68] sm:$0xf] %v2997
      %3446 = vst [vmem:[%s223 + $0x6c] sm:$0xf] %v2998
      %3447 = vst [vmem:[%s223 + $0x70] sm:$0xf] %v2999
      %3448 = vst [vmem:[%s223 + $0x74] sm:$0xf] %v3000
      %3449 = vst [vmem:[%s223 + $0x78] sm:$0xf] %v3001
      %3450 = vst [vmem:[%s223 + $0x7c] sm:$0xf] %v3002
      %3451 = vst [vmem:[%s223 + $0x80] sm:$0xf] %v3003
      %3452 = vst [vmem:[%s223 + $0x84] sm:$0xf] %v3004
      %3453 = vst [vmem:[%s223 + $0x88] sm:$0xf] %v3005
      %3454 = vst [vmem:[%s223 + $0x8c] sm:$0xf] %v3006
      %3455 = vst [vmem:[%s223 + $0x90] sm:$0xf] %v3007
      %3456 = vst [vmem:[%s223 + $0x94] sm:$0xf] %v3008
      %3457 = vst [vmem:[%s223 + $0x98] sm:$0xf] %v3009
      %3458 = vst [vmem:[%s223 + $0x9c] sm:$0xf] %v3010
      %3459 = vst [vmem:[%s223 + $0xa0] sm:$0xf] %v3011
      %3460 = vst [vmem:[%s223 + $0xa4] sm:$0xf] %v3012
      %3461 = vst [vmem:[%s223 + $0xa8] sm:$0xf] %v3013
      %3462 = vst [vmem:[%s223 + $0xac] sm:$0xf] %v3014
      %3463 = vst [vmem:[%s223 + $0xb0] sm:$0xf] %v3015
      %3464 = vst [vmem:[%s223 + $0xb4] sm:$0xf] %v3016
      %3465 = vst [vmem:[%s223 + $0xb8] sm:$0xf] %v3017
      %3466 = vst [vmem:[%s223 + $0xbc] sm:$0xf] %v3018
      %3467 = vst [vmem:[%s223 + $0xc0] sm:$0xf] %v3019
      %3468 = vst [vmem:[%s223 + $0xc4] sm:$0xf] %v3020
      %3469 = vst [vmem:[%s223 + $0xc8] sm:$0xf] %v3021
      %3470 = vst [vmem:[%s223 + $0xcc] sm:$0xf] %v3022
      %3471 = vst [vmem:[%s223 + $0xd0] sm:$0xf] %v3023
      %3472 = vst [vmem:[%s223 + $0xd4] sm:$0xf] %v3024
      %3473 = vst [vmem:[%s223 + $0xd8] sm:$0xf] %v3025
      %3474 = vst [vmem:[%s223 + $0xdc] sm:$0xf] %v3026
      %3475 = vst [vmem:[%s223 + $0xe0] sm:$0xf] %v3027
      %3476 = vst [vmem:[%s223 + $0xe4] sm:$0xf] %v3028
      %3477 = vst [vmem:[%s223 + $0xe8] sm:$0xf] %v3029
      %3478 = vst [vmem:[%s223 + $0xec] sm:$0xf] %v3030
      %3479 = vst [vmem:[%s223 + $0xf0] sm:$0xf] %v3031
      %3480 = vst [vmem:[%s223 + $0xf4] sm:$0xf] %v3032
      %3481 = vst [vmem:[%s223 + $0xf8] sm:$0xf] %v3033
      %3482 = vst [vmem:[%s223 + $0xfc] sm:$0xf] %v3034
      %3483 = vst [vmem:[%s223 + $0x100] sm:$0xf] %v3035
      %3484 = vst [vmem:[%s223 + $0x104] sm:$0xf] %v3036
      %3485 = vst [vmem:[%s223 + $0x108] sm:$0xf] %v3037
      %3486 = vst [vmem:[%s223 + $0x10c] sm:$0xf] %v3038
      %3487 = vst [vmem:[%s223 + $0x110] sm:$0xf] %v3039
      %3488 = vst [vmem:[%s223 + $0x114] sm:$0xf] %v3040
      %3489 = vst [vmem:[%s223 + $0x118] sm:$0xf] %v3041
      %3490 = vst [vmem:[%s223 + $0x11c] sm:$0xf] %v3042
      %3491 = vst [vmem:[%s223 + $0x120] sm:$0xf] %v3043
      %3492 = vst [vmem:[%s223 + $0x124] sm:$0xf] %v3044
      %3493 = vst [vmem:[%s223 + $0x128] sm:$0xf] %v3045
      %3494 = vst [vmem:[%s223 + $0x12c] sm:$0xf] %v3046
      %3495 = vst [vmem:[%s223 + $0x130] sm:$0xf] %v3047
      %3496 = vst [vmem:[%s223 + $0x134] sm:$0xf] %v3048
      %3497 = vst [vmem:[%s223 + $0x138] sm:$0xf] %v3049
      %3498 = vst [vmem:[%s223 + $0x13c] sm:$0xf] %v3050
      %3499 = vst [vmem:[%s223 + $0x140] sm:$0xf] %v3051
      %3500 = vst [vmem:[%s223 + $0x144] sm:$0xf] %v3052
      %3501 = vst [vmem:[%s223 + $0x148] sm:$0xf] %v3053
      %3502 = vst [vmem:[%s223 + $0x14c] sm:$0xf] %v3054
      %3503 = vst [vmem:[%s223 + $0x150] sm:$0xf] %v3055
      %3504 = vst [vmem:[%s223 + $0x154] sm:$0xf] %v3056
      %3505 = vst [vmem:[%s223 + $0x158] sm:$0xf] %v3057
      %3506 = vst [vmem:[%s223 + $0x15c] sm:$0xf] %v3058
      %3507 = vst [vmem:[%s223 + $0x160] sm:$0xf] %v3059
      %3508 = vst [vmem:[%s223 + $0x164] sm:$0xf] %v3060
      %3509 = vst [vmem:[%s223 + $0x168] sm:$0xf] %v3061
      %3510 = vst [vmem:[%s223 + $0x16c] sm:$0xf] %v3062
      %3511 = vst [vmem:[%s223 + $0x170] sm:$0xf] %v3063
      %3512 = vst [vmem:[%s223 + $0x174] sm:$0xf] %v3064
      %3513 = vst [vmem:[%s223 + $0x178] sm:$0xf] %v3065
      %3514 = vst [vmem:[%s223 + $0x17c] sm:$0xf] %v3066
      %3515 = vst [vmem:[%s223 + $0x180] sm:$0xf] %v3067
      %3516 = vst [vmem:[%s223 + $0x184] sm:$0xf] %v3068
      %3517 = vst [vmem:[%s223 + $0x188] sm:$0xf] %v3069
      %3518 = vst [vmem:[%s223 + $0x18c] sm:$0xf] %v3070
      %3519 = vst [vmem:[%s223 + $0x190] sm:$0xf] %v3071
      %3520 = vst [vmem:[%s223 + $0x194] sm:$0xf] %v3072
      %3521 = vst [vmem:[%s223 + $0x198] sm:$0xf] %v3073
      %3522 = vst [vmem:[%s223 + $0x19c] sm:$0xf] %v3074
      %3523 = vst [vmem:[%s223 + $0x1a0] sm:$0xf] %v3075
      %3524 = vst [vmem:[%s223 + $0x1a4] sm:$0xf] %v3076
      %3525 = vst [vmem:[%s223 + $0x1a8] sm:$0xf] %v3077
      %3526 = vst [vmem:[%s223 + $0x1ac] sm:$0xf] %v3078
      %3527 = vst [vmem:[%s223 + $0x1b0] sm:$0xf] %v3079
      %3528 = vst [vmem:[%s223 + $0x1b4] sm:$0xf] %v3080
      %3529 = vst [vmem:[%s223 + $0x1b8] sm:$0xf] %v3081
      %3530 = vst [vmem:[%s223 + $0x1bc] sm:$0xf] %v3082
      %3531 = vst [vmem:[%s223 + $0x1c0] sm:$0xf] %v3083
      %3532 = vst [vmem:[%s223 + $0x1c4] sm:$0xf] %v3084
      %3533 = vst [vmem:[%s223 + $0x1c8] sm:$0xf] %v3085
      %3534 = vst [vmem:[%s223 + $0x1cc] sm:$0xf] %v3086
      %3535 = vst [vmem:[%s223 + $0x1d0] sm:$0xf] %v3087
      %3536 = vst [vmem:[%s223 + $0x1d4] sm:$0xf] %v3088
      %3537 = vst [vmem:[%s223 + $0x1d8] sm:$0xf] %v3089
      %3538 = vst [vmem:[%s223 + $0x1dc] sm:$0xf] %v3090
      %3539 = vst [vmem:[%s223 + $0x1e0] sm:$0xf] %v3091
      %3540 = vst [vmem:[%s223 + $0x1e4] sm:$0xf] %v3092
      %3541 = vst [vmem:[%s223 + $0x1e8] sm:$0xf] %v3093
      %3542 = vst [vmem:[%s223 + $0x1ec] sm:$0xf] %v3094
      %3543 = vst [vmem:[%s223 + $0x1f0] sm:$0xf] %v3095
      %3544 = vst [vmem:[%s223 + $0x1f4] sm:$0xf] %v3096
      %3545 = vst [vmem:[%s223 + $0x1f8] sm:$0xf] %v3097
      %3546 = vst [vmem:[%s223 + $0x1fc] sm:$0xf] %v3098
      %3547 = vst [vmem:[%s223 + $0x200] sm:$0xf] %v3099
      %3548 = vst [vmem:[%s223 + $0x204] sm:$0xf] %v3100
      %3549 = vst [vmem:[%s223 + $0x208] sm:$0xf] %v3101
      %3550 = vst [vmem:[%s223 + $0x20c] sm:$0xf] %v3102
      %3551 = vst [vmem:[%s223 + $0x210] sm:$0xf] %v3103
      %3552 = vst [vmem:[%s223 + $0x214] sm:$0xf] %v3104
      %3553 = vst [vmem:[%s223 + $0x218] sm:$0xf] %v3105
      %3554 = vst [vmem:[%s223 + $0x21c] sm:$0xf] %v3106
      %3555 = vst [vmem:[%s223 + $0x220] sm:$0xf] %v3107
      %3556 = vst [vmem:[%s223 + $0x224] sm:$0xf] %v3108
      %3557 = vst [vmem:[%s223 + $0x228] sm:$0xf] %v3109
      %3558 = vst [vmem:[%s223 + $0x22c] sm:$0xf] %v3110
      %3559 = vst [vmem:[%s223 + $0x230] sm:$0xf] %v3111
      %3560 = vst [vmem:[%s223 + $0x234] sm:$0xf] %v3112
      %3561 = vst [vmem:[%s223 + $0x238] sm:$0xf] %v3113
      %3562 = vst [vmem:[%s223 + $0x23c] sm:$0xf] %v3114
      %3563 = vst [vmem:[%s223 + $0x240] sm:$0xf] %v3115
      %3564 = vst [vmem:[%s223 + $0x244] sm:$0xf] %v3116
      %3565 = vst [vmem:[%s223 + $0x248] sm:$0xf] %v3117
      %3566 = vst [vmem:[%s223 + $0x24c] sm:$0xf] %v3118
      %3567 = vst [vmem:[%s223 + $0x250] sm:$0xf] %v3119
      %3568 = vst [vmem:[%s223 + $0x254] sm:$0xf] %v3120
      %3569 = vst [vmem:[%s223 + $0x258] sm:$0xf] %v3121
      %3570 = vst [vmem:[%s223 + $0x25c] sm:$0xf] %v3122
      %3571 = vst [vmem:[%s223 + $0x260] sm:$0xf] %v3123
      %3572 = vst [vmem:[%s223 + $0x264] sm:$0xf] %v3124
      %3573 = vst [vmem:[%s223 + $0x268] sm:$0xf] %v3125
      %3574 = vst [vmem:[%s223 + $0x26c] sm:$0xf] %v3126
      %3575 = vst [vmem:[%s223 + $0x270] sm:$0xf] %v3127
      %3576 = vst [vmem:[%s223 + $0x274] sm:$0xf] %v3128
      %3577 = vst [vmem:[%s223 + $0x278] sm:$0xf] %v3129
      %3578 = vst [vmem:[%s223 + $0x27c] sm:$0xf] %v3130
      %3579 = vst [vmem:[%s223 + $0x280] sm:$0xf] %v3131
      %3580 = vst [vmem:[%s223 + $0x284] sm:$0xf] %v3132
      %3581 = vst [vmem:[%s223 + $0x288] sm:$0xf] %v3133
      %3582 = vst [vmem:[%s223 + $0x28c] sm:$0xf] %v3134
      %3583 = vst [vmem:[%s223 + $0x290] sm:$0xf] %v3135
      %3584 = vst [vmem:[%s223 + $0x294] sm:$0xf] %v3136
      %3585 = vst [vmem:[%s223 + $0x298] sm:$0xf] %v3137
      %3586 = vst [vmem:[%s223 + $0x29c] sm:$0xf] %v3138
      %3587 = vst [vmem:[%s223 + $0x2a0] sm:$0xf] %v3139
      %3588 = vst [vmem:[%s223 + $0x2a4] sm:$0xf] %v3140
      %3589 = vst [vmem:[%s223 + $0x2a8] sm:$0xf] %v3141
      %3590 = vst [vmem:[%s223 + $0x2ac] sm:$0xf] %v3142
      %3591 = vst [vmem:[%s223 + $0x2b0] sm:$0xf] %v3143
      %3592 = vst [vmem:[%s223 + $0x2b4] sm:$0xf] %v3144
      %3593 = vst [vmem:[%s223 + $0x2b8] sm:$0xf] %v3145
      %3594 = vst [vmem:[%s223 + $0x2bc] sm:$0xf] %v3146
      %3595 = vst [vmem:[%s223 + $0x2c0] sm:$0xf] %v3147
      %3596 = vst [vmem:[%s223 + $0x2c4] sm:$0xf] %v3148
      %3597 = vst [vmem:[%s223 + $0x2c8] sm:$0xf] %v3149
      %3598 = vst [vmem:[%s223 + $0x2cc] sm:$0xf] %v3150
      %3599 = vst [vmem:[%s223 + $0x2d0] sm:$0xf] %v3151
      %3600 = vst [vmem:[%s223 + $0x2d4] sm:$0xf] %v3152
      %3601 = vst [vmem:[%s223 + $0x2d8] sm:$0xf] %v3153
      %3602 = vst [vmem:[%s223 + $0x2dc] sm:$0xf] %v3154
      %3603 = vst [vmem:[%s223 + $0x2e0] sm:$0xf] %v3155
      %3604 = vst [vmem:[%s223 + $0x2e4] sm:$0xf] %v3156
      %3605 = vst [vmem:[%s223 + $0x2e8] sm:$0xf] %v3157
      %3606 = vst [vmem:[%s223 + $0x2ec] sm:$0xf] %v3158
      %3607 = vst [vmem:[%s223 + $0x2f0] sm:$0xf] %v3159
      %3608 = vst [vmem:[%s223 + $0x2f4] sm:$0xf] %v3160
      %3609 = vst [vmem:[%s223 + $0x2f8] sm:$0xf] %v3161
      %3610 = vst [vmem:[%s223 + $0x2fc] sm:$0xf] %v3162
      %3611 = vst [vmem:[%s223 + $0x300] sm:$0xf] %v3163
      %3612 = vst [vmem:[%s223 + $0x304] sm:$0xf] %v3164
      %3613 = vst [vmem:[%s223 + $0x308] sm:$0xf] %v3165
      %3614 = vst [vmem:[%s223 + $0x30c] sm:$0xf] %v3166
      %3615 = vst [vmem:[%s223 + $0x310] sm:$0xf] %v3167
      %3616 = vst [vmem:[%s223 + $0x314] sm:$0xf] %v3168
      %3617 = vst [vmem:[%s223 + $0x318] sm:$0xf] %v3169
      %3618 = vst [vmem:[%s223 + $0x31c] sm:$0xf] %v3170
      %3619 = vst [vmem:[%s223 + $0x320] sm:$0xf] %v3171
      %3620 = vst [vmem:[%s223 + $0x324] sm:$0xf] %v3172
      %3621 = vst [vmem:[%s223 + $0x328] sm:$0xf] %v3173
      %3622 = vst [vmem:[%s223 + $0x32c] sm:$0xf] %v3174
      %3623 = vst [vmem:[%s223 + $0x330] sm:$0xf] %v3175
      %3624 = vst [vmem:[%s223 + $0x334] sm:$0xf] %v3176
      %3625 = vst [vmem:[%s223 + $0x338] sm:$0xf] %v3177
      %3626 = vst [vmem:[%s223 + $0x33c] sm:$0xf] %v3178
      %3627 = vst [vmem:[%s223 + $0x340] sm:$0xf] %v3179
      %3628 = vst [vmem:[%s223 + $0x344] sm:$0xf] %v3180
      %3629 = vst [vmem:[%s223 + $0x348] sm:$0xf] %v3181
      %3630 = vst [vmem:[%s223 + $0x34c] sm:$0xf] %v3182
      %3631 = vst [vmem:[%s223 + $0x350] sm:$0xf] %v3183
      %3632 = vst [vmem:[%s223 + $0x354] sm:$0xf] %v3184
      %3633 = vst [vmem:[%s223 + $0x358] sm:$0xf] %v3185
      %3634 = vst [vmem:[%s223 + $0x35c] sm:$0xf] %v3186
      %3635 = vst [vmem:[%s223 + $0x360] sm:$0xf] %v3187
      %3636 = vst [vmem:[%s223 + $0x364] sm:$0xf] %v3188
      %3637 = vst [vmem:[%s223 + $0x368] sm:$0xf] %v3189
      %3638 = vst [vmem:[%s223 + $0x36c] sm:$0xf] %v3190
      %3639 = vst [vmem:[%s223 + $0x370] sm:$0xf] %v3191
      %3640 = vst [vmem:[%s223 + $0x374] sm:$0xf] %v3192
      %3641 = vst [vmem:[%s223 + $0x378] sm:$0xf] %v3193
      %3642 = vst [vmem:[%s223 + $0x37c] sm:$0xf] %v3194
      %s3643 = smul.u32 224, %s18
      %p3644 = scmp.lt.s32.totalorder %s3643, 6271
      %s3645 = scalar_select %p3644, %s3643, 6271
      %p3646 = scmp.lt.s32.totalorder %s19, 0
      %s3647 = scalar_select %p3646, %s19, 0
      %s3648 = sadd.s32 %s3647, %s3645
      %s3649 = smul.addr %s3648, 4
      %s3650 = scalar_lea.vmem %s3, %s3649
      // Predicated region
      $region33: #{pallas_matmul.1} parent=31 // pred_check
        %p3651 = pneg %p124
      $region34: #{pallas_matmul.1} parent=31 // pred_check_branch
        %3653 = sbr.rel (%p3651) target = $region36
      $region35: #{pallas_matmul.1} parent=31 // pred_region
        %s3654 = smul.u32 224, %s18
      $region36: #{pallas_matmul.1} parent=31 // pred_fallthru
        _
    $region32: #{pallas_matmul.1} parent=5 // pred_fallthru
      _
    %p3655 = scmp.le.s32.totalorder 2, %s9
    // Predicated region
    $region37: #{pallas_matmul.1} parent=5 // pred_check
      %p3656 = pneg %p3655
    $region38: #{pallas_matmul.1} parent=5 // pred_check_branch
      %3658 = sbr.rel (%p3656) target = $region40
    $region39: #{pallas_matmul.1} parent=5 // pred_region
      %s3659 = ssub.s32 %s9, 2
      // Predicated region
      $region41: #{pallas_matmul.1} parent=39 // pred_check
        %p3660 = pneg %p130
      $region42: #{pallas_matmul.1} parent=39 // pred_check_branch
        %3662 = sbr.rel (%p3660) target = $region44
      $region43: #{pallas_matmul.1} parent=39 // pred_region
        %s3663 = smul.u32 224, %s20
        %p3664 = scmp.lt.s32.totalorder %s3663, 6271
        %s3665 = scalar_select %p3664, %s3663, 6271
        %p3666 = scmp.lt.s32.totalorder %s21, 0
        %s3667 = scalar_select %p3666, %s21, 0
        %s3668 = sadd.s32 %s3667, %s3665
        %s3669 = smul.addr %s3668, 4
        %s3670 = scalar_lea.vmem %s3, %s3669
      $region44: #{pallas_matmul.1} parent=39 // pred_fallthru
        _
    $region40: #{pallas_matmul.1} parent=5 // pred_fallthru
      _
  $region6: #{pallas_matmul.1} parent=0 // loop_footer
    %s13 = sadd.s32 1, %s9
  $region7: #{pallas_matmul.1} parent=0 // loop_footer_branch
    %8 = sbr.rel target = $region3
  $region8: #{pallas_matmul.1} parent=0 // loop_exit
    _

</llo_original>
